<compile_context>
chip_gen: v6e
topology: v6e:2x2x1
jax: 0.10.0
libtpu: 0.0.40
codegen_flags: <defaults>
</compile_context>

<pallas_src>
import functools

import jax
import jax.numpy as jnp
from jax.experimental import pallas as pl
from jax.experimental.pallas import tpu as pltpu


_OUT_W = 128   # lane-dense packed output width: [logits | probs | loss | pad]


# ---------------------------------------------------------------------------
# Fused forward kernel
# ---------------------------------------------------------------------------

def _bert_fused_kernel(
    emb_ref, mask_ref, eg_ref, eb_ref,
    wqkv_ref, bqkv_ref, wo_ref, bo_ref,
    ln1g_ref, ln1b_ref, w1_ref, b1_ref, w2_ref, b2_ref, ln2g_ref, ln2b_ref,
    poolw_ref, poolb_ref, cw1_ref, cb1_ref, cw2_ref, cb2_ref, onehot_ref,
    out_ref,
    *, B, S, nH, Dh, n_layers, eps):
    H = nH * Dh
    f32 = jnp.float32
    C = onehot_ref.shape[-1]
    OUT_W = out_ref.shape[-1]

    def layernorm(h, g, b):
        mu = jnp.mean(h, axis=-1, keepdims=True)
        var = jnp.mean(jnp.square(h - mu), axis=-1, keepdims=True)
        return (h - mu) * jax.lax.rsqrt(var + eps) * g + b

    def gelu(y):
        # TODO(synk): PyTorch / HF BERT default is the exact erf GELU; the
        # tanh approximation is used here (erf has no guaranteed Mosaic path).
        return 0.5 * y * (1.0 + jnp.tanh(0.7978845608028654 *
                                         (y + 0.044715 * y * y * y)))

    add_mask = mask_ref[...]                                  # (B, S) additive

    # Embedding LayerNorm on the full (B*S, H) slab.
    x = layernorm(emb_ref[...], eg_ref[...], eb_ref[...])

    for l in range(n_layers):
        w_qkv = wqkv_ref[l]                    # (H, 3H)  (1/sqrt(Dh) folded in Q)
        b_qkv = bqkv_ref[l]                    # (1, 3H)
        w_o = wo_ref[l]                        # (H, H)
        b_o = bo_ref[l]                        # (1, H)
        g1 = ln1g_ref[l]
        be1 = ln1b_ref[l]
        w_1 = w1_ref[l]                        # (H, I)
        b_1 = b1_ref[l]                        # (1, I)
        w_2 = w2_ref[l]                        # (I, H)
        b_2 = b2_ref[l]                        # (1, H)
        g2 = ln2g_ref[l]
        be2 = ln2b_ref[l]

        # Fused QKV projection over the whole (B*S, H) slab.
        qkv = jnp.dot(x, w_qkv, preferred_element_type=f32) + b_qkv   # (B*S, 3H)
        # One K transpose per layer; per-(batch, head) K tiles are slices of it.
        kT = qkv[:, H:2 * H].T                                        # (H, B*S)

        # S x S attention: only this part is per (batch, head).
        ctx_rows = []
        for b in range(B):
            r0 = b * S
            maskb = add_mask[b:b + 1, :]                              # (1, S)
            ctx_heads = []
            for h in range(nH):
                q = qkv[r0:r0 + S, h * Dh:(h + 1) * Dh]               # (S, Dh)
                kT_h = kT[h * Dh:(h + 1) * Dh, r0:r0 + S]             # (Dh, S)
                v = qkv[r0:r0 + S, 2 * H + h * Dh:2 * H + (h + 1) * Dh]
                s = jnp.dot(q, kT_h, preferred_element_type=f32) + maskb
                s = s - jnp.max(s, axis=-1, keepdims=True)
                p = jnp.exp(s)
                p = p * pl.reciprocal(jnp.sum(p, axis=-1, keepdims=True),
                                      approx=True)
                ctx_heads.append(jnp.dot(p, v, preferred_element_type=f32))
            ctx_rows.append(jnp.concatenate(ctx_heads, axis=-1))      # (S, H)
        ctx = jnp.concatenate(ctx_rows, axis=0)                       # (B*S, H)

        # Output projection + FFN as whole-slab matmuls; biases added once.
        attn = jnp.dot(ctx, w_o, preferred_element_type=f32) + b_o
        x = layernorm(attn + x, g1, be1)
        f = gelu(jnp.dot(x, w_1, preferred_element_type=f32) + b_1)
        f = jnp.dot(f, w_2, preferred_element_type=f32) + b_2
        x = layernorm(f + x, g2, be2)

    # Batched pooler + classifier + softmax/CE over the stacked B CLS rows.
    cls = jnp.concatenate([x[b * S:b * S + 1, :] for b in range(B)], axis=0)
    pooled = jnp.tanh(jnp.dot(cls, poolw_ref[...], preferred_element_type=f32)
                      + poolb_ref[...])
    # nn.Dropout is identity in this deterministic / eval forward.
    hid = jnp.maximum(jnp.dot(pooled, cw1_ref[...], preferred_element_type=f32)
                      + cb1_ref[...], 0.0)
    logits = (jnp.dot(hid, cw2_ref[...], preferred_element_type=f32)
              + cb2_ref[...])                                         # (B, C)

    zmax = jnp.max(logits, axis=-1, keepdims=True)
    e = jnp.exp(logits - zmax)
    se = jnp.sum(e, axis=-1, keepdims=True)
    probs = e / se                                # exact for emitted probs
    logp = (logits - zmax) - jnp.log(se)
    row_nll = -jnp.sum(onehot_ref[...] * logp, axis=-1, keepdims=True)  # (B,1)
    mean_nll = jnp.sum(row_nll, axis=0, keepdims=True) * (1.0 / B)      # (1,1)

    # Single lane-dense store: [logits | probs | loss | zero pad] per row.
    out_ref[...] = jnp.concatenate(
        [logits, probs, jnp.broadcast_to(mean_nll, (B, 1)),
         jnp.zeros((B, OUT_W - 2 * C - 1), f32)], axis=-1)


# ---------------------------------------------------------------------------
# Model configuration & deterministic synthetic parameters
# ---------------------------------------------------------------------------

class Config:
    vocab_size = 100
    hidden = 32
    n_heads = 2
    head_dim = 16
    n_layers = 2
    intermediate = 64
    max_pos = 16
    type_vocab = 2
    n_classes = 4
    seq = 8
    batch = 2
    cls_hidden = 256   # linear_layers_num == 2


def init_params(key, cfg):
    kit = iter(jax.random.split(key, 128))

    def nrm(shape, scale=0.02):
        return jax.random.normal(next(kit), shape, jnp.float32) * scale

    z = lambda n: jnp.zeros((n,), jnp.float32)
    o = lambda n: jnp.ones((n,), jnp.float32)

    H, I = cfg.hidden, cfg.intermediate
    p = {
        "word_emb": nrm((cfg.vocab_size, H)),
        "pos_emb": nrm((cfg.max_pos, H)),
        "type_emb": nrm((cfg.type_vocab, H)),
        "emb_ln_g": o(H), "emb_ln_b": z(H),
        "pool_w": nrm((H, H)), "pool_b": z(H),
        "cls_w1": nrm((H, cfg.cls_hidden)), "cls_b1": z(cfg.cls_hidden),
        "cls_w2": nrm((cfg.cls_hidden, cfg.n_classes)), "cls_b2": z(cfg.n_classes),
        "layers": [],
    }
    for _ in range(cfg.n_layers):
        p["layers"].append({
            "wq": nrm((H, H)), "bq": z(H),
            "wk": nrm((H, H)), "bk": z(H),
            "wv": nrm((H, H)), "bv": z(H),
            "wo": nrm((H, H)), "bo": z(H),
            "ln1_g": o(H), "ln1_b": z(H),
            "w1": nrm((H, I)), "b1": z(I),
            "w2": nrm((I, H)), "b2": z(H),
            "ln2_g": o(H), "ln2_b": z(H),
        })
    return p


def pack_params(params, cfg):
    """One-time weight packing: stack layers, fuse QKV, fold 1/sqrt(Dh)."""
    scale = 1.0 / (cfg.head_dim ** 0.5)
    layers = params["layers"]
    st = lambda name: jnp.stack([L[name] for L in layers])      # (L, ...)
    row = lambda name: st(name)[:, None, :]                     # (L, 1, .)
    return {
        "word_emb": params["word_emb"],
        "pos_emb": params["pos_emb"],
        "type_emb": params["type_emb"],
        "emb_ln_g": params["emb_ln_g"].reshape(1, -1),
        "emb_ln_b": params["emb_ln_b"].reshape(1, -1),
        "wqkv": jnp.concatenate([st("wq") * scale, st("wk"), st("wv")], axis=-1),
        "bqkv": jnp.concatenate([st("bq") * scale, st("bk"), st("bv")],
                                axis=-1)[:, None, :],
        "wo": st("wo"), "bo": row("bo"),
        "ln1_g": row("ln1_g"), "ln1_b": row("ln1_b"),
        "w1": st("w1"), "b1": row("b1"),
        "w2": st("w2"), "b2": row("b2"),
        "ln2_g": row("ln2_g"), "ln2_b": row("ln2_b"),
        "pool_w": params["pool_w"], "pool_b": params["pool_b"].reshape(1, -1),
        "cls_w1": params["cls_w1"], "cls_b1": params["cls_b1"].reshape(1, -1),
        "cls_w2": params["cls_w2"], "cls_b2": params["cls_b2"].reshape(1, -1),
    }


# ---------------------------------------------------------------------------
# Forward pass (mirrors BERTNewsClassifier.forward) — one pallas_call, no grid
# ---------------------------------------------------------------------------

def bert_news_classifier_forward(fp, batch, cfg):
    tokens = batch["text_tokenized"]          # (B, S) int32
    mask = batch["attention_mask"]            # (B, S) int32
    labels = batch.get("label")
    B, S = tokens.shape
    H, nH, Dh = cfg.hidden, cfg.n_heads, cfg.head_dim
    C = cfg.n_classes

    # Glue outside the kernel: embedding gather, additive mask, one-hot labels.
    emb = (jnp.take(fp["word_emb"], tokens, axis=0)
           + fp["pos_emb"][None, :S, :]
           + fp["type_emb"][0][None, None, :]).reshape(B * S, H).astype(jnp.float32)
    add_mask = (1.0 - mask.astype(jnp.float32)) * -1e9            # (B, S)
    onehot = (jax.nn.one_hot(labels, C, dtype=jnp.float32)
              if labels is not None else jnp.zeros((B, C), jnp.float32))

    inputs = [emb, add_mask,
              fp["emb_ln_g"], fp["emb_ln_b"],
              fp["wqkv"], fp["bqkv"], fp["wo"], fp["bo"],
              fp["ln1_g"], fp["ln1_b"], fp["w1"], fp["b1"],
              fp["w2"], fp["b2"], fp["ln2_g"], fp["ln2_b"],
              fp["pool_w"], fp["pool_b"],
              fp["cls_w1"], fp["cls_b1"], fp["cls_w2"], fp["cls_b2"],
              onehot]

    kernel = functools.partial(
        _bert_fused_kernel, B=B, S=S, nH=nH, Dh=Dh,
        n_layers=cfg.n_layers, eps=1e-12)

    # No grid: single invocation, whole-array VMEM residency, no pointless
    # double-buffering of the resident weights.
    vmem = pl.BlockSpec(memory_space=pltpu.MemorySpace.VMEM)
    out = pl.pallas_call(
        kernel,
        out_shape=jax.ShapeDtypeStruct((B, _OUT_W), jnp.float32),
        in_specs=[vmem] * len(inputs),
        out_specs=vmem,
    )(*inputs)

    logits = out[:, :C]
    probs = out[:, C:2 * C]
    loss = out[0, 2 * C]

    if labels is not None:
        return loss, onehot, probs
    return jnp.float32(0.0), None, logits


# ---------------------------------------------------------------------------

if __name__ == "__main__":
    cfg = Config()
    key = jax.random.PRNGKey(0)
    kp, kt, kl = jax.random.split(key, 3)

    params = init_params(kp, cfg)
    fused_params = pack_params(params, cfg)

    tokens = jax.random.randint(kt, (cfg.batch, cfg.seq), 0, cfg.vocab_size,
                                dtype=jnp.int32)
    attn_mask = jnp.ones((cfg.batch, cfg.seq), jnp.int32).at[:, -2:].set(0)
    labels = jax.random.randint(kl, (cfg.batch,), 0, cfg.n_classes, dtype=jnp.int32)
    batch = {"text_tokenized": tokens, "attention_mask": attn_mask, "label": labels}

    loss, onehot_labels, probs = bert_news_classifier_forward(fused_params, batch, cfg)
    jax.block_until_ready((loss, onehot_labels, probs))
    print("KERNEL_OK")
</pallas_src>

<mosaic_0001>
module attributes {stable_mosaic.version = 11 : i64} {
  func.func @_bert_fused_kernel(%arg0: memref<16x32xf32, #tpu.memory_space<vmem>>, %arg1: memref<2x8xf32, #tpu.memory_space<vmem>>, %arg2: memref<1x32xf32, #tpu.memory_space<vmem>>, %arg3: memref<1x32xf32, #tpu.memory_space<vmem>>, %arg4: memref<2x32x96xf32, #tpu.memory_space<vmem>>, %arg5: memref<2x1x96xf32, #tpu.memory_space<vmem>>, %arg6: memref<2x32x32xf32, #tpu.memory_space<vmem>>, %arg7: memref<2x1x32xf32, #tpu.memory_space<vmem>>, %arg8: memref<2x1x32xf32, #tpu.memory_space<vmem>>, %arg9: memref<2x1x32xf32, #tpu.memory_space<vmem>>, %arg10: memref<2x32x64xf32, #tpu.memory_space<vmem>>, %arg11: memref<2x1x64xf32, #tpu.memory_space<vmem>>, %arg12: memref<2x64x32xf32, #tpu.memory_space<vmem>>, %arg13: memref<2x1x32xf32, #tpu.memory_space<vmem>>, %arg14: memref<2x1x32xf32, #tpu.memory_space<vmem>>, %arg15: memref<2x1x32xf32, #tpu.memory_space<vmem>>, %arg16: memref<32x32xf32, #tpu.memory_space<vmem>>, %arg17: memref<1x32xf32, #tpu.memory_space<vmem>>, %arg18: memref<32x256xf32, #tpu.memory_space<vmem>>, %arg19: memref<1x256xf32, #tpu.memory_space<vmem>>, %arg20: memref<256x4xf32, #tpu.memory_space<vmem>>, %arg21: memref<1x4xf32, #tpu.memory_space<vmem>>, %arg22: memref<2x4xf32, #tpu.memory_space<vmem>>, %arg23: memref<2x128xf32, #tpu.memory_space<vmem>>) attributes {dimension_semantics = [], scalar_prefetch = 0 : i64, scratch_operands = 0 : i64, tpu.core_type = #tpu.core_type<tc>} {
    %c0 = arith.constant 0 : index
    %c0_0 = arith.constant 0 : index
    %0 = vector.load %arg1[%c0, %c0_0] : memref<2x8xf32, #tpu.memory_space<vmem>>, vector<2x8xf32>
    %c0_1 = arith.constant 0 : index
    %c0_2 = arith.constant 0 : index
    %1 = vector.load %arg0[%c0_1, %c0_2] : memref<16x32xf32, #tpu.memory_space<vmem>>, vector<16x32xf32>
    %c0_3 = arith.constant 0 : index
    %c0_4 = arith.constant 0 : index
    %2 = vector.load %arg2[%c0_3, %c0_4] : memref<1x32xf32, #tpu.memory_space<vmem>>, vector<1x32xf32>
    %c0_5 = arith.constant 0 : index
    %c0_6 = arith.constant 0 : index
    %3 = vector.load %arg3[%c0_5, %c0_6] : memref<1x32xf32, #tpu.memory_space<vmem>>, vector<1x32xf32>
    %cst = arith.constant dense<0.000000e+00> : vector<16xf32>
    %4 = vector.multi_reduction <add>, %1, %cst [1] : vector<16x32xf32> to vector<16xf32>
    %5 = vector.shape_cast %4 : vector<16xf32> to vector<16x1xf32>
    %cst_7 = arith.constant 3.200000e+01 : f32
    %6 = vector.broadcast %cst_7 : f32 to vector<16x1xf32>
    %7 = arith.divf %5, %6 : vector<16x1xf32>
    %8 = vector.broadcast %7 : vector<16x1xf32> to vector<16x32xf32>
    %9 = arith.subf %1, %8 : vector<16x32xf32>
    %10 = arith.mulf %9, %9 : vector<16x32xf32>
    %cst_8 = arith.constant dense<0.000000e+00> : vector<16xf32>
    %11 = vector.multi_reduction <add>, %10, %cst_8 [1] : vector<16x32xf32> to vector<16xf32>
    %12 = vector.shape_cast %11 : vector<16xf32> to vector<16x1xf32>
    %cst_9 = arith.constant 3.200000e+01 : f32
    %13 = vector.broadcast %cst_9 : f32 to vector<16x1xf32>
    %14 = arith.divf %12, %13 : vector<16x1xf32>
    %15 = vector.broadcast %7 : vector<16x1xf32> to vector<16x32xf32>
    %16 = arith.subf %1, %15 : vector<16x32xf32>
    %cst_10 = arith.constant 9.99999996E-13 : f32
    %17 = vector.broadcast %cst_10 : f32 to vector<16x1xf32>
    %18 = arith.addf %14, %17 : vector<16x1xf32>
    %19 = math.rsqrt %18 : vector<16x1xf32>
    %20 = vector.broadcast %19 : vector<16x1xf32> to vector<16x32xf32>
    %21 = arith.mulf %16, %20 : vector<16x32xf32>
    %22 = vector.broadcast %2 : vector<1x32xf32> to vector<16x32xf32>
    %23 = arith.mulf %21, %22 : vector<16x32xf32>
    %24 = vector.broadcast %3 : vector<1x32xf32> to vector<16x32xf32>
    %25 = arith.addf %23, %24 : vector<16x32xf32>
    %c0_11 = arith.constant 0 : index
    %c0_12 = arith.constant 0 : index
    %c0_13 = arith.constant 0 : index
    %26 = vector.load %arg4[%c0_11, %c0_12, %c0_13] : memref<2x32x96xf32, #tpu.memory_space<vmem>>, vector<1x32x96xf32>
    %27 = vector.shape_cast %26 : vector<1x32x96xf32> to vector<32x96xf32>
    %c0_14 = arith.constant 0 : index
    %c0_15 = arith.constant 0 : index
    %c0_16 = arith.constant 0 : index
    %28 = vector.load %arg5[%c0_14, %c0_15, %c0_16] : memref<2x1x96xf32, #tpu.memory_space<vmem>>, vector<1x1x96xf32>
    %29 = vector.shape_cast %28 : vector<1x1x96xf32> to vector<1x96xf32>
    %c0_17 = arith.constant 0 : index
    %c0_18 = arith.constant 0 : index
    %c0_19 = arith.constant 0 : index
    %30 = vector.load %arg6[%c0_17, %c0_18, %c0_19] : memref<2x32x32xf32, #tpu.memory_space<vmem>>, vector<1x32x32xf32>
    %31 = vector.shape_cast %30 : vector<1x32x32xf32> to vector<32x32xf32>
    %c0_20 = arith.constant 0 : index
    %c0_21 = arith.constant 0 : index
    %c0_22 = arith.constant 0 : index
    %32 = vector.load %arg7[%c0_20, %c0_21, %c0_22] : memref<2x1x32xf32, #tpu.memory_space<vmem>>, vector<1x1x32xf32>
    %33 = vector.shape_cast %32 : vector<1x1x32xf32> to vector<1x32xf32>
    %c0_23 = arith.constant 0 : index
    %c0_24 = arith.constant 0 : index
    %c0_25 = arith.constant 0 : index
    %34 = vector.load %arg8[%c0_23, %c0_24, %c0_25] : memref<2x1x32xf32, #tpu.memory_space<vmem>>, vector<1x1x32xf32>
    %35 = vector.shape_cast %34 : vector<1x1x32xf32> to vector<1x32xf32>
    %c0_26 = arith.constant 0 : index
    %c0_27 = arith.constant 0 : index
    %c0_28 = arith.constant 0 : index
    %36 = vector.load %arg9[%c0_26, %c0_27, %c0_28] : memref<2x1x32xf32, #tpu.memory_space<vmem>>, vector<1x1x32xf32>
    %37 = vector.shape_cast %36 : vector<1x1x32xf32> to vector<1x32xf32>
    %c0_29 = arith.constant 0 : index
    %c0_30 = arith.constant 0 : index
    %c0_31 = arith.constant 0 : index
    %38 = vector.load %arg10[%c0_29, %c0_30, %c0_31] : memref<2x32x64xf32, #tpu.memory_space<vmem>>, vector<1x32x64xf32>
    %39 = vector.shape_cast %38 : vector<1x32x64xf32> to vector<32x64xf32>
    %c0_32 = arith.constant 0 : index
    %c0_33 = arith.constant 0 : index
    %c0_34 = arith.constant 0 : index
    %40 = vector.load %arg11[%c0_32, %c0_33, %c0_34] : memref<2x1x64xf32, #tpu.memory_space<vmem>>, vector<1x1x64xf32>
    %41 = vector.shape_cast %40 : vector<1x1x64xf32> to vector<1x64xf32>
    %c0_35 = arith.constant 0 : index
    %c0_36 = arith.constant 0 : index
    %c0_37 = arith.constant 0 : index
    %42 = vector.load %arg12[%c0_35, %c0_36, %c0_37] : memref<2x64x32xf32, #tpu.memory_space<vmem>>, vector<1x64x32xf32>
    %43 = vector.shape_cast %42 : vector<1x64x32xf32> to vector<64x32xf32>
    %c0_38 = arith.constant 0 : index
    %c0_39 = arith.constant 0 : index
    %c0_40 = arith.constant 0 : index
    %44 = vector.load %arg13[%c0_38, %c0_39, %c0_40] : memref<2x1x32xf32, #tpu.memory_space<vmem>>, vector<1x1x32xf32>
    %45 = vector.shape_cast %44 : vector<1x1x32xf32> to vector<1x32xf32>
    %c0_41 = arith.constant 0 : index
    %c0_42 = arith.constant 0 : index
    %c0_43 = arith.constant 0 : index
    %46 = vector.load %arg14[%c0_41, %c0_42, %c0_43] : memref<2x1x32xf32, #tpu.memory_space<vmem>>, vector<1x1x32xf32>
    %47 = vector.shape_cast %46 : vector<1x1x32xf32> to vector<1x32xf32>
    %c0_44 = arith.constant 0 : index
    %c0_45 = arith.constant 0 : index
    %c0_46 = arith.constant 0 : index
    %48 = vector.load %arg15[%c0_44, %c0_45, %c0_46] : memref<2x1x32xf32, #tpu.memory_space<vmem>>, vector<1x1x32xf32>
    %49 = vector.shape_cast %48 : vector<1x1x32xf32> to vector<1x32xf32>
    %cst_47 = arith.constant dense<0.000000e+00> : vector<16x96xf32>
    %50 = tpu.matmul %25, %27, %cst_47 {dimension_numbers = #tpu.dot_dimension_numbers<[1], [0], [0], [1], [0, 0, 1, 1], [], []>} : vector<16x32xf32>, vector<32x96xf32>, vector<16x96xf32> -> vector<16x96xf32>
    %51 = vector.broadcast %29 : vector<1x96xf32> to vector<16x96xf32>
    %52 = arith.addf %50, %51 : vector<16x96xf32>
    %53 = vector.extract_strided_slice %52 {offsets = [0, 32], sizes = [16, 32], strides = [1, 1]} : vector<16x96xf32> to vector<16x32xf32>
    %54 = tpu.transpose %53, [1, 0] : vector<16x32xf32> -> vector<32x16xf32>
    %55 = vector.extract_strided_slice %0 {offsets = [0, 0], sizes = [1, 8], strides = [1, 1]} : vector<2x8xf32> to vector<1x8xf32>
    %56 = vector.extract_strided_slice %52 {offsets = [0, 0], sizes = [8, 16], strides = [1, 1]} : vector<16x96xf32> to vector<8x16xf32>
    %57 = vector.extract_strided_slice %54 {offsets = [0, 0], sizes = [16, 8], strides = [1, 1]} : vector<32x16xf32> to vector<16x8xf32>
    %58 = vector.extract_strided_slice %52 {offsets = [0, 64], sizes = [8, 16], strides = [1, 1]} : vector<16x96xf32> to vector<8x16xf32>
    %cst_48 = arith.constant dense<0.000000e+00> : vector<8x8xf32>
    %59 = tpu.matmul %56, %57, %cst_48 {dimension_numbers = #tpu.dot_dimension_numbers<[1], [0], [0], [1], [0, 0, 1, 1], [], []>} : vector<8x16xf32>, vector<16x8xf32>, vector<8x8xf32> -> vector<8x8xf32>
    %60 = vector.broadcast %55 : vector<1x8xf32> to vector<8x8xf32>
    %61 = arith.addf %59, %60 : vector<8x8xf32>
    %cst_49 = arith.constant dense<0xFF800000> : vector<8xf32>
    %62 = vector.multi_reduction <maximumf>, %61, %cst_49 [1] : vector<8x8xf32> to vector<8xf32>
    %63 = vector.shape_cast %62 : vector<8xf32> to vector<8x1xf32>
    %64 = vector.broadcast %63 : vector<8x1xf32> to vector<8x8xf32>
    %65 = arith.subf %61, %64 : vector<8x8xf32>
    %66 = math.exp %65 : vector<8x8xf32>
    %cst_50 = arith.constant dense<0.000000e+00> : vector<8xf32>
    %67 = vector.multi_reduction <add>, %66, %cst_50 [1] : vector<8x8xf32> to vector<8xf32>
    %68 = vector.shape_cast %67 : vector<8xf32> to vector<8x1xf32>
    %69 = tpu.reciprocal %68 {approx = true} : vector<8x1xf32> -> vector<8x1xf32>
    %70 = vector.broadcast %69 : vector<8x1xf32> to vector<8x8xf32>
    %71 = arith.mulf %66, %70 : vector<8x8xf32>
    %cst_51 = arith.constant dense<0.000000e+00> : vector<8x16xf32>
    %72 = tpu.matmul %71, %58, %cst_51 {dimension_numbers = #tpu.dot_dimension_numbers<[1], [0], [0], [1], [0, 0, 1, 1], [], []>} : vector<8x8xf32>, vector<8x16xf32>, vector<8x16xf32> -> vector<8x16xf32>
    %73 = vector.extract_strided_slice %52 {offsets = [0, 16], sizes = [8, 16], strides = [1, 1]} : vector<16x96xf32> to vector<8x16xf32>
    %74 = vector.extract_strided_slice %54 {offsets = [16, 0], sizes = [16, 8], strides = [1, 1]} : vector<32x16xf32> to vector<16x8xf32>
    %75 = vector.extract_strided_slice %52 {offsets = [0, 80], sizes = [8, 16], strides = [1, 1]} : vector<16x96xf32> to vector<8x16xf32>
    %cst_52 = arith.constant dense<0.000000e+00> : vector<8x8xf32>
    %76 = tpu.matmul %73, %74, %cst_52 {dimension_numbers = #tpu.dot_dimension_numbers<[1], [0], [0], [1], [0, 0, 1, 1], [], []>} : vector<8x16xf32>, vector<16x8xf32>, vector<8x8xf32> -> vector<8x8xf32>
    %77 = vector.broadcast %55 : vector<1x8xf32> to vector<8x8xf32>
    %78 = arith.addf %76, %77 : vector<8x8xf32>
    %cst_53 = arith.constant dense<0xFF800000> : vector<8xf32>
    %79 = vector.multi_reduction <maximumf>, %78, %cst_53 [1] : vector<8x8xf32> to vector<8xf32>
    %80 = vector.shape_cast %79 : vector<8xf32> to vector<8x1xf32>
    %81 = vector.broadcast %80 : vector<8x1xf32> to vector<8x8xf32>
    %82 = arith.subf %78, %81 : vector<8x8xf32>
    %83 = math.exp %82 : vector<8x8xf32>
    %cst_54 = arith.constant dense<0.000000e+00> : vector<8xf32>
    %84 = vector.multi_reduction <add>, %83, %cst_54 [1] : vector<8x8xf32> to vector<8xf32>
    %85 = vector.shape_cast %84 : vector<8xf32> to vector<8x1xf32>
    %86 = tpu.reciprocal %85 {approx = true} : vector<8x1xf32> -> vector<8x1xf32>
    %87 = vector.broadcast %86 : vector<8x1xf32> to vector<8x8xf32>
    %88 = arith.mulf %83, %87 : vector<8x8xf32>
    %cst_55 = arith.constant dense<0.000000e+00> : vector<8x16xf32>
    %89 = tpu.matmul %88, %75, %cst_55 {dimension_numbers = #tpu.dot_dimension_numbers<[1], [0], [0], [1], [0, 0, 1, 1], [], []>} : vector<8x8xf32>, vector<8x16xf32>, vector<8x16xf32> -> vector<8x16xf32>
    %90 = tpu.concatenate %72, %89 in 1 : vector<8x16xf32>, vector<8x16xf32> -> vector<8x32xf32>
    %91 = vector.extract_strided_slice %0 {offsets = [1, 0], sizes = [1, 8], strides = [1, 1]} : vector<2x8xf32> to vector<1x8xf32>
    %92 = vector.extract_strided_slice %52 {offsets = [8, 0], sizes = [8, 16], strides = [1, 1]} : vector<16x96xf32> to vector<8x16xf32>
    %93 = vector.extract_strided_slice %54 {offsets = [0, 8], sizes = [16, 8], strides = [1, 1]} : vector<32x16xf32> to vector<16x8xf32>
    %94 = vector.extract_strided_slice %52 {offsets = [8, 64], sizes = [8, 16], strides = [1, 1]} : vector<16x96xf32> to vector<8x16xf32>
    %cst_56 = arith.constant dense<0.000000e+00> : vector<8x8xf32>
    %95 = tpu.matmul %92, %93, %cst_56 {dimension_numbers = #tpu.dot_dimension_numbers<[1], [0], [0], [1], [0, 0, 1, 1], [], []>} : vector<8x16xf32>, vector<16x8xf32>, vector<8x8xf32> -> vector<8x8xf32>
    %96 = vector.broadcast %91 : vector<1x8xf32> to vector<8x8xf32>
    %97 = arith.addf %95, %96 : vector<8x8xf32>
    %cst_57 = arith.constant dense<0xFF800000> : vector<8xf32>
    %98 = vector.multi_reduction <maximumf>, %97, %cst_57 [1] : vector<8x8xf32> to vector<8xf32>
    %99 = vector.shape_cast %98 : vector<8xf32> to vector<8x1xf32>
    %100 = vector.broadcast %99 : vector<8x1xf32> to vector<8x8xf32>
    %101 = arith.subf %97, %100 : vector<8x8xf32>
    %102 = math.exp %101 : vector<8x8xf32>
    %cst_58 = arith.constant dense<0.000000e+00> : vector<8xf32>
    %103 = vector.multi_reduction <add>, %102, %cst_58 [1] : vector<8x8xf32> to vector<8xf32>
    %104 = vector.shape_cast %103 : vector<8xf32> to vector<8x1xf32>
    %105 = tpu.reciprocal %104 {approx = true} : vector<8x1xf32> -> vector<8x1xf32>
    %106 = vector.broadcast %105 : vector<8x1xf32> to vector<8x8xf32>
    %107 = arith.mulf %102, %106 : vector<8x8xf32>
    %cst_59 = arith.constant dense<0.000000e+00> : vector<8x16xf32>
    %108 = tpu.matmul %107, %94, %cst_59 {dimension_numbers = #tpu.dot_dimension_numbers<[1], [0], [0], [1], [0, 0, 1, 1], [], []>} : vector<8x8xf32>, vector<8x16xf32>, vector<8x16xf32> -> vector<8x16xf32>
    %109 = vector.extract_strided_slice %52 {offsets = [8, 16], sizes = [8, 16], strides = [1, 1]} : vector<16x96xf32> to vector<8x16xf32>
    %110 = vector.extract_strided_slice %54 {offsets = [16, 8], sizes = [16, 8], strides = [1, 1]} : vector<32x16xf32> to vector<16x8xf32>
    %111 = vector.extract_strided_slice %52 {offsets = [8, 80], sizes = [8, 16], strides = [1, 1]} : vector<16x96xf32> to vector<8x16xf32>
    %cst_60 = arith.constant dense<0.000000e+00> : vector<8x8xf32>
    %112 = tpu.matmul %109, %110, %cst_60 {dimension_numbers = #tpu.dot_dimension_numbers<[1], [0], [0], [1], [0, 0, 1, 1], [], []>} : vector<8x16xf32>, vector<16x8xf32>, vector<8x8xf32> -> vector<8x8xf32>
    %113 = vector.broadcast %91 : vector<1x8xf32> to vector<8x8xf32>
    %114 = arith.addf %112, %113 : vector<8x8xf32>
    %cst_61 = arith.constant dense<0xFF800000> : vector<8xf32>
    %115 = vector.multi_reduction <maximumf>, %114, %cst_61 [1] : vector<8x8xf32> to vector<8xf32>
    %116 = vector.shape_cast %115 : vector<8xf32> to vector<8x1xf32>
    %117 = vector.broadcast %116 : vector<8x1xf32> to vector<8x8xf32>
    %118 = arith.subf %114, %117 : vector<8x8xf32>
    %119 = math.exp %118 : vector<8x8xf32>
    %cst_62 = arith.constant dense<0.000000e+00> : vector<8xf32>
    %120 = vector.multi_reduction <add>, %119, %cst_62 [1] : vector<8x8xf32> to vector<8xf32>
    %121 = vector.shape_cast %120 : vector<8xf32> to vector<8x1xf32>
    %122 = tpu.reciprocal %121 {approx = true} : vector<8x1xf32> -> vector<8x1xf32>
    %123 = vector.broadcast %122 : vector<8x1xf32> to vector<8x8xf32>
    %124 = arith.mulf %119, %123 : vector<8x8xf32>
    %cst_63 = arith.constant dense<0.000000e+00> : vector<8x16xf32>
    %125 = tpu.matmul %124, %111, %cst_63 {dimension_numbers = #tpu.dot_dimension_numbers<[1], [0], [0], [1], [0, 0, 1, 1], [], []>} : vector<8x8xf32>, vector<8x16xf32>, vector<8x16xf32> -> vector<8x16xf32>
    %126 = tpu.concatenate %108, %125 in 1 : vector<8x16xf32>, vector<8x16xf32> -> vector<8x32xf32>
    %127 = tpu.concatenate %90, %126 in 0 : vector<8x32xf32>, vector<8x32xf32> -> vector<16x32xf32>
    %cst_64 = arith.constant dense<0.000000e+00> : vector<16x32xf32>
    %128 = tpu.matmul %127, %31, %cst_64 {dimension_numbers = #tpu.dot_dimension_numbers<[1], [0], [0], [1], [0, 0, 1, 1], [], []>} : vector<16x32xf32>, vector<32x32xf32>, vector<16x32xf32> -> vector<16x32xf32>
    %129 = vector.broadcast %33 : vector<1x32xf32> to vector<16x32xf32>
    %130 = arith.addf %128, %129 : vector<16x32xf32>
    %131 = arith.addf %130, %25 : vector<16x32xf32>
    %cst_65 = arith.constant dense<0.000000e+00> : vector<16xf32>
    %132 = vector.multi_reduction <add>, %131, %cst_65 [1] : vector<16x32xf32> to vector<16xf32>
    %133 = vector.shape_cast %132 : vector<16xf32> to vector<16x1xf32>
    %cst_66 = arith.constant 3.200000e+01 : f32
    %134 = vector.broadcast %cst_66 : f32 to vector<16x1xf32>
    %135 = arith.divf %133, %134 : vector<16x1xf32>
    %136 = vector.broadcast %135 : vector<16x1xf32> to vector<16x32xf32>
    %137 = arith.subf %131, %136 : vector<16x32xf32>
    %138 = arith.mulf %137, %137 : vector<16x32xf32>
    %cst_67 = arith.constant dense<0.000000e+00> : vector<16xf32>
    %139 = vector.multi_reduction <add>, %138, %cst_67 [1] : vector<16x32xf32> to vector<16xf32>
    %140 = vector.shape_cast %139 : vector<16xf32> to vector<16x1xf32>
    %cst_68 = arith.constant 3.200000e+01 : f32
    %141 = vector.broadcast %cst_68 : f32 to vector<16x1xf32>
    %142 = arith.divf %140, %141 : vector<16x1xf32>
    %143 = vector.broadcast %135 : vector<16x1xf32> to vector<16x32xf32>
    %144 = arith.subf %131, %143 : vector<16x32xf32>
    %cst_69 = arith.constant 9.99999996E-13 : f32
    %145 = vector.broadcast %cst_69 : f32 to vector<16x1xf32>
    %146 = arith.addf %142, %145 : vector<16x1xf32>
    %147 = math.rsqrt %146 : vector<16x1xf32>
    %148 = vector.broadcast %147 : vector<16x1xf32> to vector<16x32xf32>
    %149 = arith.mulf %144, %148 : vector<16x32xf32>
    %150 = vector.broadcast %35 : vector<1x32xf32> to vector<16x32xf32>
    %151 = arith.mulf %149, %150 : vector<16x32xf32>
    %152 = vector.broadcast %37 : vector<1x32xf32> to vector<16x32xf32>
    %153 = arith.addf %151, %152 : vector<16x32xf32>
    %cst_70 = arith.constant dense<0.000000e+00> : vector<16x64xf32>
    %154 = tpu.matmul %153, %39, %cst_70 {dimension_numbers = #tpu.dot_dimension_numbers<[1], [0], [0], [1], [0, 0, 1, 1], [], []>} : vector<16x32xf32>, vector<32x64xf32>, vector<16x64xf32> -> vector<16x64xf32>
    %155 = vector.broadcast %41 : vector<1x64xf32> to vector<16x64xf32>
    %156 = arith.addf %154, %155 : vector<16x64xf32>
    %cst_71 = arith.constant 5.000000e-01 : f32
    %157 = vector.broadcast %cst_71 : f32 to vector<16x64xf32>
    %158 = arith.mulf %157, %156 : vector<16x64xf32>
    %cst_72 = arith.constant 4.471500e-02 : f32
    %159 = vector.broadcast %cst_72 : f32 to vector<16x64xf32>
    %160 = arith.mulf %159, %156 : vector<16x64xf32>
    %161 = arith.mulf %160, %156 : vector<16x64xf32>
    %162 = arith.mulf %161, %156 : vector<16x64xf32>
    %163 = arith.addf %156, %162 : vector<16x64xf32>
    %cst_73 = arith.constant 0.797884583 : f32
    %164 = vector.broadcast %cst_73 : f32 to vector<16x64xf32>
    %165 = arith.mulf %164, %163 : vector<16x64xf32>
    %166 = math.tanh %165 : vector<16x64xf32>
    %cst_74 = arith.constant 1.000000e+00 : f32
    %167 = vector.broadcast %cst_74 : f32 to vector<16x64xf32>
    %168 = arith.addf %167, %166 : vector<16x64xf32>
    %169 = arith.mulf %158, %168 : vector<16x64xf32>
    %cst_75 = arith.constant dense<0.000000e+00> : vector<16x32xf32>
    %170 = tpu.matmul %169, %43, %cst_75 {dimension_numbers = #tpu.dot_dimension_numbers<[1], [0], [0], [1], [0, 0, 1, 1], [], []>} : vector<16x64xf32>, vector<64x32xf32>, vector<16x32xf32> -> vector<16x32xf32>
    %171 = vector.broadcast %45 : vector<1x32xf32> to vector<16x32xf32>
    %172 = arith.addf %170, %171 : vector<16x32xf32>
    %173 = arith.addf %172, %153 : vector<16x32xf32>
    %cst_76 = arith.constant dense<0.000000e+00> : vector<16xf32>
    %174 = vector.multi_reduction <add>, %173, %cst_76 [1] : vector<16x32xf32> to vector<16xf32>
    %175 = vector.shape_cast %174 : vector<16xf32> to vector<16x1xf32>
    %cst_77 = arith.constant 3.200000e+01 : f32
    %176 = vector.broadcast %cst_77 : f32 to vector<16x1xf32>
    %177 = arith.divf %175, %176 : vector<16x1xf32>
    %178 = vector.broadcast %177 : vector<16x1xf32> to vector<16x32xf32>
    %179 = arith.subf %173, %178 : vector<16x32xf32>
    %180 = arith.mulf %179, %179 : vector<16x32xf32>
    %cst_78 = arith.constant dense<0.000000e+00> : vector<16xf32>
    %181 = vector.multi_reduction <add>, %180, %cst_78 [1] : vector<16x32xf32> to vector<16xf32>
    %182 = vector.shape_cast %181 : vector<16xf32> to vector<16x1xf32>
    %cst_79 = arith.constant 3.200000e+01 : f32
    %183 = vector.broadcast %cst_79 : f32 to vector<16x1xf32>
    %184 = arith.divf %182, %183 : vector<16x1xf32>
    %185 = vector.broadcast %177 : vector<16x1xf32> to vector<16x32xf32>
    %186 = arith.subf %173, %185 : vector<16x32xf32>
    %cst_80 = arith.constant 9.99999996E-13 : f32
    %187 = vector.broadcast %cst_80 : f32 to vector<16x1xf32>
    %188 = arith.addf %184, %187 : vector<16x1xf32>
    %189 = math.rsqrt %188 : vector<16x1xf32>
    %190 = vector.broadcast %189 : vector<16x1xf32> to vector<16x32xf32>
    %191 = arith.mulf %186, %190 : vector<16x32xf32>
    %192 = vector.broadcast %47 : vector<1x32xf32> to vector<16x32xf32>
    %193 = arith.mulf %191, %192 : vector<16x32xf32>
    %194 = vector.broadcast %49 : vector<1x32xf32> to vector<16x32xf32>
    %195 = arith.addf %193, %194 : vector<16x32xf32>
    %c1 = arith.constant 1 : index
    %c0_81 = arith.constant 0 : index
    %c0_82 = arith.constant 0 : index
    %196 = vector.load %arg4[%c1, %c0_81, %c0_82] : memref<2x32x96xf32, #tpu.memory_space<vmem>>, vector<1x32x96xf32>
    %197 = vector.shape_cast %196 : vector<1x32x96xf32> to vector<32x96xf32>
    %c1_83 = arith.constant 1 : index
    %c0_84 = arith.constant 0 : index
    %c0_85 = arith.constant 0 : index
    %198 = vector.load %arg5[%c1_83, %c0_84, %c0_85] : memref<2x1x96xf32, #tpu.memory_space<vmem>>, vector<1x1x96xf32>
    %199 = vector.shape_cast %198 : vector<1x1x96xf32> to vector<1x96xf32>
    %c1_86 = arith.constant 1 : index
    %c0_87 = arith.constant 0 : index
    %c0_88 = arith.constant 0 : index
    %200 = vector.load %arg6[%c1_86, %c0_87, %c0_88] : memref<2x32x32xf32, #tpu.memory_space<vmem>>, vector<1x32x32xf32>
    %201 = vector.shape_cast %200 : vector<1x32x32xf32> to vector<32x32xf32>
    %c1_89 = arith.constant 1 : index
    %c0_90 = arith.constant 0 : index
    %c0_91 = arith.constant 0 : index
    %202 = vector.load %arg7[%c1_89, %c0_90, %c0_91] : memref<2x1x32xf32, #tpu.memory_space<vmem>>, vector<1x1x32xf32>
    %203 = vector.shape_cast %202 : vector<1x1x32xf32> to vector<1x32xf32>
    %c1_92 = arith.constant 1 : index
    %c0_93 = arith.constant 0 : index
    %c0_94 = arith.constant 0 : index
    %204 = vector.load %arg8[%c1_92, %c0_93, %c0_94] : memref<2x1x32xf32, #tpu.memory_space<vmem>>, vector<1x1x32xf32>
    %205 = vector.shape_cast %204 : vector<1x1x32xf32> to vector<1x32xf32>
    %c1_95 = arith.constant 1 : index
    %c0_96 = arith.constant 0 : index
    %c0_97 = arith.constant 0 : index
    %206 = vector.load %arg9[%c1_95, %c0_96, %c0_97] : memref<2x1x32xf32, #tpu.memory_space<vmem>>, vector<1x1x32xf32>
    %207 = vector.shape_cast %206 : vector<1x1x32xf32> to vector<1x32xf32>
    %c1_98 = arith.constant 1 : index
    %c0_99 = arith.constant 0 : index
    %c0_100 = arith.constant 0 : index
    %208 = vector.load %arg10[%c1_98, %c0_99, %c0_100] : memref<2x32x64xf32, #tpu.memory_space<vmem>>, vector<1x32x64xf32>
    %209 = vector.shape_cast %208 : vector<1x32x64xf32> to vector<32x64xf32>
    %c1_101 = arith.constant 1 : index
    %c0_102 = arith.constant 0 : index
    %c0_103 = arith.constant 0 : index
    %210 = vector.load %arg11[%c1_101, %c0_102, %c0_103] : memref<2x1x64xf32, #tpu.memory_space<vmem>>, vector<1x1x64xf32>
    %211 = vector.shape_cast %210 : vector<1x1x64xf32> to vector<1x64xf32>
    %c1_104 = arith.constant 1 : index
    %c0_105 = arith.constant 0 : index
    %c0_106 = arith.constant 0 : index
    %212 = vector.load %arg12[%c1_104, %c0_105, %c0_106] : memref<2x64x32xf32, #tpu.memory_space<vmem>>, vector<1x64x32xf32>
    %213 = vector.shape_cast %212 : vector<1x64x32xf32> to vector<64x32xf32>
    %c1_107 = arith.constant 1 : index
    %c0_108 = arith.constant 0 : index
    %c0_109 = arith.constant 0 : index
    %214 = vector.load %arg13[%c1_107, %c0_108, %c0_109] : memref<2x1x32xf32, #tpu.memory_space<vmem>>, vector<1x1x32xf32>
    %215 = vector.shape_cast %214 : vector<1x1x32xf32> to vector<1x32xf32>
    %c1_110 = arith.constant 1 : index
    %c0_111 = arith.constant 0 : index
    %c0_112 = arith.constant 0 : index
    %216 = vector.load %arg14[%c1_110, %c0_111, %c0_112] : memref<2x1x32xf32, #tpu.memory_space<vmem>>, vector<1x1x32xf32>
    %217 = vector.shape_cast %216 : vector<1x1x32xf32> to vector<1x32xf32>
    %c1_113 = arith.constant 1 : index
    %c0_114 = arith.constant 0 : index
    %c0_115 = arith.constant 0 : index
    %218 = vector.load %arg15[%c1_113, %c0_114, %c0_115] : memref<2x1x32xf32, #tpu.memory_space<vmem>>, vector<1x1x32xf32>
    %219 = vector.shape_cast %218 : vector<1x1x32xf32> to vector<1x32xf32>
    %cst_116 = arith.constant dense<0.000000e+00> : vector<16x96xf32>
    %220 = tpu.matmul %195, %197, %cst_116 {dimension_numbers = #tpu.dot_dimension_numbers<[1], [0], [0], [1], [0, 0, 1, 1], [], []>} : vector<16x32xf32>, vector<32x96xf32>, vector<16x96xf32> -> vector<16x96xf32>
    %221 = vector.broadcast %199 : vector<1x96xf32> to vector<16x96xf32>
    %222 = arith.addf %220, %221 : vector<16x96xf32>
    %223 = vector.extract_strided_slice %222 {offsets = [0, 32], sizes = [16, 32], strides = [1, 1]} : vector<16x96xf32> to vector<16x32xf32>
    %224 = tpu.transpose %223, [1, 0] : vector<16x32xf32> -> vector<32x16xf32>
    %225 = vector.extract_strided_slice %0 {offsets = [0, 0], sizes = [1, 8], strides = [1, 1]} : vector<2x8xf32> to vector<1x8xf32>
    %226 = vector.extract_strided_slice %222 {offsets = [0, 0], sizes = [8, 16], strides = [1, 1]} : vector<16x96xf32> to vector<8x16xf32>
    %227 = vector.extract_strided_slice %224 {offsets = [0, 0], sizes = [16, 8], strides = [1, 1]} : vector<32x16xf32> to vector<16x8xf32>
    %228 = vector.extract_strided_slice %222 {offsets = [0, 64], sizes = [8, 16], strides = [1, 1]} : vector<16x96xf32> to vector<8x16xf32>
    %cst_117 = arith.constant dense<0.000000e+00> : vector<8x8xf32>
    %229 = tpu.matmul %226, %227, %cst_117 {dimension_numbers = #tpu.dot_dimension_numbers<[1], [0], [0], [1], [0, 0, 1, 1], [], []>} : vector<8x16xf32>, vector<16x8xf32>, vector<8x8xf32> -> vector<8x8xf32>
    %230 = vector.broadcast %225 : vector<1x8xf32> to vector<8x8xf32>
    %231 = arith.addf %229, %230 : vector<8x8xf32>
    %cst_118 = arith.constant dense<0xFF800000> : vector<8xf32>
    %232 = vector.multi_reduction <maximumf>, %231, %cst_118 [1] : vector<8x8xf32> to vector<8xf32>
    %233 = vector.shape_cast %232 : vector<8xf32> to vector<8x1xf32>
    %234 = vector.broadcast %233 : vector<8x1xf32> to vector<8x8xf32>
    %235 = arith.subf %231, %234 : vector<8x8xf32>
    %236 = math.exp %235 : vector<8x8xf32>
    %cst_119 = arith.constant dense<0.000000e+00> : vector<8xf32>
    %237 = vector.multi_reduction <add>, %236, %cst_119 [1] : vector<8x8xf32> to vector<8xf32>
    %238 = vector.shape_cast %237 : vector<8xf32> to vector<8x1xf32>
    %239 = tpu.reciprocal %238 {approx = true} : vector<8x1xf32> -> vector<8x1xf32>
    %240 = vector.broadcast %239 : vector<8x1xf32> to vector<8x8xf32>
    %241 = arith.mulf %236, %240 : vector<8x8xf32>
    %cst_120 = arith.constant dense<0.000000e+00> : vector<8x16xf32>
    %242 = tpu.matmul %241, %228, %cst_120 {dimension_numbers = #tpu.dot_dimension_numbers<[1], [0], [0], [1], [0, 0, 1, 1], [], []>} : vector<8x8xf32>, vector<8x16xf32>, vector<8x16xf32> -> vector<8x16xf32>
    %243 = vector.extract_strided_slice %222 {offsets = [0, 16], sizes = [8, 16], strides = [1, 1]} : vector<16x96xf32> to vector<8x16xf32>
    %244 = vector.extract_strided_slice %224 {offsets = [16, 0], sizes = [16, 8], strides = [1, 1]} : vector<32x16xf32> to vector<16x8xf32>
    %245 = vector.extract_strided_slice %222 {offsets = [0, 80], sizes = [8, 16], strides = [1, 1]} : vector<16x96xf32> to vector<8x16xf32>
    %cst_121 = arith.constant dense<0.000000e+00> : vector<8x8xf32>
    %246 = tpu.matmul %243, %244, %cst_121 {dimension_numbers = #tpu.dot_dimension_numbers<[1], [0], [0], [1], [0, 0, 1, 1], [], []>} : vector<8x16xf32>, vector<16x8xf32>, vector<8x8xf32> -> vector<8x8xf32>
    %247 = vector.broadcast %225 : vector<1x8xf32> to vector<8x8xf32>
    %248 = arith.addf %246, %247 : vector<8x8xf32>
    %cst_122 = arith.constant dense<0xFF800000> : vector<8xf32>
    %249 = vector.multi_reduction <maximumf>, %248, %cst_122 [1] : vector<8x8xf32> to vector<8xf32>
    %250 = vector.shape_cast %249 : vector<8xf32> to vector<8x1xf32>
    %251 = vector.broadcast %250 : vector<8x1xf32> to vector<8x8xf32>
    %252 = arith.subf %248, %251 : vector<8x8xf32>
    %253 = math.exp %252 : vector<8x8xf32>
    %cst_123 = arith.constant dense<0.000000e+00> : vector<8xf32>
    %254 = vector.multi_reduction <add>, %253, %cst_123 [1] : vector<8x8xf32> to vector<8xf32>
    %255 = vector.shape_cast %254 : vector<8xf32> to vector<8x1xf32>
    %256 = tpu.reciprocal %255 {approx = true} : vector<8x1xf32> -> vector<8x1xf32>
    %257 = vector.broadcast %256 : vector<8x1xf32> to vector<8x8xf32>
    %258 = arith.mulf %253, %257 : vector<8x8xf32>
    %cst_124 = arith.constant dense<0.000000e+00> : vector<8x16xf32>
    %259 = tpu.matmul %258, %245, %cst_124 {dimension_numbers = #tpu.dot_dimension_numbers<[1], [0], [0], [1], [0, 0, 1, 1], [], []>} : vector<8x8xf32>, vector<8x16xf32>, vector<8x16xf32> -> vector<8x16xf32>
    %260 = tpu.concatenate %242, %259 in 1 : vector<8x16xf32>, vector<8x16xf32> -> vector<8x32xf32>
    %261 = vector.extract_strided_slice %0 {offsets = [1, 0], sizes = [1, 8], strides = [1, 1]} : vector<2x8xf32> to vector<1x8xf32>
    %262 = vector.extract_strided_slice %222 {offsets = [8, 0], sizes = [8, 16], strides = [1, 1]} : vector<16x96xf32> to vector<8x16xf32>
    %263 = vector.extract_strided_slice %224 {offsets = [0, 8], sizes = [16, 8], strides = [1, 1]} : vector<32x16xf32> to vector<16x8xf32>
    %264 = vector.extract_strided_slice %222 {offsets = [8, 64], sizes = [8, 16], strides = [1, 1]} : vector<16x96xf32> to vector<8x16xf32>
    %cst_125 = arith.constant dense<0.000000e+00> : vector<8x8xf32>
    %265 = tpu.matmul %262, %263, %cst_125 {dimension_numbers = #tpu.dot_dimension_numbers<[1], [0], [0], [1], [0, 0, 1, 1], [], []>} : vector<8x16xf32>, vector<16x8xf32>, vector<8x8xf32> -> vector<8x8xf32>
    %266 = vector.broadcast %261 : vector<1x8xf32> to vector<8x8xf32>
    %267 = arith.addf %265, %266 : vector<8x8xf32>
    %cst_126 = arith.constant dense<0xFF800000> : vector<8xf32>
    %268 = vector.multi_reduction <maximumf>, %267, %cst_126 [1] : vector<8x8xf32> to vector<8xf32>
    %269 = vector.shape_cast %268 : vector<8xf32> to vector<8x1xf32>
    %270 = vector.broadcast %269 : vector<8x1xf32> to vector<8x8xf32>
    %271 = arith.subf %267, %270 : vector<8x8xf32>
    %272 = math.exp %271 : vector<8x8xf32>
    %cst_127 = arith.constant dense<0.000000e+00> : vector<8xf32>
    %273 = vector.multi_reduction <add>, %272, %cst_127 [1] : vector<8x8xf32> to vector<8xf32>
    %274 = vector.shape_cast %273 : vector<8xf32> to vector<8x1xf32>
    %275 = tpu.reciprocal %274 {approx = true} : vector<8x1xf32> -> vector<8x1xf32>
    %276 = vector.broadcast %275 : vector<8x1xf32> to vector<8x8xf32>
    %277 = arith.mulf %272, %276 : vector<8x8xf32>
    %cst_128 = arith.constant dense<0.000000e+00> : vector<8x16xf32>
    %278 = tpu.matmul %277, %264, %cst_128 {dimension_numbers = #tpu.dot_dimension_numbers<[1], [0], [0], [1], [0, 0, 1, 1], [], []>} : vector<8x8xf32>, vector<8x16xf32>, vector<8x16xf32> -> vector<8x16xf32>
    %279 = vector.extract_strided_slice %222 {offsets = [8, 16], sizes = [8, 16], strides = [1, 1]} : vector<16x96xf32> to vector<8x16xf32>
    %280 = vector.extract_strided_slice %224 {offsets = [16, 8], sizes = [16, 8], strides = [1, 1]} : vector<32x16xf32> to vector<16x8xf32>
    %281 = vector.extract_strided_slice %222 {offsets = [8, 80], sizes = [8, 16], strides = [1, 1]} : vector<16x96xf32> to vector<8x16xf32>
    %cst_129 = arith.constant dense<0.000000e+00> : vector<8x8xf32>
    %282 = tpu.matmul %279, %280, %cst_129 {dimension_numbers = #tpu.dot_dimension_numbers<[1], [0], [0], [1], [0, 0, 1, 1], [], []>} : vector<8x16xf32>, vector<16x8xf32>, vector<8x8xf32> -> vector<8x8xf32>
    %283 = vector.broadcast %261 : vector<1x8xf32> to vector<8x8xf32>
    %284 = arith.addf %282, %283 : vector<8x8xf32>
    %cst_130 = arith.constant dense<0xFF800000> : vector<8xf32>
    %285 = vector.multi_reduction <maximumf>, %284, %cst_130 [1] : vector<8x8xf32> to vector<8xf32>
    %286 = vector.shape_cast %285 : vector<8xf32> to vector<8x1xf32>
    %287 = vector.broadcast %286 : vector<8x1xf32> to vector<8x8xf32>
    %288 = arith.subf %284, %287 : vector<8x8xf32>
    %289 = math.exp %288 : vector<8x8xf32>
    %cst_131 = arith.constant dense<0.000000e+00> : vector<8xf32>
    %290 = vector.multi_reduction <add>, %289, %cst_131 [1] : vector<8x8xf32> to vector<8xf32>
    %291 = vector.shape_cast %290 : vector<8xf32> to vector<8x1xf32>
    %292 = tpu.reciprocal %291 {approx = true} : vector<8x1xf32> -> vector<8x1xf32>
    %293 = vector.broadcast %292 : vector<8x1xf32> to vector<8x8xf32>
    %294 = arith.mulf %289, %293 : vector<8x8xf32>
    %cst_132 = arith.constant dense<0.000000e+00> : vector<8x16xf32>
    %295 = tpu.matmul %294, %281, %cst_132 {dimension_numbers = #tpu.dot_dimension_numbers<[1], [0], [0], [1], [0, 0, 1, 1], [], []>} : vector<8x8xf32>, vector<8x16xf32>, vector<8x16xf32> -> vector<8x16xf32>
    %296 = tpu.concatenate %278, %295 in 1 : vector<8x16xf32>, vector<8x16xf32> -> vector<8x32xf32>
    %297 = tpu.concatenate %260, %296 in 0 : vector<8x32xf32>, vector<8x32xf32> -> vector<16x32xf32>
    %cst_133 = arith.constant dense<0.000000e+00> : vector<16x32xf32>
    %298 = tpu.matmul %297, %201, %cst_133 {dimension_numbers = #tpu.dot_dimension_numbers<[1], [0], [0], [1], [0, 0, 1, 1], [], []>} : vector<16x32xf32>, vector<32x32xf32>, vector<16x32xf32> -> vector<16x32xf32>
    %299 = vector.broadcast %203 : vector<1x32xf32> to vector<16x32xf32>
    %300 = arith.addf %298, %299 : vector<16x32xf32>
    %301 = arith.addf %300, %195 : vector<16x32xf32>
    %cst_134 = arith.constant dense<0.000000e+00> : vector<16xf32>
    %302 = vector.multi_reduction <add>, %301, %cst_134 [1] : vector<16x32xf32> to vector<16xf32>
    %303 = vector.shape_cast %302 : vector<16xf32> to vector<16x1xf32>
    %cst_135 = arith.constant 3.200000e+01 : f32
    %304 = vector.broadcast %cst_135 : f32 to vector<16x1xf32>
    %305 = arith.divf %303, %304 : vector<16x1xf32>
    %306 = vector.broadcast %305 : vector<16x1xf32> to vector<16x32xf32>
    %307 = arith.subf %301, %306 : vector<16x32xf32>
    %308 = arith.mulf %307, %307 : vector<16x32xf32>
    %cst_136 = arith.constant dense<0.000000e+00> : vector<16xf32>
    %309 = vector.multi_reduction <add>, %308, %cst_136 [1] : vector<16x32xf32> to vector<16xf32>
    %310 = vector.shape_cast %309 : vector<16xf32> to vector<16x1xf32>
    %cst_137 = arith.constant 3.200000e+01 : f32
    %311 = vector.broadcast %cst_137 : f32 to vector<16x1xf32>
    %312 = arith.divf %310, %311 : vector<16x1xf32>
    %313 = vector.broadcast %305 : vector<16x1xf32> to vector<16x32xf32>
    %314 = arith.subf %301, %313 : vector<16x32xf32>
    %cst_138 = arith.constant 9.99999996E-13 : f32
    %315 = vector.broadcast %cst_138 : f32 to vector<16x1xf32>
    %316 = arith.addf %312, %315 : vector<16x1xf32>
    %317 = math.rsqrt %316 : vector<16x1xf32>
    %318 = vector.broadcast %317 : vector<16x1xf32> to vector<16x32xf32>
    %319 = arith.mulf %314, %318 : vector<16x32xf32>
    %320 = vector.broadcast %205 : vector<1x32xf32> to vector<16x32xf32>
    %321 = arith.mulf %319, %320 : vector<16x32xf32>
    %322 = vector.broadcast %207 : vector<1x32xf32> to vector<16x32xf32>
    %323 = arith.addf %321, %322 : vector<16x32xf32>
    %cst_139 = arith.constant dense<0.000000e+00> : vector<16x64xf32>
    %324 = tpu.matmul %323, %209, %cst_139 {dimension_numbers = #tpu.dot_dimension_numbers<[1], [0], [0], [1], [0, 0, 1, 1], [], []>} : vector<16x32xf32>, vector<32x64xf32>, vector<16x64xf32> -> vector<16x64xf32>
    %325 = vector.broadcast %211 : vector<1x64xf32> to vector<16x64xf32>
    %326 = arith.addf %324, %325 : vector<16x64xf32>
    %cst_140 = arith.constant 5.000000e-01 : f32
    %327 = vector.broadcast %cst_140 : f32 to vector<16x64xf32>
    %328 = arith.mulf %327, %326 : vector<16x64xf32>
    %cst_141 = arith.constant 4.471500e-02 : f32
    %329 = vector.broadcast %cst_141 : f32 to vector<16x64xf32>
    %330 = arith.mulf %329, %326 : vector<16x64xf32>
    %331 = arith.mulf %330, %326 : vector<16x64xf32>
    %332 = arith.mulf %331, %326 : vector<16x64xf32>
    %333 = arith.addf %326, %332 : vector<16x64xf32>
    %cst_142 = arith.constant 0.797884583 : f32
    %334 = vector.broadcast %cst_142 : f32 to vector<16x64xf32>
    %335 = arith.mulf %334, %333 : vector<16x64xf32>
    %336 = math.tanh %335 : vector<16x64xf32>
    %cst_143 = arith.constant 1.000000e+00 : f32
    %337 = vector.broadcast %cst_143 : f32 to vector<16x64xf32>
    %338 = arith.addf %337, %336 : vector<16x64xf32>
    %339 = arith.mulf %328, %338 : vector<16x64xf32>
    %cst_144 = arith.constant dense<0.000000e+00> : vector<16x32xf32>
    %340 = tpu.matmul %339, %213, %cst_144 {dimension_numbers = #tpu.dot_dimension_numbers<[1], [0], [0], [1], [0, 0, 1, 1], [], []>} : vector<16x64xf32>, vector<64x32xf32>, vector<16x32xf32> -> vector<16x32xf32>
    %341 = vector.broadcast %215 : vector<1x32xf32> to vector<16x32xf32>
    %342 = arith.addf %340, %341 : vector<16x32xf32>
    %343 = arith.addf %342, %323 : vector<16x32xf32>
    %cst_145 = arith.constant dense<0.000000e+00> : vector<16xf32>
    %344 = vector.multi_reduction <add>, %343, %cst_145 [1] : vector<16x32xf32> to vector<16xf32>
    %345 = vector.shape_cast %344 : vector<16xf32> to vector<16x1xf32>
    %cst_146 = arith.constant 3.200000e+01 : f32
    %346 = vector.broadcast %cst_146 : f32 to vector<16x1xf32>
    %347 = arith.divf %345, %346 : vector<16x1xf32>
    %348 = vector.broadcast %347 : vector<16x1xf32> to vector<16x32xf32>
    %349 = arith.subf %343, %348 : vector<16x32xf32>
    %350 = arith.mulf %349, %349 : vector<16x32xf32>
    %cst_147 = arith.constant dense<0.000000e+00> : vector<16xf32>
    %351 = vector.multi_reduction <add>, %350, %cst_147 [1] : vector<16x32xf32> to vector<16xf32>
    %352 = vector.shape_cast %351 : vector<16xf32> to vector<16x1xf32>
    %cst_148 = arith.constant 3.200000e+01 : f32
    %353 = vector.broadcast %cst_148 : f32 to vector<16x1xf32>
    %354 = arith.divf %352, %353 : vector<16x1xf32>
    %355 = vector.broadcast %347 : vector<16x1xf32> to vector<16x32xf32>
    %356 = arith.subf %343, %355 : vector<16x32xf32>
    %cst_149 = arith.constant 9.99999996E-13 : f32
    %357 = vector.broadcast %cst_149 : f32 to vector<16x1xf32>
    %358 = arith.addf %354, %357 : vector<16x1xf32>
    %359 = math.rsqrt %358 : vector<16x1xf32>
    %360 = vector.broadcast %359 : vector<16x1xf32> to vector<16x32xf32>
    %361 = arith.mulf %356, %360 : vector<16x32xf32>
    %362 = vector.broadcast %217 : vector<1x32xf32> to vector<16x32xf32>
    %363 = arith.mulf %361, %362 : vector<16x32xf32>
    %364 = vector.broadcast %219 : vector<1x32xf32> to vector<16x32xf32>
    %365 = arith.addf %363, %364 : vector<16x32xf32>
    %366 = vector.extract_strided_slice %365 {offsets = [0, 0], sizes = [1, 32], strides = [1, 1]} : vector<16x32xf32> to vector<1x32xf32>
    %367 = vector.extract_strided_slice %365 {offsets = [8, 0], sizes = [1, 32], strides = [1, 1]} : vector<16x32xf32> to vector<1x32xf32>
    %368 = tpu.concatenate %366, %367 in 0 : vector<1x32xf32>, vector<1x32xf32> -> vector<2x32xf32>
    %c0_150 = arith.constant 0 : index
    %c0_151 = arith.constant 0 : index
    %369 = vector.load %arg16[%c0_150, %c0_151] : memref<32x32xf32, #tpu.memory_space<vmem>>, vector<32x32xf32>
    %cst_152 = arith.constant dense<0.000000e+00> : vector<2x32xf32>
    %370 = tpu.matmul %368, %369, %cst_152 {dimension_numbers = #tpu.dot_dimension_numbers<[1], [0], [0], [1], [0, 0, 1, 1], [], []>} : vector<2x32xf32>, vector<32x32xf32>, vector<2x32xf32> -> vector<2x32xf32>
    %c0_153 = arith.constant 0 : index
    %c0_154 = arith.constant 0 : index
    %371 = vector.load %arg17[%c0_153, %c0_154] : memref<1x32xf32, #tpu.memory_space<vmem>>, vector<1x32xf32>
    %372 = vector.broadcast %371 : vector<1x32xf32> to vector<2x32xf32>
    %373 = arith.addf %370, %372 : vector<2x32xf32>
    %374 = math.tanh %373 : vector<2x32xf32>
    %c0_155 = arith.constant 0 : index
    %c0_156 = arith.constant 0 : index
    %375 = vector.load %arg18[%c0_155, %c0_156] : memref<32x256xf32, #tpu.memory_space<vmem>>, vector<32x256xf32>
    %cst_157 = arith.constant dense<0.000000e+00> : vector<2x256xf32>
    %376 = tpu.matmul %374, %375, %cst_157 {dimension_numbers = #tpu.dot_dimension_numbers<[1], [0], [0], [1], [0, 0, 1, 1], [], []>} : vector<2x32xf32>, vector<32x256xf32>, vector<2x256xf32> -> vector<2x256xf32>
    %c0_158 = arith.constant 0 : index
    %c0_159 = arith.constant 0 : index
    %377 = vector.load %arg19[%c0_158, %c0_159] : memref<1x256xf32, #tpu.memory_space<vmem>>, vector<1x256xf32>
    %378 = vector.broadcast %377 : vector<1x256xf32> to vector<2x256xf32>
    %379 = arith.addf %376, %378 : vector<2x256xf32>
    %cst_160 = arith.constant 0.000000e+00 : f32
    %380 = vector.broadcast %cst_160 : f32 to vector<2x256xf32>
    %381 = arith.maximumf %379, %380 : vector<2x256xf32>
    %c0_161 = arith.constant 0 : index
    %c0_162 = arith.constant 0 : index
    %382 = vector.load %arg20[%c0_161, %c0_162] : memref<256x4xf32, #tpu.memory_space<vmem>>, vector<256x4xf32>
    %cst_163 = arith.constant dense<0.000000e+00> : vector<2x4xf32>
    %383 = tpu.matmul %381, %382, %cst_163 {dimension_numbers = #tpu.dot_dimension_numbers<[1], [0], [0], [1], [0, 0, 1, 1], [], []>} : vector<2x256xf32>, vector<256x4xf32>, vector<2x4xf32> -> vector<2x4xf32>
    %c0_164 = arith.constant 0 : index
    %c0_165 = arith.constant 0 : index
    %384 = vector.load %arg21[%c0_164, %c0_165] : memref<1x4xf32, #tpu.memory_space<vmem>>, vector<1x4xf32>
    %385 = vector.broadcast %384 : vector<1x4xf32> to vector<2x4xf32>
    %386 = arith.addf %383, %385 : vector<2x4xf32>
    %cst_166 = arith.constant dense<0xFF800000> : vector<2xf32>
    %387 = vector.multi_reduction <maximumf>, %386, %cst_166 [1] : vector<2x4xf32> to vector<2xf32>
    %388 = vector.shape_cast %387 : vector<2xf32> to vector<2x1xf32>
    %389 = vector.broadcast %388 : vector<2x1xf32> to vector<2x4xf32>
    %390 = arith.subf %386, %389 : vector<2x4xf32>
    %391 = math.exp %390 : vector<2x4xf32>
    %cst_167 = arith.constant dense<0.000000e+00> : vector<2xf32>
    %392 = vector.multi_reduction <add>, %391, %cst_167 [1] : vector<2x4xf32> to vector<2xf32>
    %393 = vector.shape_cast %392 : vector<2xf32> to vector<2x1xf32>
    %394 = vector.broadcast %393 : vector<2x1xf32> to vector<2x4xf32>
    %395 = arith.divf %391, %394 : vector<2x4xf32>
    %396 = vector.broadcast %388 : vector<2x1xf32> to vector<2x4xf32>
    %397 = arith.subf %386, %396 : vector<2x4xf32>
    %398 = math.log %393 : vector<2x1xf32>
    %399 = vector.broadcast %398 : vector<2x1xf32> to vector<2x4xf32>
    %400 = arith.subf %397, %399 : vector<2x4xf32>
    %c0_168 = arith.constant 0 : index
    %c0_169 = arith.constant 0 : index
    %401 = vector.load %arg22[%c0_168, %c0_169] : memref<2x4xf32, #tpu.memory_space<vmem>>, vector<2x4xf32>
    %402 = arith.mulf %401, %400 : vector<2x4xf32>
    %cst_170 = arith.constant dense<0.000000e+00> : vector<2xf32>
    %403 = vector.multi_reduction <add>, %402, %cst_170 [1] : vector<2x4xf32> to vector<2xf32>
    %404 = vector.shape_cast %403 : vector<2xf32> to vector<2x1xf32>
    %cst_171 = arith.constant 0.000000e+00 : f32
    %405 = vector.broadcast %cst_171 : f32 to vector<2x1xf32>
    %406 = arith.subf %405, %404 : vector<2x1xf32>
    %cst_172 = arith.constant dense<0.000000e+00> : vector<1xf32>
    %407 = vector.multi_reduction <add>, %406, %cst_172 [0] : vector<2x1xf32> to vector<1xf32>
    %408 = vector.shape_cast %407 : vector<1xf32> to vector<1x1xf32>
    %cst_173 = arith.constant 5.000000e-01 : f32
    %409 = vector.broadcast %cst_173 : f32 to vector<1x1xf32>
    %410 = arith.mulf %408, %409 : vector<1x1xf32>
    %411 = vector.shape_cast %410 : vector<1x1xf32> to vector<1x1xf32>
    %412 = vector.broadcast %411 : vector<1x1xf32> to vector<2x1xf32>
    %cst_174 = arith.constant 0.000000e+00 : f32
    %413 = vector.broadcast %cst_174 : f32 to vector<2x119xf32>
    %414 = tpu.concatenate %386, %395, %412, %413 in 1 : vector<2x4xf32>, vector<2x4xf32>, vector<2x1xf32>, vector<2x119xf32> -> vector<2x128xf32>
    %c0_175 = arith.constant 0 : index
    %c0_176 = arith.constant 0 : index
    %415 = vector.load %arg23[%c0_175, %c0_176] : memref<2x128xf32, #tpu.memory_space<vmem>>, vector<2x128xf32>
    tpu.vector_store %arg23[%c0_175, %c0_176], %414 {strides = array<i32>} : memref<2x128xf32, #tpu.memory_space<vmem>>, vector<2x128xf32>,
    return
  }
}

</mosaic_0001>

<llo_original>
// kernel: tpu_custom_call.1
$region0: #{tpu_custom_call.1}
  #allocation0 [shape = 'u32[]', space=smem, size = 0x4, offset = 0x4, fixed_abs, tag = 'smem constant byte address 0x4 - core index']
  #allocation1 [shape = 'u32[144,128]{1,0:T(1,128)}', space=vmem, size = 0x12000, scoped, tag = 'internal scratch']
  %s0 = inlined_call_operand.vmem [shape: f32[16,32], index: 0, kind: input, shape index: {}]
  %s1 = inlined_call_operand.vmem [shape: f32[2,8], index: 1, kind: input, shape index: {}]
  %s2 = inlined_call_operand.vmem [shape: f32[1,32], index: 2, kind: input, shape index: {}]
  %s3 = inlined_call_operand.vmem [shape: f32[1,32], index: 3, kind: input, shape index: {}]
  %s4 = inlined_call_operand.vmem [shape: f32[2,32,96], index: 4, kind: input, shape index: {}]
  %s5 = inlined_call_operand.vmem [shape: f32[2,1,96], index: 5, kind: input, shape index: {}]
  %s6 = inlined_call_operand.vmem [shape: f32[2,32,32], index: 6, kind: input, shape index: {}]
  %s7 = inlined_call_operand.vmem [shape: f32[2,1,32], index: 7, kind: input, shape index: {}]
  %s8 = inlined_call_operand.vmem [shape: f32[2,1,32], index: 8, kind: input, shape index: {}]
  %s9 = inlined_call_operand.vmem [shape: f32[2,1,32], index: 9, kind: input, shape index: {}]
  %s10 = inlined_call_operand.vmem [shape: f32[2,32,64], index: 10, kind: input, shape index: {}]
  %s11 = inlined_call_operand.vmem [shape: f32[2,1,64], index: 11, kind: input, shape index: {}]
  %s12 = inlined_call_operand.vmem [shape: f32[2,64,32], index: 12, kind: input, shape index: {}]
  %s13 = inlined_call_operand.vmem [shape: f32[2,1,32], index: 13, kind: input, shape index: {}]
  %s14 = inlined_call_operand.vmem [shape: f32[2,1,32], index: 14, kind: input, shape index: {}]
  %s15 = inlined_call_operand.vmem [shape: f32[2,1,32], index: 15, kind: input, shape index: {}]
  %s16 = inlined_call_operand.vmem [shape: f32[32,32], index: 16, kind: input, shape index: {}]
  %s17 = inlined_call_operand.vmem [shape: f32[1,32], index: 17, kind: input, shape index: {}]
  %s18 = inlined_call_operand.vmem [shape: f32[32,256], index: 18, kind: input, shape index: {}]
  %s19 = inlined_call_operand.vmem [shape: f32[1,256], index: 19, kind: input, shape index: {}]
  %s20 = inlined_call_operand.vmem [shape: f32[256,4], index: 20, kind: input, shape index: {}]
  %s21 = inlined_call_operand.vmem [shape: f32[1,4], index: 21, kind: input, shape index: {}]
  %s22 = inlined_call_operand.vmem [shape: f32[2,4], index: 22, kind: input, shape index: {}]
  %s23 = inlined_call_operand.hbm [shape: f32[2,128], index: 23, kind: output, shape index: {}]
  %s24 = sld [smem:[#allocation0]]
  $region102: #{tpu_custom_call.1} parent=0
    _
  %s26 = ssub.s32 1, %s24
  %s27 = scalar_select 0, %s26, %s24
  $region1: #{tpu_custom_call.1} parent=0
    #allocation2 [shape = 'u8[1024]{0}', space=vmem, size = 0x400, scoped, tag = 'output window, operand 0, single buffered']
    #allocation3 [shape = 's32[1]{0}', space=sflag, size = 0x4, scoped, tag = 'scoped memory for tpu_custom_call.1']
    %28 = vsyncpa [#allocation3], 0
    // Predicated region
    $region2: #{tpu_custom_call.1} parent=1 // pred_check
      _
    $region3: #{tpu_custom_call.1} parent=1 // pred_check_branch
      %30 = sbr.rel (0) target = $region5
    $region4: #{tpu_custom_call.1} parent=1 // pred_region
      _
    $region5: #{tpu_custom_call.1} parent=1 // pred_fallthru
      _
    // Predicated region
    $region6: #{tpu_custom_call.1} parent=1 // pred_check
      _
    $region7: #{tpu_custom_call.1} parent=1 // pred_check_branch
      %32 = sbr.rel (0) target = $region9
    $region8: #{tpu_custom_call.1} parent=1 // pred_region
      _
    $region9: #{tpu_custom_call.1} parent=1 // pred_fallthru
      _
    // Predicated region
    $region10: #{tpu_custom_call.1} parent=1 // pred_check
      _
    $region11: #{tpu_custom_call.1} parent=1 // pred_check_branch
      %34 = sbr.rel (0) target = $region13
    $region12: #{tpu_custom_call.1} parent=1 // pred_region
      _
    $region13: #{tpu_custom_call.1} parent=1 // pred_fallthru
      _
    // Predicated region
    $region14: #{tpu_custom_call.1} parent=1 // pred_check
      _
    $region15: #{tpu_custom_call.1} parent=1 // pred_check_branch
      %36 = sbr.rel (0) target = $region17
    $region16: #{tpu_custom_call.1} parent=1 // pred_region
      _
    $region17: #{tpu_custom_call.1} parent=1 // pred_fallthru
      _
    // Predicated region
    $region18: #{tpu_custom_call.1} parent=1 // pred_check
      _
    $region19: #{tpu_custom_call.1} parent=1 // pred_check_branch
      %38 = sbr.rel (0) target = $region21
    $region20: #{tpu_custom_call.1} parent=1 // pred_region
      _
    $region21: #{tpu_custom_call.1} parent=1 // pred_fallthru
      _
    // Predicated region
    $region22: #{tpu_custom_call.1} parent=1 // pred_check
      _
    $region23: #{tpu_custom_call.1} parent=1 // pred_check_branch
      %40 = sbr.rel (0) target = $region25
    $region24: #{tpu_custom_call.1} parent=1 // pred_region
      _
    $region25: #{tpu_custom_call.1} parent=1 // pred_fallthru
      _
    // Predicated region
    $region26: #{tpu_custom_call.1} parent=1 // pred_check
      _
    $region27: #{tpu_custom_call.1} parent=1 // pred_check_branch
      %42 = sbr.rel (0) target = $region29
    $region28: #{tpu_custom_call.1} parent=1 // pred_region
      _
    $region29: #{tpu_custom_call.1} parent=1 // pred_fallthru
      _
    // Predicated region
    $region30: #{tpu_custom_call.1} parent=1 // pred_check
      _
    $region31: #{tpu_custom_call.1} parent=1 // pred_check_branch
      %44 = sbr.rel (0) target = $region33
    $region32: #{tpu_custom_call.1} parent=1 // pred_region
      _
    $region33: #{tpu_custom_call.1} parent=1 // pred_fallthru
      _
    // Predicated region
    $region34: #{tpu_custom_call.1} parent=1 // pred_check
      _
    $region35: #{tpu_custom_call.1} parent=1 // pred_check_branch
      %46 = sbr.rel (0) target = $region37
    $region36: #{tpu_custom_call.1} parent=1 // pred_region
      _
    $region37: #{tpu_custom_call.1} parent=1 // pred_fallthru
      _
    // Predicated region
    $region38: #{tpu_custom_call.1} parent=1 // pred_check
      _
    $region39: #{tpu_custom_call.1} parent=1 // pred_check_branch
      %48 = sbr.rel (0) target = $region41
    $region40: #{tpu_custom_call.1} parent=1 // pred_region
      _
    $region41: #{tpu_custom_call.1} parent=1 // pred_fallthru
      _
    // Predicated region
    $region42: #{tpu_custom_call.1} parent=1 // pred_check
      _
    $region43: #{tpu_custom_call.1} parent=1 // pred_check_branch
      %50 = sbr.rel (0) target = $region45
    $region44: #{tpu_custom_call.1} parent=1 // pred_region
      _
    $region45: #{tpu_custom_call.1} parent=1 // pred_fallthru
      _
    // Predicated region
    $region46: #{tpu_custom_call.1} parent=1 // pred_check
      _
    $region47: #{tpu_custom_call.1} parent=1 // pred_check_branch
      %52 = sbr.rel (0) target = $region49
    $region48: #{tpu_custom_call.1} parent=1 // pred_region
      _
    $region49: #{tpu_custom_call.1} parent=1 // pred_fallthru
      _
    // Predicated region
    $region50: #{tpu_custom_call.1} parent=1 // pred_check
      _
    $region51: #{tpu_custom_call.1} parent=1 // pred_check_branch
      %54 = sbr.rel (0) target = $region53
    $region52: #{tpu_custom_call.1} parent=1 // pred_region
      _
    $region53: #{tpu_custom_call.1} parent=1 // pred_fallthru
      _
    // Predicated region
    $region54: #{tpu_custom_call.1} parent=1 // pred_check
      _
    $region55: #{tpu_custom_call.1} parent=1 // pred_check_branch
      %56 = sbr.rel (0) target = $region57
    $region56: #{tpu_custom_call.1} parent=1 // pred_region
      _
    $region57: #{tpu_custom_call.1} parent=1 // pred_fallthru
      _
    // Predicated region
    $region58: #{tpu_custom_call.1} parent=1 // pred_check
      _
    $region59: #{tpu_custom_call.1} parent=1 // pred_check_branch
      %58 = sbr.rel (0) target = $region61
    $region60: #{tpu_custom_call.1} parent=1 // pred_region
      _
    $region61: #{tpu_custom_call.1} parent=1 // pred_fallthru
      _
    // Predicated region
    $region62: #{tpu_custom_call.1} parent=1 // pred_check
      _
    $region63: #{tpu_custom_call.1} parent=1 // pred_check_branch
      %60 = sbr.rel (0) target = $region65
    $region64: #{tpu_custom_call.1} parent=1 // pred_region
      _
    $region65: #{tpu_custom_call.1} parent=1 // pred_fallthru
      _
    // Predicated region
    $region66: #{tpu_custom_call.1} parent=1 // pred_check
      _
    $region67: #{tpu_custom_call.1} parent=1 // pred_check_branch
      %62 = sbr.rel (0) target = $region69
    $region68: #{tpu_custom_call.1} parent=1 // pred_region
      _
    $region69: #{tpu_custom_call.1} parent=1 // pred_fallthru
      _
    // Predicated region
    $region70: #{tpu_custom_call.1} parent=1 // pred_check
      _
    $region71: #{tpu_custom_call.1} parent=1 // pred_check_branch
      %64 = sbr.rel (0) target = $region73
    $region72: #{tpu_custom_call.1} parent=1 // pred_region
      _
    $region73: #{tpu_custom_call.1} parent=1 // pred_fallthru
      _
    // Predicated region
    $region74: #{tpu_custom_call.1} parent=1 // pred_check
      _
    $region75: #{tpu_custom_call.1} parent=1 // pred_check_branch
      %66 = sbr.rel (0) target = $region77
    $region76: #{tpu_custom_call.1} parent=1 // pred_region
      _
    $region77: #{tpu_custom_call.1} parent=1 // pred_fallthru
      _
    // Predicated region
    $region78: #{tpu_custom_call.1} parent=1 // pred_check
      _
    $region79: #{tpu_custom_call.1} parent=1 // pred_check_branch
      %68 = sbr.rel (0) target = $region81
    $region80: #{tpu_custom_call.1} parent=1 // pred_region
      _
    $region81: #{tpu_custom_call.1} parent=1 // pred_fallthru
      _
    // Predicated region
    $region82: #{tpu_custom_call.1} parent=1 // pred_check
      _
    $region83: #{tpu_custom_call.1} parent=1 // pred_check_branch
      %70 = sbr.rel (0) target = $region85
    $region84: #{tpu_custom_call.1} parent=1 // pred_region
      _
    $region85: #{tpu_custom_call.1} parent=1 // pred_fallthru
      _
    // Predicated region
    $region86: #{tpu_custom_call.1} parent=1 // pred_check
      _
    $region87: #{tpu_custom_call.1} parent=1 // pred_check_branch
      %72 = sbr.rel (0) target = $region89
    $region88: #{tpu_custom_call.1} parent=1 // pred_region
      _
    $region89: #{tpu_custom_call.1} parent=1 // pred_fallthru
      _
    // Predicated region
    $region90: #{tpu_custom_call.1} parent=1 // pred_check
      _
    $region91: #{tpu_custom_call.1} parent=1 // pred_check_branch
      %74 = sbr.rel (0) target = $region93
    $region92: #{tpu_custom_call.1} parent=1 // pred_region
      _
    $region93: #{tpu_custom_call.1} parent=1 // pred_fallthru
      _
    %v75 = vld [vmem:[%s1] sm:$0x3]
    %v76 = vld [vmem:[%s0] sm:$0xff]
    %v77 = vld [vmem:[%s0 + $0x8] sm:$0xff]
    %v78 = vld [vmem:[%s2] sm:$0x1]
    %v79 = vld [vmem:[%s3] sm:$0x1]
    %vm80 = vcmask 261120
    %v81 = vsel %vm80, %v76, 0.0
    %82 = vadd.xlane.f32.xlu0 %v81
    %v83 = vpop.xlane.xlu0 %82
    %v84 = vsel %vm80, %v77, 0.0
    %85 = vadd.xlane.f32.xlu0 %v84
    %v86 = vpop.xlane.xlu0 %85
    %v87 = vrcp.pop 32.0
    %v88 = vmul.f32 %v83, %v87
    %v89 = vmul.f32 %v86, %v87
    %v90 = vsub.f32 %v76, %v88
    %v91 = vsub.f32 %v77, %v89
    %v92 = vmul.f32 %v90, %v90
    %v93 = vmul.f32 %v91, %v91
    %v94 = vsel %vm80, %v92, 0.0
    %95 = vadd.xlane.f32.xlu0 %v94
    %v96 = vpop.xlane.xlu0 %95
    %v97 = vsel %vm80, %v93, 0.0
    %98 = vadd.xlane.f32.xlu0 %v97
    %v99 = vpop.xlane.xlu0 %98
    %v100 = vmul.f32 %v96, %v87
    %v101 = vmul.f32 %v99, %v87
    %v102 = vadd.f32 %v100, 1e-12
    %v103 = vadd.f32 %v101, 1e-12
    %v104 = vrsqrt.pop %v102
    %v105 = vrsqrt.pop %v103
    %v106 = vmul.f32 %v90, %v104
    %v107 = vmul.f32 %v91, %v105
    %v109 = vlaneseq
    %v110 = vshrl.u32 %v109, 7
    %v111 = vsub.s32 0, %v110
    %v112 = vrot.slane %v78, %v111
    %v114 = vmul.f32 %v106, %v112
    %v115 = vmul.f32 %v107, %v112
    %v117 = vlaneseq
    %v118 = vshrl.u32 %v117, 7
    %v119 = vsub.s32 0, %v118
    %v120 = vrot.slane %v79, %v119
    %v122 = vadd.f32 %v114, %v120
    %v123 = vadd.f32 %v115, %v120
    %v124 = vld [vmem:[%s4] sm:$0xff]
    %v125 = vld [vmem:[%s4 + $0x8] sm:$0xff]
    %v126 = vld [vmem:[%s4 + $0x10] sm:$0xff]
    %v127 = vld [vmem:[%s4 + $0x18] sm:$0xff]
    %v128 = vld [vmem:[%s5] sm:$0x1]
    %v129 = vld [vmem:[%s6] sm:$0xff]
    %v130 = vld [vmem:[%s6 + $0x8] sm:$0xff]
    %v131 = vld [vmem:[%s6 + $0x10] sm:$0xff]
    %v132 = vld [vmem:[%s6 + $0x18] sm:$0xff]
    %v133 = vld [vmem:[%s7] sm:$0x1]
    %v134 = vld [vmem:[%s8] sm:$0x1]
    %v135 = vld [vmem:[%s9] sm:$0x1]
    %v136 = vld [vmem:[%s10] sm:$0xff]
    %v137 = vld [vmem:[%s10 + $0x8] sm:$0xff]
    %v138 = vld [vmem:[%s10 + $0x10] sm:$0xff]
    %v139 = vld [vmem:[%s10 + $0x18] sm:$0xff]
    %v140 = vld [vmem:[%s11] sm:$0x1]
    %v141 = vld [vmem:[%s12] sm:$0xff]
    %v142 = vld [vmem:[%s12 + $0x8] sm:$0xff]
    %v143 = vld [vmem:[%s12 + $0x10] sm:$0xff]
    %v144 = vld [vmem:[%s12 + $0x18] sm:$0xff]
    %v145 = vld [vmem:[%s12 + $0x20] sm:$0xff]
    %v146 = vld [vmem:[%s12 + $0x28] sm:$0xff]
    %v147 = vld [vmem:[%s12 + $0x30] sm:$0xff]
    %v148 = vld [vmem:[%s12 + $0x38] sm:$0xff]
    %v149 = vld [vmem:[%s13] sm:$0x1]
    %v150 = vld [vmem:[%s14] sm:$0x1]
    %v151 = vld [vmem:[%s15] sm:$0x1]
    %v153 = vlaneseq
    %v154 = vshrl.u32 %v153, 7
    %v155 = vsub.s32 0, %v154
    %v156 = vrot.slane %v128, %v155
    %v159 = vsel %vm80, %v122, 0
    %v162 = vsel %vm80, %v123, 0
    %164 = vmatprep.subr.mxu0 0.0
    %165 = vmatpush1.msra.mxu0 0.0
    %166 = vmatprep.subr.mxu0 0.0
    %167 = vmatpush1.msra.mxu0 0.0
    %168 = vmatprep.subr.mxu0 0.0
    %169 = vmatpush1.msra.mxu0 0.0
    %170 = vmatprep.subr.mxu0 0.0
    %171 = vmatpush1.msra.mxu0 0.0
    %172 = vmatprep.subr.mxu0 0.0
    %173 = vmatpush1.msra.mxu0 0.0
    %174 = vmatprep.subr.mxu0 0.0
    %175 = vmatpush1.msra.mxu0 0.0
    %176 = vmatprep.subr.mxu0 0.0
    %177 = vmatpush1.msra.mxu0 0.0
    %178 = vmatprep.subr.mxu0 0.0
    %179 = vmatpush1.msra.mxu0 0.0
    %180 = vmatprep.subr.mxu0 0.0
    %181 = vmatpush1.msra.mxu0 0.0
    %182 = vmatprep.subr.mxu0 0.0
    %183 = vmatpush1.msra.mxu0 0.0
    %184 = vmatprep.subr.mxu0 0.0
    %185 = vmatpush1.msra.mxu0 0.0
    %186 = vmatprep.subr.mxu0 0.0
    %187 = vmatpush1.msra.mxu0 0.0
    %188 = vmatprep.subr.mxu0 0.0
    %189 = vmatpush1.msra.mxu0 %v127
    %190 = vmatprep.subr.mxu0 0.0
    %191 = vmatpush1.msra.mxu0 %v126
    %192 = vmatprep.subr.mxu0 0.0
    %193 = vmatpush1.msra.mxu0 %v125
    %194 = vmatprep.subr.mxu0 0.0
    %195 = vmatpush1.msra.mxu0 %v124
    %196 = vmatprep.subr.mxu0 0.0
    %197 = vmatpush2.msra.mxu0 0.0
    %198 = vmatprep.subr.mxu0 0.0
    %199 = vmatpush2.msra.mxu0 0.0
    %200 = vmatprep.subr.mxu0 0.0
    %201 = vmatpush2.msra.mxu0 0.0
    %202 = vmatprep.subr.mxu0 0.0
    %203 = vmatpush2.msra.mxu0 0.0
    %204 = vmatprep.subr.mxu0 0.0
    %205 = vmatpush2.msra.mxu0 0.0
    %206 = vmatprep.subr.mxu0 0.0
    %207 = vmatpush2.msra.mxu0 0.0
    %208 = vmatprep.subr.mxu0 0.0
    %209 = vmatpush2.msra.mxu0 0.0
    %210 = vmatprep.subr.mxu0 0.0
    %211 = vmatpush2.msra.mxu0 0.0
    %212 = vmatprep.subr.mxu0 0.0
    %213 = vmatpush2.msra.mxu0 0.0
    %214 = vmatprep.subr.mxu0 0.0
    %215 = vmatpush2.msra.mxu0 0.0
    %216 = vmatprep.subr.mxu0 0.0
    %217 = vmatpush2.msra.mxu0 0.0
    %218 = vmatprep.subr.mxu0 0.0
    %219 = vmatpush2.msra.mxu0 0.0
    %220 = vmatprep.subr.mxu0 0.0
    %221 = vmatpush2.msra.mxu0 0.0
    %222 = vmatprep.subr.mxu0 0.0
    %223 = vmatpush2.msra.mxu0 0.0
    %224 = vmatprep.subr.mxu0 0.0
    %225 = vmatpush2.msra.mxu0 0.0
    %226 = vmatprep.subr.mxu0 0.0
    %227 = vmatpush2.msra.mxu0 0.0
    %228 = vmatprep.mubr.f32.mxu0 0.0
    %229 = vmatmul.mubr.f32.gmra.mxu0 %v159
    %v230 = vpop.f32.mrf.mxu0
    %v231 = vadd.f32 %v156, %v230
    %v232 = vpop.f32.mrf.mxu0
    %233 = vmatprep.mubr.f32.mxu0 0.0
    %234 = vmatmul.mubr.f32.gmra.mxu0 %v162
    %v235 = vpop.f32.mrf.mxu0
    %v236 = vadd.f32 %v156, %v235
    %v237 = vpop.f32.mrf.mxu0
    %238 = vdwg.mxu0
    %v239 = vlaneseq
    %v240 = vshrl.u32 %v239, 7
    %v241 = vsub.s32 0, %v240
    %v242 = vrot.slane %v75, %v241
    %244 = vrot.lane.b32.xlu0 %v231, 96
    %v245 = vpop.permute.xlu0 %244
    %vm246 = vcmask 130048
    %v247 = vsel %vm246, %v231, 0
    %v249 = vsel %vm246, %v245, 0
    %251 = vmatprep.subr.mxu0 0.0
    %252 = vmatpush1.xpose.msra.mxu0 0.0
    %253 = vmatprep.subr.mxu0 0.0
    %254 = vmatpush1.xpose.msra.mxu0 0.0
    %255 = vmatprep.subr.mxu0 0.0
    %256 = vmatpush1.xpose.msra.mxu0 0.0
    %257 = vmatprep.subr.mxu0 0.0
    %258 = vmatpush1.xpose.msra.mxu0 0.0
    %259 = vmatprep.subr.mxu0 0.0
    %260 = vmatpush1.xpose.msra.mxu0 0.0
    %261 = vmatprep.subr.mxu0 0.0
    %262 = vmatpush1.xpose.msra.mxu0 0.0
    %263 = vmatprep.subr.mxu0 0.0
    %264 = vmatpush1.xpose.msra.mxu0 0.0
    %265 = vmatprep.subr.mxu0 0.0
    %266 = vmatpush1.xpose.msra.mxu0 0.0
    %267 = vmatprep.subr.mxu0 0.0
    %268 = vmatpush1.xpose.msra.mxu0 0.0
    %269 = vmatprep.subr.mxu0 0.0
    %270 = vmatpush1.xpose.msra.mxu0 0.0
    %271 = vmatprep.subr.mxu0 0.0
    %272 = vmatpush1.xpose.msra.mxu0 0.0
    %273 = vmatprep.subr.mxu0 0.0
    %274 = vmatpush1.xpose.msra.mxu0 0.0
    %275 = vmatprep.subr.mxu0 0.0
    %276 = vmatpush1.xpose.msra.mxu0 0.0
    %277 = vmatprep.subr.mxu0 0.0
    %278 = vmatpush1.xpose.msra.mxu0 0.0
    %279 = vmatprep.subr.mxu0 0.0
    %280 = vmatpush1.xpose.msra.mxu0 0.0
    %281 = vmatprep.subr.mxu0 0.0
    %282 = vmatpush1.xpose.msra.mxu0 %v249
    %283 = vmatprep.subr.mxu0 0.0
    %284 = vmatpush2.xpose.msra.mxu0 0.0
    %285 = vmatprep.subr.mxu0 0.0
    %286 = vmatpush2.xpose.msra.mxu0 0.0
    %287 = vmatprep.subr.mxu0 0.0
    %288 = vmatpush2.xpose.msra.mxu0 0.0
    %289 = vmatprep.subr.mxu0 0.0
    %290 = vmatpush2.xpose.msra.mxu0 0.0
    %291 = vmatprep.subr.mxu0 0.0
    %292 = vmatpush2.xpose.msra.mxu0 0.0
    %293 = vmatprep.subr.mxu0 0.0
    %294 = vmatpush2.xpose.msra.mxu0 0.0
    %295 = vmatprep.subr.mxu0 0.0
    %296 = vmatpush2.xpose.msra.mxu0 0.0
    %297 = vmatprep.subr.mxu0 0.0
    %298 = vmatpush2.xpose.msra.mxu0 0.0
    %299 = vmatprep.subr.mxu0 0.0
    %300 = vmatpush2.xpose.msra.mxu0 0.0
    %301 = vmatprep.subr.mxu0 0.0
    %302 = vmatpush2.xpose.msra.mxu0 0.0
    %303 = vmatprep.subr.mxu0 0.0
    %304 = vmatpush2.xpose.msra.mxu0 0.0
    %305 = vmatprep.subr.mxu0 0.0
    %306 = vmatpush2.xpose.msra.mxu0 0.0
    %307 = vmatprep.subr.mxu0 0.0
    %308 = vmatpush2.xpose.msra.mxu0 0.0
    %309 = vmatprep.subr.mxu0 0.0
    %310 = vmatpush2.xpose.msra.mxu0 0.0
    %311 = vmatprep.subr.mxu0 0.0
    %312 = vmatpush2.xpose.msra.mxu0 0.0
    %313 = vmatprep.subr.mxu0 0.0
    %314 = vmatpush2.xpose.msra.mxu0 0.0
    %315 = vmatprep.mubr.f32.mxu0 0.0
    %316 = vmatmul.mubr.f32.gmra.mxu0 %v247
    %v317 = vpop.f32.mrf.mxu0
    %v318 = vadd.f32 %v242, %v317
    %v319 = vpop.f32.mrf.mxu0
    %320 = vdwg.mxu0
    %vm321 = vcmask 64512
    %v322 = vsel %vm321, %v318, -inf
    %323 = vmax.xlane.f32.xlu0 %v322
    %v324 = vpop.xlane.xlu0 %323
    %v325 = vsub.f32 %v318, %v324
    %v326 = vmul.f32 %v325, 1.442695
    %v327 = vpow.pop %v326
    %v328 = vsel %vm321, %v327, 0.0
    %329 = vadd.xlane.f32.xlu0 %v328
    %v330 = vpop.xlane.xlu0 %329
    %v331 = vrcp.pop %v330
    %v332 = vmul.f32 %v327, %v331
    %333 = vrot.lane.b32.xlu0 %v231, 64
    %v334 = vpop.permute.xlu0 %333
    %v337 = vsel %vm321, %v332, 0
    %339 = vmatprep.subr.mxu0 0.0
    %340 = vmatpush1.msra.mxu0 0.0
    %341 = vmatprep.subr.mxu0 0.0
    %342 = vmatpush1.msra.mxu0 0.0
    %343 = vmatprep.subr.mxu0 0.0
    %344 = vmatpush1.msra.mxu0 0.0
    %345 = vmatprep.subr.mxu0 0.0
    %346 = vmatpush1.msra.mxu0 0.0
    %347 = vmatprep.subr.mxu0 0.0
    %348 = vmatpush1.msra.mxu0 0.0
    %349 = vmatprep.subr.mxu0 0.0
    %350 = vmatpush1.msra.mxu0 0.0
    %351 = vmatprep.subr.mxu0 0.0
    %352 = vmatpush1.msra.mxu0 0.0
    %353 = vmatprep.subr.mxu0 0.0
    %354 = vmatpush1.msra.mxu0 0.0
    %355 = vmatprep.subr.mxu0 0.0
    %356 = vmatpush1.msra.mxu0 0.0
    %357 = vmatprep.subr.mxu0 0.0
    %358 = vmatpush1.msra.mxu0 0.0
    %359 = vmatprep.subr.mxu0 0.0
    %360 = vmatpush1.msra.mxu0 0.0
    %361 = vmatprep.subr.mxu0 0.0
    %362 = vmatpush1.msra.mxu0 0.0
    %363 = vmatprep.subr.mxu0 0.0
    %364 = vmatpush1.msra.mxu0 0.0
    %365 = vmatprep.subr.mxu0 0.0
    %366 = vmatpush1.msra.mxu0 0.0
    %367 = vmatprep.subr.mxu0 0.0
    %368 = vmatpush1.msra.mxu0 0.0
    %369 = vmatprep.subr.mxu0 0.0
    %370 = vmatpush1.msra.mxu0 %v334
    %371 = vmatprep.subr.mxu0 0.0
    %372 = vmatpush2.msra.mxu0 0.0
    %373 = vmatprep.subr.mxu0 0.0
    %374 = vmatpush2.msra.mxu0 0.0
    %375 = vmatprep.subr.mxu0 0.0
    %376 = vmatpush2.msra.mxu0 0.0
    %377 = vmatprep.subr.mxu0 0.0
    %378 = vmatpush2.msra.mxu0 0.0
    %379 = vmatprep.subr.mxu0 0.0
    %380 = vmatpush2.msra.mxu0 0.0
    %381 = vmatprep.subr.mxu0 0.0
    %382 = vmatpush2.msra.mxu0 0.0
    %383 = vmatprep.subr.mxu0 0.0
    %384 = vmatpush2.msra.mxu0 0.0
    %385 = vmatprep.subr.mxu0 0.0
    %386 = vmatpush2.msra.mxu0 0.0
    %387 = vmatprep.subr.mxu0 0.0
    %388 = vmatpush2.msra.mxu0 0.0
    %389 = vmatprep.subr.mxu0 0.0
    %390 = vmatpush2.msra.mxu0 0.0
    %391 = vmatprep.subr.mxu0 0.0
    %392 = vmatpush2.msra.mxu0 0.0
    %393 = vmatprep.subr.mxu0 0.0
    %394 = vmatpush2.msra.mxu0 0.0
    %395 = vmatprep.subr.mxu0 0.0
    %396 = vmatpush2.msra.mxu0 0.0
    %397 = vmatprep.subr.mxu0 0.0
    %398 = vmatpush2.msra.mxu0 0.0
    %399 = vmatprep.subr.mxu0 0.0
    %400 = vmatpush2.msra.mxu0 0.0
    %401 = vmatprep.subr.mxu0 0.0
    %402 = vmatpush2.msra.mxu0 0.0
    %403 = vmatprep.mubr.f32.mxu0 0.0
    %404 = vmatmul.mubr.f32.gmra.mxu0 %v337
    %v405 = vpop.f32.mrf.mxu0
    %v406 = vadd.f32 0.0, %v405
    %v407 = vpop.f32.mrf.mxu0
    %408 = vdwg.mxu0
    %409 = vrot.lane.b32.xlu0 %v231, 112
    %v410 = vpop.permute.xlu0 %409
    %411 = vrot.lane.b32.xlu0 %v231, 80
    %v412 = vpop.permute.xlu0 %411
    %v413 = vsel %vm246, %v410, 0
    %v415 = vsel %vm246, %v412, 0
    %417 = vmatprep.subr.mxu0 0.0
    %418 = vmatpush1.xpose.msra.mxu0 0.0
    %419 = vmatprep.subr.mxu0 0.0
    %420 = vmatpush1.xpose.msra.mxu0 0.0
    %421 = vmatprep.subr.mxu0 0.0
    %422 = vmatpush1.xpose.msra.mxu0 0.0
    %423 = vmatprep.subr.mxu0 0.0
    %424 = vmatpush1.xpose.msra.mxu0 0.0
    %425 = vmatprep.subr.mxu0 0.0
    %426 = vmatpush1.xpose.msra.mxu0 0.0
    %427 = vmatprep.subr.mxu0 0.0
    %428 = vmatpush1.xpose.msra.mxu0 0.0
    %429 = vmatprep.subr.mxu0 0.0
    %430 = vmatpush1.xpose.msra.mxu0 0.0
    %431 = vmatprep.subr.mxu0 0.0
    %432 = vmatpush1.xpose.msra.mxu0 0.0
    %433 = vmatprep.subr.mxu0 0.0
    %434 = vmatpush1.xpose.msra.mxu0 0.0
    %435 = vmatprep.subr.mxu0 0.0
    %436 = vmatpush1.xpose.msra.mxu0 0.0
    %437 = vmatprep.subr.mxu0 0.0
    %438 = vmatpush1.xpose.msra.mxu0 0.0
    %439 = vmatprep.subr.mxu0 0.0
    %440 = vmatpush1.xpose.msra.mxu0 0.0
    %441 = vmatprep.subr.mxu0 0.0
    %442 = vmatpush1.xpose.msra.mxu0 0.0
    %443 = vmatprep.subr.mxu0 0.0
    %444 = vmatpush1.xpose.msra.mxu0 0.0
    %445 = vmatprep.subr.mxu0 0.0
    %446 = vmatpush1.xpose.msra.mxu0 0.0
    %447 = vmatprep.subr.mxu0 0.0
    %448 = vmatpush1.xpose.msra.mxu0 %v415
    %449 = vmatprep.subr.mxu0 0.0
    %450 = vmatpush2.xpose.msra.mxu0 0.0
    %451 = vmatprep.subr.mxu0 0.0
    %452 = vmatpush2.xpose.msra.mxu0 0.0
    %453 = vmatprep.subr.mxu0 0.0
    %454 = vmatpush2.xpose.msra.mxu0 0.0
    %455 = vmatprep.subr.mxu0 0.0
    %456 = vmatpush2.xpose.msra.mxu0 0.0
    %457 = vmatprep.subr.mxu0 0.0
    %458 = vmatpush2.xpose.msra.mxu0 0.0
    %459 = vmatprep.subr.mxu0 0.0
    %460 = vmatpush2.xpose.msra.mxu0 0.0
    %461 = vmatprep.subr.mxu0 0.0
    %462 = vmatpush2.xpose.msra.mxu0 0.0
    %463 = vmatprep.subr.mxu0 0.0
    %464 = vmatpush2.xpose.msra.mxu0 0.0
    %465 = vmatprep.subr.mxu0 0.0
    %466 = vmatpush2.xpose.msra.mxu0 0.0
    %467 = vmatprep.subr.mxu0 0.0
    %468 = vmatpush2.xpose.msra.mxu0 0.0
    %469 = vmatprep.subr.mxu0 0.0
    %470 = vmatpush2.xpose.msra.mxu0 0.0
    %471 = vmatprep.subr.mxu0 0.0
    %472 = vmatpush2.xpose.msra.mxu0 0.0
    %473 = vmatprep.subr.mxu0 0.0
    %474 = vmatpush2.xpose.msra.mxu0 0.0
    %475 = vmatprep.subr.mxu0 0.0
    %476 = vmatpush2.xpose.msra.mxu0 0.0
    %477 = vmatprep.subr.mxu0 0.0
    %478 = vmatpush2.xpose.msra.mxu0 0.0
    %479 = vmatprep.subr.mxu0 0.0
    %480 = vmatpush2.xpose.msra.mxu0 0.0
    %481 = vmatprep.mubr.f32.mxu0 0.0
    %482 = vmatmul.mubr.f32.gmra.mxu0 %v413
    %v483 = vpop.f32.mrf.mxu0
    %v484 = vadd.f32 %v242, %v483
    %v485 = vpop.f32.mrf.mxu0
    %486 = vdwg.mxu0
    %v487 = vsel %vm321, %v484, -inf
    %488 = vmax.xlane.f32.xlu0 %v487
    %v489 = vpop.xlane.xlu0 %488
    %v490 = vsub.f32 %v484, %v489
    %v491 = vmul.f32 %v490, 1.442695
    %v492 = vpow.pop %v491
    %v493 = vsel %vm321, %v492, 0.0
    %494 = vadd.xlane.f32.xlu0 %v493
    %v495 = vpop.xlane.xlu0 %494
    %v496 = vrcp.pop %v495
    %v497 = vmul.f32 %v492, %v496
    %498 = vrot.lane.b32.xlu0 %v231, 48
    %v499 = vpop.permute.xlu0 %498
    %v502 = vsel %vm321, %v497, 0
    %504 = vmatprep.subr.mxu0 0.0
    %505 = vmatpush1.msra.mxu0 0.0
    %506 = vmatprep.subr.mxu0 0.0
    %507 = vmatpush1.msra.mxu0 0.0
    %508 = vmatprep.subr.mxu0 0.0
    %509 = vmatpush1.msra.mxu0 0.0
    %510 = vmatprep.subr.mxu0 0.0
    %511 = vmatpush1.msra.mxu0 0.0
    %512 = vmatprep.subr.mxu0 0.0
    %513 = vmatpush1.msra.mxu0 0.0
    %514 = vmatprep.subr.mxu0 0.0
    %515 = vmatpush1.msra.mxu0 0.0
    %516 = vmatprep.subr.mxu0 0.0
    %517 = vmatpush1.msra.mxu0 0.0
    %518 = vmatprep.subr.mxu0 0.0
    %519 = vmatpush1.msra.mxu0 0.0
    %520 = vmatprep.subr.mxu0 0.0
    %521 = vmatpush1.msra.mxu0 0.0
    %522 = vmatprep.subr.mxu0 0.0
    %523 = vmatpush1.msra.mxu0 0.0
    %524 = vmatprep.subr.mxu0 0.0
    %525 = vmatpush1.msra.mxu0 0.0
    %526 = vmatprep.subr.mxu0 0.0
    %527 = vmatpush1.msra.mxu0 0.0
    %528 = vmatprep.subr.mxu0 0.0
    %529 = vmatpush1.msra.mxu0 0.0
    %530 = vmatprep.subr.mxu0 0.0
    %531 = vmatpush1.msra.mxu0 0.0
    %532 = vmatprep.subr.mxu0 0.0
    %533 = vmatpush1.msra.mxu0 0.0
    %534 = vmatprep.subr.mxu0 0.0
    %535 = vmatpush1.msra.mxu0 %v499
    %536 = vmatprep.subr.mxu0 0.0
    %537 = vmatpush2.msra.mxu0 0.0
    %538 = vmatprep.subr.mxu0 0.0
    %539 = vmatpush2.msra.mxu0 0.0
    %540 = vmatprep.subr.mxu0 0.0
    %541 = vmatpush2.msra.mxu0 0.0
    %542 = vmatprep.subr.mxu0 0.0
    %543 = vmatpush2.msra.mxu0 0.0
    %544 = vmatprep.subr.mxu0 0.0
    %545 = vmatpush2.msra.mxu0 0.0
    %546 = vmatprep.subr.mxu0 0.0
    %547 = vmatpush2.msra.mxu0 0.0
    %548 = vmatprep.subr.mxu0 0.0
    %549 = vmatpush2.msra.mxu0 0.0
    %550 = vmatprep.subr.mxu0 0.0
    %551 = vmatpush2.msra.mxu0 0.0
    %552 = vmatprep.subr.mxu0 0.0
    %553 = vmatpush2.msra.mxu0 0.0
    %554 = vmatprep.subr.mxu0 0.0
    %555 = vmatpush2.msra.mxu0 0.0
    %556 = vmatprep.subr.mxu0 0.0
    %557 = vmatpush2.msra.mxu0 0.0
    %558 = vmatprep.subr.mxu0 0.0
    %559 = vmatpush2.msra.mxu0 0.0
    %560 = vmatprep.subr.mxu0 0.0
    %561 = vmatpush2.msra.mxu0 0.0
    %562 = vmatprep.subr.mxu0 0.0
    %563 = vmatpush2.msra.mxu0 0.0
    %564 = vmatprep.subr.mxu0 0.0
    %565 = vmatpush2.msra.mxu0 0.0
    %566 = vmatprep.subr.mxu0 0.0
    %567 = vmatpush2.msra.mxu0 0.0
    %568 = vmatprep.mubr.f32.mxu0 0.0
    %569 = vmatmul.mubr.f32.gmra.mxu0 %v502
    %v570 = vpop.f32.mrf.mxu0
    %v571 = vadd.f32 0.0, %v570
    %v572 = vpop.f32.mrf.mxu0
    %573 = vdwg.mxu0
    %575 = vrot.lane.b32.xlu0 %v571, 16
    %v576 = vpop.permute.xlu0 %575
    %v578 = vsel %vm246, %v406, %v576
    %v579 = vlaneseq
    %v580 = vshrl.u32 %v579, 7
    %v581 = vsub.s32 1, %v580
    %v582 = vrot.slane %v75, %v581
    %584 = vrot.lane.b32.xlu0 %v236, 96
    %v585 = vpop.permute.xlu0 %584
    %v586 = vsel %vm246, %v236, 0
    %v588 = vsel %vm246, %v585, 0
    %590 = vmatprep.subr.mxu0 0.0
    %591 = vmatpush1.xpose.msra.mxu0 0.0
    %592 = vmatprep.subr.mxu0 0.0
    %593 = vmatpush1.xpose.msra.mxu0 0.0
    %594 = vmatprep.subr.mxu0 0.0
    %595 = vmatpush1.xpose.msra.mxu0 0.0
    %596 = vmatprep.subr.mxu0 0.0
    %597 = vmatpush1.xpose.msra.mxu0 0.0
    %598 = vmatprep.subr.mxu0 0.0
    %599 = vmatpush1.xpose.msra.mxu0 0.0
    %600 = vmatprep.subr.mxu0 0.0
    %601 = vmatpush1.xpose.msra.mxu0 0.0
    %602 = vmatprep.subr.mxu0 0.0
    %603 = vmatpush1.xpose.msra.mxu0 0.0
    %604 = vmatprep.subr.mxu0 0.0
    %605 = vmatpush1.xpose.msra.mxu0 0.0
    %606 = vmatprep.subr.mxu0 0.0
    %607 = vmatpush1.xpose.msra.mxu0 0.0
    %608 = vmatprep.subr.mxu0 0.0
    %609 = vmatpush1.xpose.msra.mxu0 0.0
    %610 = vmatprep.subr.mxu0 0.0
    %611 = vmatpush1.xpose.msra.mxu0 0.0
    %612 = vmatprep.subr.mxu0 0.0
    %613 = vmatpush1.xpose.msra.mxu0 0.0
    %614 = vmatprep.subr.mxu0 0.0
    %615 = vmatpush1.xpose.msra.mxu0 0.0
    %616 = vmatprep.subr.mxu0 0.0
    %617 = vmatpush1.xpose.msra.mxu0 0.0
    %618 = vmatprep.subr.mxu0 0.0
    %619 = vmatpush1.xpose.msra.mxu0 0.0
    %620 = vmatprep.subr.mxu0 0.0
    %621 = vmatpush1.xpose.msra.mxu0 %v588
    %622 = vmatprep.subr.mxu0 0.0
    %623 = vmatpush2.xpose.msra.mxu0 0.0
    %624 = vmatprep.subr.mxu0 0.0
    %625 = vmatpush2.xpose.msra.mxu0 0.0
    %626 = vmatprep.subr.mxu0 0.0
    %627 = vmatpush2.xpose.msra.mxu0 0.0
    %628 = vmatprep.subr.mxu0 0.0
    %629 = vmatpush2.xpose.msra.mxu0 0.0
    %630 = vmatprep.subr.mxu0 0.0
    %631 = vmatpush2.xpose.msra.mxu0 0.0
    %632 = vmatprep.subr.mxu0 0.0
    %633 = vmatpush2.xpose.msra.mxu0 0.0
    %634 = vmatprep.subr.mxu0 0.0
    %635 = vmatpush2.xpose.msra.mxu0 0.0
    %636 = vmatprep.subr.mxu0 0.0
    %637 = vmatpush2.xpose.msra.mxu0 0.0
    %638 = vmatprep.subr.mxu0 0.0
    %639 = vmatpush2.xpose.msra.mxu0 0.0
    %640 = vmatprep.subr.mxu0 0.0
    %641 = vmatpush2.xpose.msra.mxu0 0.0
    %642 = vmatprep.subr.mxu0 0.0
    %643 = vmatpush2.xpose.msra.mxu0 0.0
    %644 = vmatprep.subr.mxu0 0.0
    %645 = vmatpush2.xpose.msra.mxu0 0.0
    %646 = vmatprep.subr.mxu0 0.0
    %647 = vmatpush2.xpose.msra.mxu0 0.0
    %648 = vmatprep.subr.mxu0 0.0
    %649 = vmatpush2.xpose.msra.mxu0 0.0
    %650 = vmatprep.subr.mxu0 0.0
    %651 = vmatpush2.xpose.msra.mxu0 0.0
    %652 = vmatprep.subr.mxu0 0.0
    %653 = vmatpush2.xpose.msra.mxu0 0.0
    %654 = vmatprep.mubr.f32.mxu0 0.0
    %655 = vmatmul.mubr.f32.gmra.mxu0 %v586
    %v656 = vpop.f32.mrf.mxu0
    %v657 = vadd.f32 %v582, %v656
    %v658 = vpop.f32.mrf.mxu0
    %659 = vdwg.mxu0
    %v660 = vsel %vm321, %v657, -inf
    %661 = vmax.xlane.f32.xlu0 %v660
    %v662 = vpop.xlane.xlu0 %661
    %v663 = vsub.f32 %v657, %v662
    %v664 = vmul.f32 %v663, 1.442695
    %v665 = vpow.pop %v664
    %v666 = vsel %vm321, %v665, 0.0
    %667 = vadd.xlane.f32.xlu0 %v666
    %v668 = vpop.xlane.xlu0 %667
    %v669 = vrcp.pop %v668
    %v670 = vmul.f32 %v665, %v669
    %671 = vrot.lane.b32.xlu0 %v236, 64
    %v672 = vpop.permute.xlu0 %671
    %v675 = vsel %vm321, %v670, 0
    %677 = vmatprep.subr.mxu0 0.0
    %678 = vmatpush1.msra.mxu0 0.0
    %679 = vmatprep.subr.mxu0 0.0
    %680 = vmatpush1.msra.mxu0 0.0
    %681 = vmatprep.subr.mxu0 0.0
    %682 = vmatpush1.msra.mxu0 0.0
    %683 = vmatprep.subr.mxu0 0.0
    %684 = vmatpush1.msra.mxu0 0.0
    %685 = vmatprep.subr.mxu0 0.0
    %686 = vmatpush1.msra.mxu0 0.0
    %687 = vmatprep.subr.mxu0 0.0
    %688 = vmatpush1.msra.mxu0 0.0
    %689 = vmatprep.subr.mxu0 0.0
    %690 = vmatpush1.msra.mxu0 0.0
    %691 = vmatprep.subr.mxu0 0.0
    %692 = vmatpush1.msra.mxu0 0.0
    %693 = vmatprep.subr.mxu0 0.0
    %694 = vmatpush1.msra.mxu0 0.0
    %695 = vmatprep.subr.mxu0 0.0
    %696 = vmatpush1.msra.mxu0 0.0
    %697 = vmatprep.subr.mxu0 0.0
    %698 = vmatpush1.msra.mxu0 0.0
    %699 = vmatprep.subr.mxu0 0.0
    %700 = vmatpush1.msra.mxu0 0.0
    %701 = vmatprep.subr.mxu0 0.0
    %702 = vmatpush1.msra.mxu0 0.0
    %703 = vmatprep.subr.mxu0 0.0
    %704 = vmatpush1.msra.mxu0 0.0
    %705 = vmatprep.subr.mxu0 0.0
    %706 = vmatpush1.msra.mxu0 0.0
    %707 = vmatprep.subr.mxu0 0.0
    %708 = vmatpush1.msra.mxu0 %v672
    %709 = vmatprep.subr.mxu0 0.0
    %710 = vmatpush2.msra.mxu0 0.0
    %711 = vmatprep.subr.mxu0 0.0
    %712 = vmatpush2.msra.mxu0 0.0
    %713 = vmatprep.subr.mxu0 0.0
    %714 = vmatpush2.msra.mxu0 0.0
    %715 = vmatprep.subr.mxu0 0.0
    %716 = vmatpush2.msra.mxu0 0.0
    %717 = vmatprep.subr.mxu0 0.0
    %718 = vmatpush2.msra.mxu0 0.0
    %719 = vmatprep.subr.mxu0 0.0
    %720 = vmatpush2.msra.mxu0 0.0
    %721 = vmatprep.subr.mxu0 0.0
    %722 = vmatpush2.msra.mxu0 0.0
    %723 = vmatprep.subr.mxu0 0.0
    %724 = vmatpush2.msra.mxu0 0.0
    %725 = vmatprep.subr.mxu0 0.0
    %726 = vmatpush2.msra.mxu0 0.0
    %727 = vmatprep.subr.mxu0 0.0
    %728 = vmatpush2.msra.mxu0 0.0
    %729 = vmatprep.subr.mxu0 0.0
    %730 = vmatpush2.msra.mxu0 0.0
    %731 = vmatprep.subr.mxu0 0.0
    %732 = vmatpush2.msra.mxu0 0.0
    %733 = vmatprep.subr.mxu0 0.0
    %734 = vmatpush2.msra.mxu0 0.0
    %735 = vmatprep.subr.mxu0 0.0
    %736 = vmatpush2.msra.mxu0 0.0
    %737 = vmatprep.subr.mxu0 0.0
    %738 = vmatpush2.msra.mxu0 0.0
    %739 = vmatprep.subr.mxu0 0.0
    %740 = vmatpush2.msra.mxu0 0.0
    %741 = vmatprep.mubr.f32.mxu0 0.0
    %742 = vmatmul.mubr.f32.gmra.mxu0 %v675
    %v743 = vpop.f32.mrf.mxu0
    %v744 = vadd.f32 0.0, %v743
    %v745 = vpop.f32.mrf.mxu0
    %746 = vdwg.mxu0
    %747 = vrot.lane.b32.xlu0 %v236, 112
    %v748 = vpop.permute.xlu0 %747
    %749 = vrot.lane.b32.xlu0 %v236, 80
    %v750 = vpop.permute.xlu0 %749
    %v751 = vsel %vm246, %v748, 0
    %v753 = vsel %vm246, %v750, 0
    %755 = vmatprep.subr.mxu0 0.0
    %756 = vmatpush1.xpose.msra.mxu0 0.0
    %757 = vmatprep.subr.mxu0 0.0
    %758 = vmatpush1.xpose.msra.mxu0 0.0
    %759 = vmatprep.subr.mxu0 0.0
    %760 = vmatpush1.xpose.msra.mxu0 0.0
    %761 = vmatprep.subr.mxu0 0.0
    %762 = vmatpush1.xpose.msra.mxu0 0.0
    %763 = vmatprep.subr.mxu0 0.0
    %764 = vmatpush1.xpose.msra.mxu0 0.0
    %765 = vmatprep.subr.mxu0 0.0
    %766 = vmatpush1.xpose.msra.mxu0 0.0
    %767 = vmatprep.subr.mxu0 0.0
    %768 = vmatpush1.xpose.msra.mxu0 0.0
    %769 = vmatprep.subr.mxu0 0.0
    %770 = vmatpush1.xpose.msra.mxu0 0.0
    %771 = vmatprep.subr.mxu0 0.0
    %772 = vmatpush1.xpose.msra.mxu0 0.0
    %773 = vmatprep.subr.mxu0 0.0
    %774 = vmatpush1.xpose.msra.mxu0 0.0
    %775 = vmatprep.subr.mxu0 0.0
    %776 = vmatpush1.xpose.msra.mxu0 0.0
    %777 = vmatprep.subr.mxu0 0.0
    %778 = vmatpush1.xpose.msra.mxu0 0.0
    %779 = vmatprep.subr.mxu0 0.0
    %780 = vmatpush1.xpose.msra.mxu0 0.0
    %781 = vmatprep.subr.mxu0 0.0
    %782 = vmatpush1.xpose.msra.mxu0 0.0
    %783 = vmatprep.subr.mxu0 0.0
    %784 = vmatpush1.xpose.msra.mxu0 0.0
    %785 = vmatprep.subr.mxu0 0.0
    %786 = vmatpush1.xpose.msra.mxu0 %v753
    %787 = vmatprep.subr.mxu0 0.0
    %788 = vmatpush2.xpose.msra.mxu0 0.0
    %789 = vmatprep.subr.mxu0 0.0
    %790 = vmatpush2.xpose.msra.mxu0 0.0
    %791 = vmatprep.subr.mxu0 0.0
    %792 = vmatpush2.xpose.msra.mxu0 0.0
    %793 = vmatprep.subr.mxu0 0.0
    %794 = vmatpush2.xpose.msra.mxu0 0.0
    %795 = vmatprep.subr.mxu0 0.0
    %796 = vmatpush2.xpose.msra.mxu0 0.0
    %797 = vmatprep.subr.mxu0 0.0
    %798 = vmatpush2.xpose.msra.mxu0 0.0
    %799 = vmatprep.subr.mxu0 0.0
    %800 = vmatpush2.xpose.msra.mxu0 0.0
    %801 = vmatprep.subr.mxu0 0.0
    %802 = vmatpush2.xpose.msra.mxu0 0.0
    %803 = vmatprep.subr.mxu0 0.0
    %804 = vmatpush2.xpose.msra.mxu0 0.0
    %805 = vmatprep.subr.mxu0 0.0
    %806 = vmatpush2.xpose.msra.mxu0 0.0
    %807 = vmatprep.subr.mxu0 0.0
    %808 = vmatpush2.xpose.msra.mxu0 0.0
    %809 = vmatprep.subr.mxu0 0.0
    %810 = vmatpush2.xpose.msra.mxu0 0.0
    %811 = vmatprep.subr.mxu0 0.0
    %812 = vmatpush2.xpose.msra.mxu0 0.0
    %813 = vmatprep.subr.mxu0 0.0
    %814 = vmatpush2.xpose.msra.mxu0 0.0
    %815 = vmatprep.subr.mxu0 0.0
    %816 = vmatpush2.xpose.msra.mxu0 0.0
    %817 = vmatprep.subr.mxu0 0.0
    %818 = vmatpush2.xpose.msra.mxu0 0.0
    %819 = vmatprep.mubr.f32.mxu0 0.0
    %820 = vmatmul.mubr.f32.gmra.mxu0 %v751
    %v821 = vpop.f32.mrf.mxu0
    %v822 = vadd.f32 %v582, %v821
    %v823 = vpop.f32.mrf.mxu0
    %824 = vdwg.mxu0
    %v825 = vsel %vm321, %v822, -inf
    %826 = vmax.xlane.f32.xlu0 %v825
    %v827 = vpop.xlane.xlu0 %826
    %v828 = vsub.f32 %v822, %v827
    %v829 = vmul.f32 %v828, 1.442695
    %v830 = vpow.pop %v829
    %v831 = vsel %vm321, %v830, 0.0
    %832 = vadd.xlane.f32.xlu0 %v831
    %v833 = vpop.xlane.xlu0 %832
    %v834 = vrcp.pop %v833
    %v835 = vmul.f32 %v830, %v834
    %836 = vrot.lane.b32.xlu0 %v236, 48
    %v837 = vpop.permute.xlu0 %836
    %v840 = vsel %vm321, %v835, 0
    %842 = vmatprep.subr.mxu0 0.0
    %843 = vmatpush1.msra.mxu0 0.0
    %844 = vmatprep.subr.mxu0 0.0
    %845 = vmatpush1.msra.mxu0 0.0
    %846 = vmatprep.subr.mxu0 0.0
    %847 = vmatpush1.msra.mxu0 0.0
    %848 = vmatprep.subr.mxu0 0.0
    %849 = vmatpush1.msra.mxu0 0.0
    %850 = vmatprep.subr.mxu0 0.0
    %851 = vmatpush1.msra.mxu0 0.0
    %852 = vmatprep.subr.mxu0 0.0
    %853 = vmatpush1.msra.mxu0 0.0
    %854 = vmatprep.subr.mxu0 0.0
    %855 = vmatpush1.msra.mxu0 0.0
    %856 = vmatprep.subr.mxu0 0.0
    %857 = vmatpush1.msra.mxu0 0.0
    %858 = vmatprep.subr.mxu0 0.0
    %859 = vmatpush1.msra.mxu0 0.0
    %860 = vmatprep.subr.mxu0 0.0
    %861 = vmatpush1.msra.mxu0 0.0
    %862 = vmatprep.subr.mxu0 0.0
    %863 = vmatpush1.msra.mxu0 0.0
    %864 = vmatprep.subr.mxu0 0.0
    %865 = vmatpush1.msra.mxu0 0.0
    %866 = vmatprep.subr.mxu0 0.0
    %867 = vmatpush1.msra.mxu0 0.0
    %868 = vmatprep.subr.mxu0 0.0
    %869 = vmatpush1.msra.mxu0 0.0
    %870 = vmatprep.subr.mxu0 0.0
    %871 = vmatpush1.msra.mxu0 0.0
    %872 = vmatprep.subr.mxu0 0.0
    %873 = vmatpush1.msra.mxu0 %v837
    %874 = vmatprep.subr.mxu0 0.0
    %875 = vmatpush2.msra.mxu0 0.0
    %876 = vmatprep.subr.mxu0 0.0
    %877 = vmatpush2.msra.mxu0 0.0
    %878 = vmatprep.subr.mxu0 0.0
    %879 = vmatpush2.msra.mxu0 0.0
    %880 = vmatprep.subr.mxu0 0.0
    %881 = vmatpush2.msra.mxu0 0.0
    %882 = vmatprep.subr.mxu0 0.0
    %883 = vmatpush2.msra.mxu0 0.0
    %884 = vmatprep.subr.mxu0 0.0
    %885 = vmatpush2.msra.mxu0 0.0
    %886 = vmatprep.subr.mxu0 0.0
    %887 = vmatpush2.msra.mxu0 0.0
    %888 = vmatprep.subr.mxu0 0.0
    %889 = vmatpush2.msra.mxu0 0.0
    %890 = vmatprep.subr.mxu0 0.0
    %891 = vmatpush2.msra.mxu0 0.0
    %892 = vmatprep.subr.mxu0 0.0
    %893 = vmatpush2.msra.mxu0 0.0
    %894 = vmatprep.subr.mxu0 0.0
    %895 = vmatpush2.msra.mxu0 0.0
    %896 = vmatprep.subr.mxu0 0.0
    %897 = vmatpush2.msra.mxu0 0.0
    %898 = vmatprep.subr.mxu0 0.0
    %899 = vmatpush2.msra.mxu0 0.0
    %900 = vmatprep.subr.mxu0 0.0
    %901 = vmatpush2.msra.mxu0 0.0
    %902 = vmatprep.subr.mxu0 0.0
    %903 = vmatpush2.msra.mxu0 0.0
    %904 = vmatprep.subr.mxu0 0.0
    %905 = vmatpush2.msra.mxu0 0.0
    %906 = vmatprep.mubr.f32.mxu0 0.0
    %907 = vmatmul.mubr.f32.gmra.mxu0 %v840
    %v908 = vpop.f32.mrf.mxu0
    %v909 = vadd.f32 0.0, %v908
    %v910 = vpop.f32.mrf.mxu0
    %911 = vdwg.mxu0
    %913 = vrot.lane.b32.xlu0 %v909, 16
    %v914 = vpop.permute.xlu0 %913
    %v916 = vsel %vm246, %v744, %v914
    %v918 = vlaneseq
    %v919 = vshrl.u32 %v918, 7
    %v920 = vsub.s32 0, %v919
    %v921 = vrot.slane %v133, %v920
    %v924 = vsel %vm80, %v578, 0
    %v927 = vsel %vm80, %v916, 0
    %929 = vmatprep.subr.mxu0 0.0
    %930 = vmatpush1.msra.mxu0 0.0
    %931 = vmatprep.subr.mxu0 0.0
    %932 = vmatpush1.msra.mxu0 0.0
    %933 = vmatprep.subr.mxu0 0.0
    %934 = vmatpush1.msra.mxu0 0.0
    %935 = vmatprep.subr.mxu0 0.0
    %936 = vmatpush1.msra.mxu0 0.0
    %937 = vmatprep.subr.mxu0 0.0
    %938 = vmatpush1.msra.mxu0 0.0
    %939 = vmatprep.subr.mxu0 0.0
    %940 = vmatpush1.msra.mxu0 0.0
    %941 = vmatprep.subr.mxu0 0.0
    %942 = vmatpush1.msra.mxu0 0.0
    %943 = vmatprep.subr.mxu0 0.0
    %944 = vmatpush1.msra.mxu0 0.0
    %945 = vmatprep.subr.mxu0 0.0
    %946 = vmatpush1.msra.mxu0 0.0
    %947 = vmatprep.subr.mxu0 0.0
    %948 = vmatpush1.msra.mxu0 0.0
    %949 = vmatprep.subr.mxu0 0.0
    %950 = vmatpush1.msra.mxu0 0.0
    %951 = vmatprep.subr.mxu0 0.0
    %952 = vmatpush1.msra.mxu0 0.0
    %953 = vmatprep.subr.mxu0 0.0
    %954 = vmatpush1.msra.mxu0 %v132
    %955 = vmatprep.subr.mxu0 0.0
    %956 = vmatpush1.msra.mxu0 %v131
    %957 = vmatprep.subr.mxu0 0.0
    %958 = vmatpush1.msra.mxu0 %v130
    %959 = vmatprep.subr.mxu0 0.0
    %960 = vmatpush1.msra.mxu0 %v129
    %961 = vmatprep.subr.mxu0 0.0
    %962 = vmatpush2.msra.mxu0 0.0
    %963 = vmatprep.subr.mxu0 0.0
    %964 = vmatpush2.msra.mxu0 0.0
    %965 = vmatprep.subr.mxu0 0.0
    %966 = vmatpush2.msra.mxu0 0.0
    %967 = vmatprep.subr.mxu0 0.0
    %968 = vmatpush2.msra.mxu0 0.0
    %969 = vmatprep.subr.mxu0 0.0
    %970 = vmatpush2.msra.mxu0 0.0
    %971 = vmatprep.subr.mxu0 0.0
    %972 = vmatpush2.msra.mxu0 0.0
    %973 = vmatprep.subr.mxu0 0.0
    %974 = vmatpush2.msra.mxu0 0.0
    %975 = vmatprep.subr.mxu0 0.0
    %976 = vmatpush2.msra.mxu0 0.0
    %977 = vmatprep.subr.mxu0 0.0
    %978 = vmatpush2.msra.mxu0 0.0
    %979 = vmatprep.subr.mxu0 0.0
    %980 = vmatpush2.msra.mxu0 0.0
    %981 = vmatprep.subr.mxu0 0.0
    %982 = vmatpush2.msra.mxu0 0.0
    %983 = vmatprep.subr.mxu0 0.0
    %984 = vmatpush2.msra.mxu0 0.0
    %985 = vmatprep.subr.mxu0 0.0
    %986 = vmatpush2.msra.mxu0 0.0
    %987 = vmatprep.subr.mxu0 0.0
    %988 = vmatpush2.msra.mxu0 0.0
    %989 = vmatprep.subr.mxu0 0.0
    %990 = vmatpush2.msra.mxu0 0.0
    %991 = vmatprep.subr.mxu0 0.0
    %992 = vmatpush2.msra.mxu0 0.0
    %993 = vmatprep.mubr.f32.mxu0 0.0
    %994 = vmatmul.mubr.f32.gmra.mxu0 %v924
    %v995 = vpop.f32.mrf.mxu0
    %v996 = vadd.f32 %v921, %v995
    %v997 = vpop.f32.mrf.mxu0
    %998 = vmatprep.mubr.f32.mxu0 0.0
    %999 = vmatmul.mubr.f32.gmra.mxu0 %v927
    %v1000 = vpop.f32.mrf.mxu0
    %v1001 = vadd.f32 %v921, %v1000
    %v1002 = vpop.f32.mrf.mxu0
    %1003 = vdwg.mxu0
    %v1004 = vadd.f32 %v996, %v122
    %v1005 = vadd.f32 %v1001, %v123
    %v1006 = vsel %vm80, %v1004, 0.0
    %1007 = vadd.xlane.f32.xlu0 %v1006
    %v1008 = vpop.xlane.xlu0 %1007
    %v1009 = vsel %vm80, %v1005, 0.0
    %1010 = vadd.xlane.f32.xlu0 %v1009
    %v1011 = vpop.xlane.xlu0 %1010
    %v1012 = vmul.f32 %v1008, %v87
    %v1013 = vmul.f32 %v1011, %v87
    %v1014 = vsub.f32 %v1004, %v1012
    %v1015 = vsub.f32 %v1005, %v1013
    %v1016 = vmul.f32 %v1014, %v1014
    %v1017 = vmul.f32 %v1015, %v1015
    %v1018 = vsel %vm80, %v1016, 0.0
    %1019 = vadd.xlane.f32.xlu0 %v1018
    %v1020 = vpop.xlane.xlu0 %1019
    %v1021 = vsel %vm80, %v1017, 0.0
    %1022 = vadd.xlane.f32.xlu0 %v1021
    %v1023 = vpop.xlane.xlu0 %1022
    %v1024 = vmul.f32 %v1020, %v87
    %v1025 = vmul.f32 %v1023, %v87
    %v1026 = vadd.f32 %v1024, 1e-12
    %v1027 = vadd.f32 %v1025, 1e-12
    %v1028 = vrsqrt.pop %v1026
    %v1029 = vrsqrt.pop %v1027
    %v1030 = vmul.f32 %v1014, %v1028
    %v1031 = vmul.f32 %v1015, %v1029
    %v1033 = vlaneseq
    %v1034 = vshrl.u32 %v1033, 7
    %v1035 = vsub.s32 0, %v1034
    %v1036 = vrot.slane %v134, %v1035
    %v1038 = vmul.f32 %v1030, %v1036
    %v1039 = vmul.f32 %v1031, %v1036
    %v1041 = vlaneseq
    %v1042 = vshrl.u32 %v1041, 7
    %v1043 = vsub.s32 0, %v1042
    %v1044 = vrot.slane %v135, %v1043
    %v1046 = vadd.f32 %v1038, %v1044
    %v1047 = vadd.f32 %v1039, %v1044
    %v1049 = vlaneseq
    %v1050 = vshrl.u32 %v1049, 7
    %v1051 = vsub.s32 0, %v1050
    %v1052 = vrot.slane %v140, %v1051
    %v1055 = vsel %vm80, %v1046, 0
    %v1058 = vsel %vm80, %v1047, 0
    %1060 = vmatprep.subr.mxu0 0.0
    %1061 = vmatpush1.msra.mxu0 0.0
    %1062 = vmatprep.subr.mxu0 0.0
    %1063 = vmatpush1.msra.mxu0 0.0
    %1064 = vmatprep.subr.mxu0 0.0
    %1065 = vmatpush1.msra.mxu0 0.0
    %1066 = vmatprep.subr.mxu0 0.0
    %1067 = vmatpush1.msra.mxu0 0.0
    %1068 = vmatprep.subr.mxu0 0.0
    %1069 = vmatpush1.msra.mxu0 0.0
    %1070 = vmatprep.subr.mxu0 0.0
    %1071 = vmatpush1.msra.mxu0 0.0
    %1072 = vmatprep.subr.mxu0 0.0
    %1073 = vmatpush1.msra.mxu0 0.0
    %1074 = vmatprep.subr.mxu0 0.0
    %1075 = vmatpush1.msra.mxu0 0.0
    %1076 = vmatprep.subr.mxu0 0.0
    %1077 = vmatpush1.msra.mxu0 0.0
    %1078 = vmatprep.subr.mxu0 0.0
    %1079 = vmatpush1.msra.mxu0 0.0
    %1080 = vmatprep.subr.mxu0 0.0
    %1081 = vmatpush1.msra.mxu0 0.0
    %1082 = vmatprep.subr.mxu0 0.0
    %1083 = vmatpush1.msra.mxu0 0.0
    %1084 = vmatprep.subr.mxu0 0.0
    %1085 = vmatpush1.msra.mxu0 %v139
    %1086 = vmatprep.subr.mxu0 0.0
    %1087 = vmatpush1.msra.mxu0 %v138
    %1088 = vmatprep.subr.mxu0 0.0
    %1089 = vmatpush1.msra.mxu0 %v137
    %1090 = vmatprep.subr.mxu0 0.0
    %1091 = vmatpush1.msra.mxu0 %v136
    %1092 = vmatprep.subr.mxu0 0.0
    %1093 = vmatpush2.msra.mxu0 0.0
    %1094 = vmatprep.subr.mxu0 0.0
    %1095 = vmatpush2.msra.mxu0 0.0
    %1096 = vmatprep.subr.mxu0 0.0
    %1097 = vmatpush2.msra.mxu0 0.0
    %1098 = vmatprep.subr.mxu0 0.0
    %1099 = vmatpush2.msra.mxu0 0.0
    %1100 = vmatprep.subr.mxu0 0.0
    %1101 = vmatpush2.msra.mxu0 0.0
    %1102 = vmatprep.subr.mxu0 0.0
    %1103 = vmatpush2.msra.mxu0 0.0
    %1104 = vmatprep.subr.mxu0 0.0
    %1105 = vmatpush2.msra.mxu0 0.0
    %1106 = vmatprep.subr.mxu0 0.0
    %1107 = vmatpush2.msra.mxu0 0.0
    %1108 = vmatprep.subr.mxu0 0.0
    %1109 = vmatpush2.msra.mxu0 0.0
    %1110 = vmatprep.subr.mxu0 0.0
    %1111 = vmatpush2.msra.mxu0 0.0
    %1112 = vmatprep.subr.mxu0 0.0
    %1113 = vmatpush2.msra.mxu0 0.0
    %1114 = vmatprep.subr.mxu0 0.0
    %1115 = vmatpush2.msra.mxu0 0.0
    %1116 = vmatprep.subr.mxu0 0.0
    %1117 = vmatpush2.msra.mxu0 0.0
    %1118 = vmatprep.subr.mxu0 0.0
    %1119 = vmatpush2.msra.mxu0 0.0
    %1120 = vmatprep.subr.mxu0 0.0
    %1121 = vmatpush2.msra.mxu0 0.0
    %1122 = vmatprep.subr.mxu0 0.0
    %1123 = vmatpush2.msra.mxu0 0.0
    %1124 = vmatprep.mubr.f32.mxu0 0.0
    %1125 = vmatmul.mubr.f32.gmra.mxu0 %v1055
    %v1126 = vpop.f32.mrf.mxu0
    %v1127 = vadd.f32 %v1052, %v1126
    %v1128 = vpop.f32.mrf.mxu0
    %1129 = vmatprep.mubr.f32.mxu0 0.0
    %1130 = vmatmul.mubr.f32.gmra.mxu0 %v1058
    %v1131 = vpop.f32.mrf.mxu0
    %v1132 = vadd.f32 %v1052, %v1131
    %v1133 = vpop.f32.mrf.mxu0
    %1134 = vdwg.mxu0
    %v1135 = vmul.f32 %v1127, 0.5
    %v1136 = vmul.f32 %v1132, 0.5
    %v1137 = vmul.f32 %v1127, 0.044715
    %v1138 = vmul.f32 %v1132, 0.044715
    %v1139 = vmul.f32 %v1137, %v1127
    %v1140 = vmul.f32 %v1138, %v1132
    %v1141 = vmul.f32 %v1139, %v1127
    %v1142 = vmul.f32 %v1140, %v1132
    %v1143 = vadd.f32 %v1127, %v1141
    %v1144 = vadd.f32 %v1132, %v1142
    %v1145 = vmul.f32 %v1143, 0.7978846
    %v1146 = vmul.f32 %v1144, 0.7978846
    %v1147 = vtanh.pop %v1145
    %v1148 = vtanh.pop %v1146
    %v1149 = vadd.f32 %v1147, 1.0
    %v1150 = vadd.f32 %v1148, 1.0
    %v1151 = vmul.f32 %v1135, %v1149
    %v1152 = vmul.f32 %v1136, %v1150
    %v1154 = vlaneseq
    %v1155 = vshrl.u32 %v1154, 7
    %v1156 = vsub.s32 0, %v1155
    %v1157 = vrot.slane %v149, %v1156
    %vm1159 = vcmask 523264
    %v1161 = vsel %vm1159, %v1151, 0
    %v1164 = vsel %vm1159, %v1152, 0
    %1166 = vmatprep.subr.mxu0 0.0
    %1167 = vmatpush1.msra.mxu0 0.0
    %1168 = vmatprep.subr.mxu0 0.0
    %1169 = vmatpush1.msra.mxu0 0.0
    %1170 = vmatprep.subr.mxu0 0.0
    %1171 = vmatpush1.msra.mxu0 0.0
    %1172 = vmatprep.subr.mxu0 0.0
    %1173 = vmatpush1.msra.mxu0 0.0
    %1174 = vmatprep.subr.mxu0 0.0
    %1175 = vmatpush1.msra.mxu0 0.0
    %1176 = vmatprep.subr.mxu0 0.0
    %1177 = vmatpush1.msra.mxu0 0.0
    %1178 = vmatprep.subr.mxu0 0.0
    %1179 = vmatpush1.msra.mxu0 0.0
    %1180 = vmatprep.subr.mxu0 0.0
    %1181 = vmatpush1.msra.mxu0 0.0
    %1182 = vmatprep.subr.mxu0 0.0
    %1183 = vmatpush1.msra.mxu0 %v148
    %1184 = vmatprep.subr.mxu0 0.0
    %1185 = vmatpush1.msra.mxu0 %v147
    %1186 = vmatprep.subr.mxu0 0.0
    %1187 = vmatpush1.msra.mxu0 %v146
    %1188 = vmatprep.subr.mxu0 0.0
    %1189 = vmatpush1.msra.mxu0 %v145
    %1190 = vmatprep.subr.mxu0 0.0
    %1191 = vmatpush1.msra.mxu0 %v144
    %1192 = vmatprep.subr.mxu0 0.0
    %1193 = vmatpush1.msra.mxu0 %v143
    %1194 = vmatprep.subr.mxu0 0.0
    %1195 = vmatpush1.msra.mxu0 %v142
    %1196 = vmatprep.subr.mxu0 0.0
    %1197 = vmatpush1.msra.mxu0 %v141
    %1198 = vmatprep.subr.mxu0 0.0
    %1199 = vmatpush2.msra.mxu0 0.0
    %1200 = vmatprep.subr.mxu0 0.0
    %1201 = vmatpush2.msra.mxu0 0.0
    %1202 = vmatprep.subr.mxu0 0.0
    %1203 = vmatpush2.msra.mxu0 0.0
    %1204 = vmatprep.subr.mxu0 0.0
    %1205 = vmatpush2.msra.mxu0 0.0
    %1206 = vmatprep.subr.mxu0 0.0
    %1207 = vmatpush2.msra.mxu0 0.0
    %1208 = vmatprep.subr.mxu0 0.0
    %1209 = vmatpush2.msra.mxu0 0.0
    %1210 = vmatprep.subr.mxu0 0.0
    %1211 = vmatpush2.msra.mxu0 0.0
    %1212 = vmatprep.subr.mxu0 0.0
    %1213 = vmatpush2.msra.mxu0 0.0
    %1214 = vmatprep.subr.mxu0 0.0
    %1215 = vmatpush2.msra.mxu0 0.0
    %1216 = vmatprep.subr.mxu0 0.0
    %1217 = vmatpush2.msra.mxu0 0.0
    %1218 = vmatprep.subr.mxu0 0.0
    %1219 = vmatpush2.msra.mxu0 0.0
    %1220 = vmatprep.subr.mxu0 0.0
    %1221 = vmatpush2.msra.mxu0 0.0
    %1222 = vmatprep.subr.mxu0 0.0
    %1223 = vmatpush2.msra.mxu0 0.0
    %1224 = vmatprep.subr.mxu0 0.0
    %1225 = vmatpush2.msra.mxu0 0.0
    %1226 = vmatprep.subr.mxu0 0.0
    %1227 = vmatpush2.msra.mxu0 0.0
    %1228 = vmatprep.subr.mxu0 0.0
    %1229 = vmatpush2.msra.mxu0 0.0
    %1230 = vmatprep.mubr.f32.mxu0 0.0
    %1231 = vmatmul.mubr.f32.gmra.mxu0 %v1161
    %v1232 = vpop.f32.mrf.mxu0
    %v1233 = vadd.f32 %v1157, %v1232
    %v1234 = vpop.f32.mrf.mxu0
    %1235 = vmatprep.mubr.f32.mxu0 0.0
    %1236 = vmatmul.mubr.f32.gmra.mxu0 %v1164
    %v1237 = vpop.f32.mrf.mxu0
    %v1238 = vadd.f32 %v1157, %v1237
    %v1239 = vpop.f32.mrf.mxu0
    %1240 = vdwg.mxu0
    %v1241 = vadd.f32 %v1233, %v1046
    %v1242 = vadd.f32 %v1238, %v1047
    %v1243 = vsel %vm80, %v1241, 0.0
    %1244 = vadd.xlane.f32.xlu0 %v1243
    %v1245 = vpop.xlane.xlu0 %1244
    %v1246 = vsel %vm80, %v1242, 0.0
    %1247 = vadd.xlane.f32.xlu0 %v1246
    %v1248 = vpop.xlane.xlu0 %1247
    %v1249 = vmul.f32 %v1245, %v87
    %v1250 = vmul.f32 %v1248, %v87
    %v1251 = vsub.f32 %v1241, %v1249
    %v1252 = vsub.f32 %v1242, %v1250
    %v1253 = vmul.f32 %v1251, %v1251
    %v1254 = vmul.f32 %v1252, %v1252
    %v1255 = vsel %vm80, %v1253, 0.0
    %1256 = vadd.xlane.f32.xlu0 %v1255
    %v1257 = vpop.xlane.xlu0 %1256
    %v1258 = vsel %vm80, %v1254, 0.0
    %1259 = vadd.xlane.f32.xlu0 %v1258
    %v1260 = vpop.xlane.xlu0 %1259
    %v1261 = vmul.f32 %v1257, %v87
    %v1262 = vmul.f32 %v1260, %v87
    %v1263 = vadd.f32 %v1261, 1e-12
    %v1264 = vadd.f32 %v1262, 1e-12
    %v1265 = vrsqrt.pop %v1263
    %v1266 = vrsqrt.pop %v1264
    %v1267 = vmul.f32 %v1251, %v1265
    %v1268 = vmul.f32 %v1252, %v1266
    %v1270 = vlaneseq
    %v1271 = vshrl.u32 %v1270, 7
    %v1272 = vsub.s32 0, %v1271
    %v1273 = vrot.slane %v150, %v1272
    %v1275 = vmul.f32 %v1267, %v1273
    %v1276 = vmul.f32 %v1268, %v1273
    %v1278 = vlaneseq
    %v1279 = vshrl.u32 %v1278, 7
    %v1280 = vsub.s32 0, %v1279
    %v1281 = vrot.slane %v151, %v1280
    %v1283 = vadd.f32 %v1275, %v1281
    %v1284 = vadd.f32 %v1276, %v1281
    %s1285 = scalar_lea.vmem %s4, 32
    %v1286 = vld [vmem:[%s1285] sm:$0xff]
    %v1287 = vld [vmem:[%s1285 + $0x8] sm:$0xff]
    %v1288 = vld [vmem:[%s1285 + $0x10] sm:$0xff]
    %v1289 = vld [vmem:[%s1285 + $0x18] sm:$0xff]
    %s1290 = scalar_lea.vmem %s5, 1
    %v1291 = vld [vmem:[%s1290] sm:$0x1]
    %s1292 = scalar_lea.vmem %s6, 32
    %v1293 = vld [vmem:[%s1292] sm:$0xff]
    %v1294 = vld [vmem:[%s1292 + $0x8] sm:$0xff]
    %v1295 = vld [vmem:[%s1292 + $0x10] sm:$0xff]
    %v1296 = vld [vmem:[%s1292 + $0x18] sm:$0xff]
    %s1297 = scalar_lea.vmem %s7, 1
    %v1298 = vld [vmem:[%s1297] sm:$0x1]
    %s1299 = scalar_lea.vmem %s8, 1
    %v1300 = vld [vmem:[%s1299] sm:$0x1]
    %s1301 = scalar_lea.vmem %s9, 1
    %v1302 = vld [vmem:[%s1301] sm:$0x1]
    %s1303 = scalar_lea.vmem %s10, 32
    %v1304 = vld [vmem:[%s1303] sm:$0xff]
    %v1305 = vld [vmem:[%s1303 + $0x8] sm:$0xff]
    %v1306 = vld [vmem:[%s1303 + $0x10] sm:$0xff]
    %v1307 = vld [vmem:[%s1303 + $0x18] sm:$0xff]
    %s1308 = scalar_lea.vmem %s11, 1
    %v1309 = vld [vmem:[%s1308] sm:$0x1]
    %s1310 = scalar_lea.vmem %s12, 64
    %v1311 = vld [vmem:[%s1310] sm:$0xff]
    %v1312 = vld [vmem:[%s1310 + $0x8] sm:$0xff]
    %v1313 = vld [vmem:[%s1310 + $0x10] sm:$0xff]
    %v1314 = vld [vmem:[%s1310 + $0x18] sm:$0xff]
    %v1315 = vld [vmem:[%s1310 + $0x20] sm:$0xff]
    %v1316 = vld [vmem:[%s1310 + $0x28] sm:$0xff]
    %v1317 = vld [vmem:[%s1310 + $0x30] sm:$0xff]
    %v1318 = vld [vmem:[%s1310 + $0x38] sm:$0xff]
    %s1319 = scalar_lea.vmem %s13, 1
    %v1320 = vld [vmem:[%s1319] sm:$0x1]
    %s1321 = scalar_lea.vmem %s14, 1
    %v1322 = vld [vmem:[%s1321] sm:$0x1]
    %s1323 = scalar_lea.vmem %s15, 1
    %v1324 = vld [vmem:[%s1323] sm:$0x1]
    %v1326 = vlaneseq
    %v1327 = vshrl.u32 %v1326, 7
    %v1328 = vsub.s32 0, %v1327
    %v1329 = vrot.slane %v1291, %v1328
    %v1332 = vsel %vm80, %v1283, 0
    %v1335 = vsel %vm80, %v1284, 0
    %1337 = vmatprep.subr.mxu0 0.0
    %1338 = vmatpush1.msra.mxu0 0.0
    %1339 = vmatprep.subr.mxu0 0.0
    %1340 = vmatpush1.msra.mxu0 0.0
    %1341 = vmatprep.subr.mxu0 0.0
    %1342 = vmatpush1.msra.mxu0 0.0
    %1343 = vmatprep.subr.mxu0 0.0
    %1344 = vmatpush1.msra.mxu0 0.0
    %1345 = vmatprep.subr.mxu0 0.0
    %1346 = vmatpush1.msra.mxu0 0.0
    %1347 = vmatprep.subr.mxu0 0.0
    %1348 = vmatpush1.msra.mxu0 0.0
    %1349 = vmatprep.subr.mxu0 0.0
    %1350 = vmatpush1.msra.mxu0 0.0
    %1351 = vmatprep.subr.mxu0 0.0
    %1352 = vmatpush1.msra.mxu0 0.0
    %1353 = vmatprep.subr.mxu0 0.0
    %1354 = vmatpush1.msra.mxu0 0.0
    %1355 = vmatprep.subr.mxu0 0.0
    %1356 = vmatpush1.msra.mxu0 0.0
    %1357 = vmatprep.subr.mxu0 0.0
    %1358 = vmatpush1.msra.mxu0 0.0
    %1359 = vmatprep.subr.mxu0 0.0
    %1360 = vmatpush1.msra.mxu0 0.0
    %1361 = vmatprep.subr.mxu0 0.0
    %1362 = vmatpush1.msra.mxu0 %v1289
    %1363 = vmatprep.subr.mxu0 0.0
    %1364 = vmatpush1.msra.mxu0 %v1288
    %1365 = vmatprep.subr.mxu0 0.0
    %1366 = vmatpush1.msra.mxu0 %v1287
    %1367 = vmatprep.subr.mxu0 0.0
    %1368 = vmatpush1.msra.mxu0 %v1286
    %1369 = vmatprep.subr.mxu0 0.0
    %1370 = vmatpush2.msra.mxu0 0.0
    %1371 = vmatprep.subr.mxu0 0.0
    %1372 = vmatpush2.msra.mxu0 0.0
    %1373 = vmatprep.subr.mxu0 0.0
    %1374 = vmatpush2.msra.mxu0 0.0
    %1375 = vmatprep.subr.mxu0 0.0
    %1376 = vmatpush2.msra.mxu0 0.0
    %1377 = vmatprep.subr.mxu0 0.0
    %1378 = vmatpush2.msra.mxu0 0.0
    %1379 = vmatprep.subr.mxu0 0.0
    %1380 = vmatpush2.msra.mxu0 0.0
    %1381 = vmatprep.subr.mxu0 0.0
    %1382 = vmatpush2.msra.mxu0 0.0
    %1383 = vmatprep.subr.mxu0 0.0
    %1384 = vmatpush2.msra.mxu0 0.0
    %1385 = vmatprep.subr.mxu0 0.0
    %1386 = vmatpush2.msra.mxu0 0.0
    %1387 = vmatprep.subr.mxu0 0.0
    %1388 = vmatpush2.msra.mxu0 0.0
    %1389 = vmatprep.subr.mxu0 0.0
    %1390 = vmatpush2.msra.mxu0 0.0
    %1391 = vmatprep.subr.mxu0 0.0
    %1392 = vmatpush2.msra.mxu0 0.0
    %1393 = vmatprep.subr.mxu0 0.0
    %1394 = vmatpush2.msra.mxu0 0.0
    %1395 = vmatprep.subr.mxu0 0.0
    %1396 = vmatpush2.msra.mxu0 0.0
    %1397 = vmatprep.subr.mxu0 0.0
    %1398 = vmatpush2.msra.mxu0 0.0
    %1399 = vmatprep.subr.mxu0 0.0
    %1400 = vmatpush2.msra.mxu0 0.0
    %1401 = vmatprep.mubr.f32.mxu0 0.0
    %1402 = vmatmul.mubr.f32.gmra.mxu0 %v1332
    %v1403 = vpop.f32.mrf.mxu0
    %v1404 = vadd.f32 %v1329, %v1403
    %v1405 = vpop.f32.mrf.mxu0
    %1406 = vmatprep.mubr.f32.mxu0 0.0
    %1407 = vmatmul.mubr.f32.gmra.mxu0 %v1335
    %v1408 = vpop.f32.mrf.mxu0
    %v1409 = vadd.f32 %v1329, %v1408
    %v1410 = vpop.f32.mrf.mxu0
    %1411 = vdwg.mxu0
    %1413 = vrot.lane.b32.xlu0 %v1404, 96
    %v1414 = vpop.permute.xlu0 %1413
    %v1415 = vsel %vm246, %v1404, 0
    %v1417 = vsel %vm246, %v1414, 0
    %1419 = vmatprep.subr.mxu0 0.0
    %1420 = vmatpush1.xpose.msra.mxu0 0.0
    %1421 = vmatprep.subr.mxu0 0.0
    %1422 = vmatpush1.xpose.msra.mxu0 0.0
    %1423 = vmatprep.subr.mxu0 0.0
    %1424 = vmatpush1.xpose.msra.mxu0 0.0
    %1425 = vmatprep.subr.mxu0 0.0
    %1426 = vmatpush1.xpose.msra.mxu0 0.0
    %1427 = vmatprep.subr.mxu0 0.0
    %1428 = vmatpush1.xpose.msra.mxu0 0.0
    %1429 = vmatprep.subr.mxu0 0.0
    %1430 = vmatpush1.xpose.msra.mxu0 0.0
    %1431 = vmatprep.subr.mxu0 0.0
    %1432 = vmatpush1.xpose.msra.mxu0 0.0
    %1433 = vmatprep.subr.mxu0 0.0
    %1434 = vmatpush1.xpose.msra.mxu0 0.0
    %1435 = vmatprep.subr.mxu0 0.0
    %1436 = vmatpush1.xpose.msra.mxu0 0.0
    %1437 = vmatprep.subr.mxu0 0.0
    %1438 = vmatpush1.xpose.msra.mxu0 0.0
    %1439 = vmatprep.subr.mxu0 0.0
    %1440 = vmatpush1.xpose.msra.mxu0 0.0
    %1441 = vmatprep.subr.mxu0 0.0
    %1442 = vmatpush1.xpose.msra.mxu0 0.0
    %1443 = vmatprep.subr.mxu0 0.0
    %1444 = vmatpush1.xpose.msra.mxu0 0.0
    %1445 = vmatprep.subr.mxu0 0.0
    %1446 = vmatpush1.xpose.msra.mxu0 0.0
    %1447 = vmatprep.subr.mxu0 0.0
    %1448 = vmatpush1.xpose.msra.mxu0 0.0
    %1449 = vmatprep.subr.mxu0 0.0
    %1450 = vmatpush1.xpose.msra.mxu0 %v1417
    %1451 = vmatprep.subr.mxu0 0.0
    %1452 = vmatpush2.xpose.msra.mxu0 0.0
    %1453 = vmatprep.subr.mxu0 0.0
    %1454 = vmatpush2.xpose.msra.mxu0 0.0
    %1455 = vmatprep.subr.mxu0 0.0
    %1456 = vmatpush2.xpose.msra.mxu0 0.0
    %1457 = vmatprep.subr.mxu0 0.0
    %1458 = vmatpush2.xpose.msra.mxu0 0.0
    %1459 = vmatprep.subr.mxu0 0.0
    %1460 = vmatpush2.xpose.msra.mxu0 0.0
    %1461 = vmatprep.subr.mxu0 0.0
    %1462 = vmatpush2.xpose.msra.mxu0 0.0
    %1463 = vmatprep.subr.mxu0 0.0
    %1464 = vmatpush2.xpose.msra.mxu0 0.0
    %1465 = vmatprep.subr.mxu0 0.0
    %1466 = vmatpush2.xpose.msra.mxu0 0.0
    %1467 = vmatprep.subr.mxu0 0.0
    %1468 = vmatpush2.xpose.msra.mxu0 0.0
    %1469 = vmatprep.subr.mxu0 0.0
    %1470 = vmatpush2.xpose.msra.mxu0 0.0
    %1471 = vmatprep.subr.mxu0 0.0
    %1472 = vmatpush2.xpose.msra.mxu0 0.0
    %1473 = vmatprep.subr.mxu0 0.0
    %1474 = vmatpush2.xpose.msra.mxu0 0.0
    %1475 = vmatprep.subr.mxu0 0.0
    %1476 = vmatpush2.xpose.msra.mxu0 0.0
    %1477 = vmatprep.subr.mxu0 0.0
    %1478 = vmatpush2.xpose.msra.mxu0 0.0
    %1479 = vmatprep.subr.mxu0 0.0
    %1480 = vmatpush2.xpose.msra.mxu0 0.0
    %1481 = vmatprep.subr.mxu0 0.0
    %1482 = vmatpush2.xpose.msra.mxu0 0.0
    %1483 = vmatprep.mubr.f32.mxu0 0.0
    %1484 = vmatmul.mubr.f32.gmra.mxu0 %v1415
    %v1485 = vpop.f32.mrf.mxu0
    %v1486 = vadd.f32 %v242, %v1485
    %v1487 = vpop.f32.mrf.mxu0
    %1488 = vdwg.mxu0
    %v1489 = vsel %vm321, %v1486, -inf
    %1490 = vmax.xlane.f32.xlu0 %v1489
    %v1491 = vpop.xlane.xlu0 %1490
    %v1492 = vsub.f32 %v1486, %v1491
    %v1493 = vmul.f32 %v1492, 1.442695
    %v1494 = vpow.pop %v1493
    %v1495 = vsel %vm321, %v1494, 0.0
    %1496 = vadd.xlane.f32.xlu0 %v1495
    %v1497 = vpop.xlane.xlu0 %1496
    %v1498 = vrcp.pop %v1497
    %v1499 = vmul.f32 %v1494, %v1498
    %1500 = vrot.lane.b32.xlu0 %v1404, 64
    %v1501 = vpop.permute.xlu0 %1500
    %v1504 = vsel %vm321, %v1499, 0
    %1506 = vmatprep.subr.mxu0 0.0
    %1507 = vmatpush1.msra.mxu0 0.0
    %1508 = vmatprep.subr.mxu0 0.0
    %1509 = vmatpush1.msra.mxu0 0.0
    %1510 = vmatprep.subr.mxu0 0.0
    %1511 = vmatpush1.msra.mxu0 0.0
    %1512 = vmatprep.subr.mxu0 0.0
    %1513 = vmatpush1.msra.mxu0 0.0
    %1514 = vmatprep.subr.mxu0 0.0
    %1515 = vmatpush1.msra.mxu0 0.0
    %1516 = vmatprep.subr.mxu0 0.0
    %1517 = vmatpush1.msra.mxu0 0.0
    %1518 = vmatprep.subr.mxu0 0.0
    %1519 = vmatpush1.msra.mxu0 0.0
    %1520 = vmatprep.subr.mxu0 0.0
    %1521 = vmatpush1.msra.mxu0 0.0
    %1522 = vmatprep.subr.mxu0 0.0
    %1523 = vmatpush1.msra.mxu0 0.0
    %1524 = vmatprep.subr.mxu0 0.0
    %1525 = vmatpush1.msra.mxu0 0.0
    %1526 = vmatprep.subr.mxu0 0.0
    %1527 = vmatpush1.msra.mxu0 0.0
    %1528 = vmatprep.subr.mxu0 0.0
    %1529 = vmatpush1.msra.mxu0 0.0
    %1530 = vmatprep.subr.mxu0 0.0
    %1531 = vmatpush1.msra.mxu0 0.0
    %1532 = vmatprep.subr.mxu0 0.0
    %1533 = vmatpush1.msra.mxu0 0.0
    %1534 = vmatprep.subr.mxu0 0.0
    %1535 = vmatpush1.msra.mxu0 0.0
    %1536 = vmatprep.subr.mxu0 0.0
    %1537 = vmatpush1.msra.mxu0 %v1501
    %1538 = vmatprep.subr.mxu0 0.0
    %1539 = vmatpush2.msra.mxu0 0.0
    %1540 = vmatprep.subr.mxu0 0.0
    %1541 = vmatpush2.msra.mxu0 0.0
    %1542 = vmatprep.subr.mxu0 0.0
    %1543 = vmatpush2.msra.mxu0 0.0
    %1544 = vmatprep.subr.mxu0 0.0
    %1545 = vmatpush2.msra.mxu0 0.0
    %1546 = vmatprep.subr.mxu0 0.0
    %1547 = vmatpush2.msra.mxu0 0.0
    %1548 = vmatprep.subr.mxu0 0.0
    %1549 = vmatpush2.msra.mxu0 0.0
    %1550 = vmatprep.subr.mxu0 0.0
    %1551 = vmatpush2.msra.mxu0 0.0
    %1552 = vmatprep.subr.mxu0 0.0
    %1553 = vmatpush2.msra.mxu0 0.0
    %1554 = vmatprep.subr.mxu0 0.0
    %1555 = vmatpush2.msra.mxu0 0.0
    %1556 = vmatprep.subr.mxu0 0.0
    %1557 = vmatpush2.msra.mxu0 0.0
    %1558 = vmatprep.subr.mxu0 0.0
    %1559 = vmatpush2.msra.mxu0 0.0
    %1560 = vmatprep.subr.mxu0 0.0
    %1561 = vmatpush2.msra.mxu0 0.0
    %1562 = vmatprep.subr.mxu0 0.0
    %1563 = vmatpush2.msra.mxu0 0.0
    %1564 = vmatprep.subr.mxu0 0.0
    %1565 = vmatpush2.msra.mxu0 0.0
    %1566 = vmatprep.subr.mxu0 0.0
    %1567 = vmatpush2.msra.mxu0 0.0
    %1568 = vmatprep.subr.mxu0 0.0
    %1569 = vmatpush2.msra.mxu0 0.0
    %1570 = vmatprep.mubr.f32.mxu0 0.0
    %1571 = vmatmul.mubr.f32.gmra.mxu0 %v1504
    %v1572 = vpop.f32.mrf.mxu0
    %v1573 = vadd.f32 0.0, %v1572
    %v1574 = vpop.f32.mrf.mxu0
    %1575 = vdwg.mxu0
    %1576 = vrot.lane.b32.xlu0 %v1404, 112
    %v1577 = vpop.permute.xlu0 %1576
    %1578 = vrot.lane.b32.xlu0 %v1404, 80
    %v1579 = vpop.permute.xlu0 %1578
    %v1580 = vsel %vm246, %v1577, 0
    %v1582 = vsel %vm246, %v1579, 0
    %1584 = vmatprep.subr.mxu0 0.0
    %1585 = vmatpush1.xpose.msra.mxu0 0.0
    %1586 = vmatprep.subr.mxu0 0.0
    %1587 = vmatpush1.xpose.msra.mxu0 0.0
    %1588 = vmatprep.subr.mxu0 0.0
    %1589 = vmatpush1.xpose.msra.mxu0 0.0
    %1590 = vmatprep.subr.mxu0 0.0
    %1591 = vmatpush1.xpose.msra.mxu0 0.0
    %1592 = vmatprep.subr.mxu0 0.0
    %1593 = vmatpush1.xpose.msra.mxu0 0.0
    %1594 = vmatprep.subr.mxu0 0.0
    %1595 = vmatpush1.xpose.msra.mxu0 0.0
    %1596 = vmatprep.subr.mxu0 0.0
    %1597 = vmatpush1.xpose.msra.mxu0 0.0
    %1598 = vmatprep.subr.mxu0 0.0
    %1599 = vmatpush1.xpose.msra.mxu0 0.0
    %1600 = vmatprep.subr.mxu0 0.0
    %1601 = vmatpush1.xpose.msra.mxu0 0.0
    %1602 = vmatprep.subr.mxu0 0.0
    %1603 = vmatpush1.xpose.msra.mxu0 0.0
    %1604 = vmatprep.subr.mxu0 0.0
    %1605 = vmatpush1.xpose.msra.mxu0 0.0
    %1606 = vmatprep.subr.mxu0 0.0
    %1607 = vmatpush1.xpose.msra.mxu0 0.0
    %1608 = vmatprep.subr.mxu0 0.0
    %1609 = vmatpush1.xpose.msra.mxu0 0.0
    %1610 = vmatprep.subr.mxu0 0.0
    %1611 = vmatpush1.xpose.msra.mxu0 0.0
    %1612 = vmatprep.subr.mxu0 0.0
    %1613 = vmatpush1.xpose.msra.mxu0 0.0
    %1614 = vmatprep.subr.mxu0 0.0
    %1615 = vmatpush1.xpose.msra.mxu0 %v1582
    %1616 = vmatprep.subr.mxu0 0.0
    %1617 = vmatpush2.xpose.msra.mxu0 0.0
    %1618 = vmatprep.subr.mxu0 0.0
    %1619 = vmatpush2.xpose.msra.mxu0 0.0
    %1620 = vmatprep.subr.mxu0 0.0
    %1621 = vmatpush2.xpose.msra.mxu0 0.0
    %1622 = vmatprep.subr.mxu0 0.0
    %1623 = vmatpush2.xpose.msra.mxu0 0.0
    %1624 = vmatprep.subr.mxu0 0.0
    %1625 = vmatpush2.xpose.msra.mxu0 0.0
    %1626 = vmatprep.subr.mxu0 0.0
    %1627 = vmatpush2.xpose.msra.mxu0 0.0
    %1628 = vmatprep.subr.mxu0 0.0
    %1629 = vmatpush2.xpose.msra.mxu0 0.0
    %1630 = vmatprep.subr.mxu0 0.0
    %1631 = vmatpush2.xpose.msra.mxu0 0.0
    %1632 = vmatprep.subr.mxu0 0.0
    %1633 = vmatpush2.xpose.msra.mxu0 0.0
    %1634 = vmatprep.subr.mxu0 0.0
    %1635 = vmatpush2.xpose.msra.mxu0 0.0
    %1636 = vmatprep.subr.mxu0 0.0
    %1637 = vmatpush2.xpose.msra.mxu0 0.0
    %1638 = vmatprep.subr.mxu0 0.0
    %1639 = vmatpush2.xpose.msra.mxu0 0.0
    %1640 = vmatprep.subr.mxu0 0.0
    %1641 = vmatpush2.xpose.msra.mxu0 0.0
    %1642 = vmatprep.subr.mxu0 0.0
    %1643 = vmatpush2.xpose.msra.mxu0 0.0
    %1644 = vmatprep.subr.mxu0 0.0
    %1645 = vmatpush2.xpose.msra.mxu0 0.0
    %1646 = vmatprep.subr.mxu0 0.0
    %1647 = vmatpush2.xpose.msra.mxu0 0.0
    %1648 = vmatprep.mubr.f32.mxu0 0.0
    %1649 = vmatmul.mubr.f32.gmra.mxu0 %v1580
    %v1650 = vpop.f32.mrf.mxu0
    %v1651 = vadd.f32 %v242, %v1650
    %v1652 = vpop.f32.mrf.mxu0
    %1653 = vdwg.mxu0
    %v1654 = vsel %vm321, %v1651, -inf
    %1655 = vmax.xlane.f32.xlu0 %v1654
    %v1656 = vpop.xlane.xlu0 %1655
    %v1657 = vsub.f32 %v1651, %v1656
    %v1658 = vmul.f32 %v1657, 1.442695
    %v1659 = vpow.pop %v1658
    %v1660 = vsel %vm321, %v1659, 0.0
    %1661 = vadd.xlane.f32.xlu0 %v1660
    %v1662 = vpop.xlane.xlu0 %1661
    %v1663 = vrcp.pop %v1662
    %v1664 = vmul.f32 %v1659, %v1663
    %1665 = vrot.lane.b32.xlu0 %v1404, 48
    %v1666 = vpop.permute.xlu0 %1665
    %v1669 = vsel %vm321, %v1664, 0
    %1671 = vmatprep.subr.mxu0 0.0
    %1672 = vmatpush1.msra.mxu0 0.0
    %1673 = vmatprep.subr.mxu0 0.0
    %1674 = vmatpush1.msra.mxu0 0.0
    %1675 = vmatprep.subr.mxu0 0.0
    %1676 = vmatpush1.msra.mxu0 0.0
    %1677 = vmatprep.subr.mxu0 0.0
    %1678 = vmatpush1.msra.mxu0 0.0
    %1679 = vmatprep.subr.mxu0 0.0
    %1680 = vmatpush1.msra.mxu0 0.0
    %1681 = vmatprep.subr.mxu0 0.0
    %1682 = vmatpush1.msra.mxu0 0.0
    %1683 = vmatprep.subr.mxu0 0.0
    %1684 = vmatpush1.msra.mxu0 0.0
    %1685 = vmatprep.subr.mxu0 0.0
    %1686 = vmatpush1.msra.mxu0 0.0
    %1687 = vmatprep.subr.mxu0 0.0
    %1688 = vmatpush1.msra.mxu0 0.0
    %1689 = vmatprep.subr.mxu0 0.0
    %1690 = vmatpush1.msra.mxu0 0.0
    %1691 = vmatprep.subr.mxu0 0.0
    %1692 = vmatpush1.msra.mxu0 0.0
    %1693 = vmatprep.subr.mxu0 0.0
    %1694 = vmatpush1.msra.mxu0 0.0
    %1695 = vmatprep.subr.mxu0 0.0
    %1696 = vmatpush1.msra.mxu0 0.0
    %1697 = vmatprep.subr.mxu0 0.0
    %1698 = vmatpush1.msra.mxu0 0.0
    %1699 = vmatprep.subr.mxu0 0.0
    %1700 = vmatpush1.msra.mxu0 0.0
    %1701 = vmatprep.subr.mxu0 0.0
    %1702 = vmatpush1.msra.mxu0 %v1666
    %1703 = vmatprep.subr.mxu0 0.0
    %1704 = vmatpush2.msra.mxu0 0.0
    %1705 = vmatprep.subr.mxu0 0.0
    %1706 = vmatpush2.msra.mxu0 0.0
    %1707 = vmatprep.subr.mxu0 0.0
    %1708 = vmatpush2.msra.mxu0 0.0
    %1709 = vmatprep.subr.mxu0 0.0
    %1710 = vmatpush2.msra.mxu0 0.0
    %1711 = vmatprep.subr.mxu0 0.0
    %1712 = vmatpush2.msra.mxu0 0.0
    %1713 = vmatprep.subr.mxu0 0.0
    %1714 = vmatpush2.msra.mxu0 0.0
    %1715 = vmatprep.subr.mxu0 0.0
    %1716 = vmatpush2.msra.mxu0 0.0
    %1717 = vmatprep.subr.mxu0 0.0
    %1718 = vmatpush2.msra.mxu0 0.0
    %1719 = vmatprep.subr.mxu0 0.0
    %1720 = vmatpush2.msra.mxu0 0.0
    %1721 = vmatprep.subr.mxu0 0.0
    %1722 = vmatpush2.msra.mxu0 0.0
    %1723 = vmatprep.subr.mxu0 0.0
    %1724 = vmatpush2.msra.mxu0 0.0
    %1725 = vmatprep.subr.mxu0 0.0
    %1726 = vmatpush2.msra.mxu0 0.0
    %1727 = vmatprep.subr.mxu0 0.0
    %1728 = vmatpush2.msra.mxu0 0.0
    %1729 = vmatprep.subr.mxu0 0.0
    %1730 = vmatpush2.msra.mxu0 0.0
    %1731 = vmatprep.subr.mxu0 0.0
    %1732 = vmatpush2.msra.mxu0 0.0
    %1733 = vmatprep.subr.mxu0 0.0
    %1734 = vmatpush2.msra.mxu0 0.0
    %1735 = vmatprep.mubr.f32.mxu0 0.0
    %1736 = vmatmul.mubr.f32.gmra.mxu0 %v1669
    %v1737 = vpop.f32.mrf.mxu0
    %v1738 = vadd.f32 0.0, %v1737
    %v1739 = vpop.f32.mrf.mxu0
    %1740 = vdwg.mxu0
    %1742 = vrot.lane.b32.xlu0 %v1738, 16
    %v1743 = vpop.permute.xlu0 %1742
    %v1745 = vsel %vm246, %v1573, %v1743
    %1747 = vrot.lane.b32.xlu0 %v1409, 96
    %v1748 = vpop.permute.xlu0 %1747
    %v1749 = vsel %vm246, %v1409, 0
    %v1751 = vsel %vm246, %v1748, 0
    %1753 = vmatprep.subr.mxu0 0.0
    %1754 = vmatpush1.xpose.msra.mxu0 0.0
    %1755 = vmatprep.subr.mxu0 0.0
    %1756 = vmatpush1.xpose.msra.mxu0 0.0
    %1757 = vmatprep.subr.mxu0 0.0
    %1758 = vmatpush1.xpose.msra.mxu0 0.0
    %1759 = vmatprep.subr.mxu0 0.0
    %1760 = vmatpush1.xpose.msra.mxu0 0.0
    %1761 = vmatprep.subr.mxu0 0.0
    %1762 = vmatpush1.xpose.msra.mxu0 0.0
    %1763 = vmatprep.subr.mxu0 0.0
    %1764 = vmatpush1.xpose.msra.mxu0 0.0
    %1765 = vmatprep.subr.mxu0 0.0
    %1766 = vmatpush1.xpose.msra.mxu0 0.0
    %1767 = vmatprep.subr.mxu0 0.0
    %1768 = vmatpush1.xpose.msra.mxu0 0.0
    %1769 = vmatprep.subr.mxu0 0.0
    %1770 = vmatpush1.xpose.msra.mxu0 0.0
    %1771 = vmatprep.subr.mxu0 0.0
    %1772 = vmatpush1.xpose.msra.mxu0 0.0
    %1773 = vmatprep.subr.mxu0 0.0
    %1774 = vmatpush1.xpose.msra.mxu0 0.0
    %1775 = vmatprep.subr.mxu0 0.0
    %1776 = vmatpush1.xpose.msra.mxu0 0.0
    %1777 = vmatprep.subr.mxu0 0.0
    %1778 = vmatpush1.xpose.msra.mxu0 0.0
    %1779 = vmatprep.subr.mxu0 0.0
    %1780 = vmatpush1.xpose.msra.mxu0 0.0
    %1781 = vmatprep.subr.mxu0 0.0
    %1782 = vmatpush1.xpose.msra.mxu0 0.0
    %1783 = vmatprep.subr.mxu0 0.0
    %1784 = vmatpush1.xpose.msra.mxu0 %v1751
    %1785 = vmatprep.subr.mxu0 0.0
    %1786 = vmatpush2.xpose.msra.mxu0 0.0
    %1787 = vmatprep.subr.mxu0 0.0
    %1788 = vmatpush2.xpose.msra.mxu0 0.0
    %1789 = vmatprep.subr.mxu0 0.0
    %1790 = vmatpush2.xpose.msra.mxu0 0.0
    %1791 = vmatprep.subr.mxu0 0.0
    %1792 = vmatpush2.xpose.msra.mxu0 0.0
    %1793 = vmatprep.subr.mxu0 0.0
    %1794 = vmatpush2.xpose.msra.mxu0 0.0
    %1795 = vmatprep.subr.mxu0 0.0
    %1796 = vmatpush2.xpose.msra.mxu0 0.0
    %1797 = vmatprep.subr.mxu0 0.0
    %1798 = vmatpush2.xpose.msra.mxu0 0.0
    %1799 = vmatprep.subr.mxu0 0.0
    %1800 = vmatpush2.xpose.msra.mxu0 0.0
    %1801 = vmatprep.subr.mxu0 0.0
    %1802 = vmatpush2.xpose.msra.mxu0 0.0
    %1803 = vmatprep.subr.mxu0 0.0
    %1804 = vmatpush2.xpose.msra.mxu0 0.0
    %1805 = vmatprep.subr.mxu0 0.0
    %1806 = vmatpush2.xpose.msra.mxu0 0.0
    %1807 = vmatprep.subr.mxu0 0.0
    %1808 = vmatpush2.xpose.msra.mxu0 0.0
    %1809 = vmatprep.subr.mxu0 0.0
    %1810 = vmatpush2.xpose.msra.mxu0 0.0
    %1811 = vmatprep.subr.mxu0 0.0
    %1812 = vmatpush2.xpose.msra.mxu0 0.0
    %1813 = vmatprep.subr.mxu0 0.0
    %1814 = vmatpush2.xpose.msra.mxu0 0.0
    %1815 = vmatprep.subr.mxu0 0.0
    %1816 = vmatpush2.xpose.msra.mxu0 0.0
    %1817 = vmatprep.mubr.f32.mxu0 0.0
    %1818 = vmatmul.mubr.f32.gmra.mxu0 %v1749
    %v1819 = vpop.f32.mrf.mxu0
    %v1820 = vadd.f32 %v582, %v1819
    %v1821 = vpop.f32.mrf.mxu0
    %1822 = vdwg.mxu0
    %v1823 = vsel %vm321, %v1820, -inf
    %1824 = vmax.xlane.f32.xlu0 %v1823
    %v1825 = vpop.xlane.xlu0 %1824
    %v1826 = vsub.f32 %v1820, %v1825
    %v1827 = vmul.f32 %v1826, 1.442695
    %v1828 = vpow.pop %v1827
    %v1829 = vsel %vm321, %v1828, 0.0
    %1830 = vadd.xlane.f32.xlu0 %v1829
    %v1831 = vpop.xlane.xlu0 %1830
    %v1832 = vrcp.pop %v1831
    %v1833 = vmul.f32 %v1828, %v1832
    %1834 = vrot.lane.b32.xlu0 %v1409, 64
    %v1835 = vpop.permute.xlu0 %1834
    %v1838 = vsel %vm321, %v1833, 0
    %1840 = vmatprep.subr.mxu0 0.0
    %1841 = vmatpush1.msra.mxu0 0.0
    %1842 = vmatprep.subr.mxu0 0.0
    %1843 = vmatpush1.msra.mxu0 0.0
    %1844 = vmatprep.subr.mxu0 0.0
    %1845 = vmatpush1.msra.mxu0 0.0
    %1846 = vmatprep.subr.mxu0 0.0
    %1847 = vmatpush1.msra.mxu0 0.0
    %1848 = vmatprep.subr.mxu0 0.0
    %1849 = vmatpush1.msra.mxu0 0.0
    %1850 = vmatprep.subr.mxu0 0.0
    %1851 = vmatpush1.msra.mxu0 0.0
    %1852 = vmatprep.subr.mxu0 0.0
    %1853 = vmatpush1.msra.mxu0 0.0
    %1854 = vmatprep.subr.mxu0 0.0
    %1855 = vmatpush1.msra.mxu0 0.0
    %1856 = vmatprep.subr.mxu0 0.0
    %1857 = vmatpush1.msra.mxu0 0.0
    %1858 = vmatprep.subr.mxu0 0.0
    %1859 = vmatpush1.msra.mxu0 0.0
    %1860 = vmatprep.subr.mxu0 0.0
    %1861 = vmatpush1.msra.mxu0 0.0
    %1862 = vmatprep.subr.mxu0 0.0
    %1863 = vmatpush1.msra.mxu0 0.0
    %1864 = vmatprep.subr.mxu0 0.0
    %1865 = vmatpush1.msra.mxu0 0.0
    %1866 = vmatprep.subr.mxu0 0.0
    %1867 = vmatpush1.msra.mxu0 0.0
    %1868 = vmatprep.subr.mxu0 0.0
    %1869 = vmatpush1.msra.mxu0 0.0
    %1870 = vmatprep.subr.mxu0 0.0
    %1871 = vmatpush1.msra.mxu0 %v1835
    %1872 = vmatprep.subr.mxu0 0.0
    %1873 = vmatpush2.msra.mxu0 0.0
    %1874 = vmatprep.subr.mxu0 0.0
    %1875 = vmatpush2.msra.mxu0 0.0
    %1876 = vmatprep.subr.mxu0 0.0
    %1877 = vmatpush2.msra.mxu0 0.0
    %1878 = vmatprep.subr.mxu0 0.0
    %1879 = vmatpush2.msra.mxu0 0.0
    %1880 = vmatprep.subr.mxu0 0.0
    %1881 = vmatpush2.msra.mxu0 0.0
    %1882 = vmatprep.subr.mxu0 0.0
    %1883 = vmatpush2.msra.mxu0 0.0
    %1884 = vmatprep.subr.mxu0 0.0
    %1885 = vmatpush2.msra.mxu0 0.0
    %1886 = vmatprep.subr.mxu0 0.0
    %1887 = vmatpush2.msra.mxu0 0.0
    %1888 = vmatprep.subr.mxu0 0.0
    %1889 = vmatpush2.msra.mxu0 0.0
    %1890 = vmatprep.subr.mxu0 0.0
    %1891 = vmatpush2.msra.mxu0 0.0
    %1892 = vmatprep.subr.mxu0 0.0
    %1893 = vmatpush2.msra.mxu0 0.0
    %1894 = vmatprep.subr.mxu0 0.0
    %1895 = vmatpush2.msra.mxu0 0.0
    %1896 = vmatprep.subr.mxu0 0.0
    %1897 = vmatpush2.msra.mxu0 0.0
    %1898 = vmatprep.subr.mxu0 0.0
    %1899 = vmatpush2.msra.mxu0 0.0
    %1900 = vmatprep.subr.mxu0 0.0
    %1901 = vmatpush2.msra.mxu0 0.0
    %1902 = vmatprep.subr.mxu0 0.0
    %1903 = vmatpush2.msra.mxu0 0.0
    %1904 = vmatprep.mubr.f32.mxu0 0.0
    %1905 = vmatmul.mubr.f32.gmra.mxu0 %v1838
    %v1906 = vpop.f32.mrf.mxu0
    %v1907 = vadd.f32 0.0, %v1906
    %v1908 = vpop.f32.mrf.mxu0
    %1909 = vdwg.mxu0
    %1910 = vrot.lane.b32.xlu0 %v1409, 112
    %v1911 = vpop.permute.xlu0 %1910
    %1912 = vrot.lane.b32.xlu0 %v1409, 80
    %v1913 = vpop.permute.xlu0 %1912
    %v1914 = vsel %vm246, %v1911, 0
    %v1916 = vsel %vm246, %v1913, 0
    %1918 = vmatprep.subr.mxu0 0.0
    %1919 = vmatpush1.xpose.msra.mxu0 0.0
    %1920 = vmatprep.subr.mxu0 0.0
    %1921 = vmatpush1.xpose.msra.mxu0 0.0
    %1922 = vmatprep.subr.mxu0 0.0
    %1923 = vmatpush1.xpose.msra.mxu0 0.0
    %1924 = vmatprep.subr.mxu0 0.0
    %1925 = vmatpush1.xpose.msra.mxu0 0.0
    %1926 = vmatprep.subr.mxu0 0.0
    %1927 = vmatpush1.xpose.msra.mxu0 0.0
    %1928 = vmatprep.subr.mxu0 0.0
    %1929 = vmatpush1.xpose.msra.mxu0 0.0
    %1930 = vmatprep.subr.mxu0 0.0
    %1931 = vmatpush1.xpose.msra.mxu0 0.0
    %1932 = vmatprep.subr.mxu0 0.0
    %1933 = vmatpush1.xpose.msra.mxu0 0.0
    %1934 = vmatprep.subr.mxu0 0.0
    %1935 = vmatpush1.xpose.msra.mxu0 0.0
    %1936 = vmatprep.subr.mxu0 0.0
    %1937 = vmatpush1.xpose.msra.mxu0 0.0
    %1938 = vmatprep.subr.mxu0 0.0
    %1939 = vmatpush1.xpose.msra.mxu0 0.0
    %1940 = vmatprep.subr.mxu0 0.0
    %1941 = vmatpush1.xpose.msra.mxu0 0.0
    %1942 = vmatprep.subr.mxu0 0.0
    %1943 = vmatpush1.xpose.msra.mxu0 0.0
    %1944 = vmatprep.subr.mxu0 0.0
    %1945 = vmatpush1.xpose.msra.mxu0 0.0
    %1946 = vmatprep.subr.mxu0 0.0
    %1947 = vmatpush1.xpose.msra.mxu0 0.0
    %1948 = vmatprep.subr.mxu0 0.0
    %1949 = vmatpush1.xpose.msra.mxu0 %v1916
    %1950 = vmatprep.subr.mxu0 0.0
    %1951 = vmatpush2.xpose.msra.mxu0 0.0
    %1952 = vmatprep.subr.mxu0 0.0
    %1953 = vmatpush2.xpose.msra.mxu0 0.0
    %1954 = vmatprep.subr.mxu0 0.0
    %1955 = vmatpush2.xpose.msra.mxu0 0.0
    %1956 = vmatprep.subr.mxu0 0.0
    %1957 = vmatpush2.xpose.msra.mxu0 0.0
    %1958 = vmatprep.subr.mxu0 0.0
    %1959 = vmatpush2.xpose.msra.mxu0 0.0
    %1960 = vmatprep.subr.mxu0 0.0
    %1961 = vmatpush2.xpose.msra.mxu0 0.0
    %1962 = vmatprep.subr.mxu0 0.0
    %1963 = vmatpush2.xpose.msra.mxu0 0.0
    %1964 = vmatprep.subr.mxu0 0.0
    %1965 = vmatpush2.xpose.msra.mxu0 0.0
    %1966 = vmatprep.subr.mxu0 0.0
    %1967 = vmatpush2.xpose.msra.mxu0 0.0
    %1968 = vmatprep.subr.mxu0 0.0
    %1969 = vmatpush2.xpose.msra.mxu0 0.0
    %1970 = vmatprep.subr.mxu0 0.0
    %1971 = vmatpush2.xpose.msra.mxu0 0.0
    %1972 = vmatprep.subr.mxu0 0.0
    %1973 = vmatpush2.xpose.msra.mxu0 0.0
    %1974 = vmatprep.subr.mxu0 0.0
    %1975 = vmatpush2.xpose.msra.mxu0 0.0
    %1976 = vmatprep.subr.mxu0 0.0
    %1977 = vmatpush2.xpose.msra.mxu0 0.0
    %1978 = vmatprep.subr.mxu0 0.0
    %1979 = vmatpush2.xpose.msra.mxu0 0.0
    %1980 = vmatprep.subr.mxu0 0.0
    %1981 = vmatpush2.xpose.msra.mxu0 0.0
    %1982 = vmatprep.mubr.f32.mxu0 0.0
    %1983 = vmatmul.mubr.f32.gmra.mxu0 %v1914
    %v1984 = vpop.f32.mrf.mxu0
    %v1985 = vadd.f32 %v582, %v1984
    %v1986 = vpop.f32.mrf.mxu0
    %1987 = vdwg.mxu0
    %v1988 = vsel %vm321, %v1985, -inf
    %1989 = vmax.xlane.f32.xlu0 %v1988
    %v1990 = vpop.xlane.xlu0 %1989
    %v1991 = vsub.f32 %v1985, %v1990
    %v1992 = vmul.f32 %v1991, 1.442695
    %v1993 = vpow.pop %v1992
    %v1994 = vsel %vm321, %v1993, 0.0
    %1995 = vadd.xlane.f32.xlu0 %v1994
    %v1996 = vpop.xlane.xlu0 %1995
    %v1997 = vrcp.pop %v1996
    %v1998 = vmul.f32 %v1993, %v1997
    %1999 = vrot.lane.b32.xlu0 %v1409, 48
    %v2000 = vpop.permute.xlu0 %1999
    %v2003 = vsel %vm321, %v1998, 0
    %2005 = vmatprep.subr.mxu0 0.0
    %2006 = vmatpush1.msra.mxu0 0.0
    %2007 = vmatprep.subr.mxu0 0.0
    %2008 = vmatpush1.msra.mxu0 0.0
    %2009 = vmatprep.subr.mxu0 0.0
    %2010 = vmatpush1.msra.mxu0 0.0
    %2011 = vmatprep.subr.mxu0 0.0
    %2012 = vmatpush1.msra.mxu0 0.0
    %2013 = vmatprep.subr.mxu0 0.0
    %2014 = vmatpush1.msra.mxu0 0.0
    %2015 = vmatprep.subr.mxu0 0.0
    %2016 = vmatpush1.msra.mxu0 0.0
    %2017 = vmatprep.subr.mxu0 0.0
    %2018 = vmatpush1.msra.mxu0 0.0
    %2019 = vmatprep.subr.mxu0 0.0
    %2020 = vmatpush1.msra.mxu0 0.0
    %2021 = vmatprep.subr.mxu0 0.0
    %2022 = vmatpush1.msra.mxu0 0.0
    %2023 = vmatprep.subr.mxu0 0.0
    %2024 = vmatpush1.msra.mxu0 0.0
    %2025 = vmatprep.subr.mxu0 0.0
    %2026 = vmatpush1.msra.mxu0 0.0
    %2027 = vmatprep.subr.mxu0 0.0
    %2028 = vmatpush1.msra.mxu0 0.0
    %2029 = vmatprep.subr.mxu0 0.0
    %2030 = vmatpush1.msra.mxu0 0.0
    %2031 = vmatprep.subr.mxu0 0.0
    %2032 = vmatpush1.msra.mxu0 0.0
    %2033 = vmatprep.subr.mxu0 0.0
    %2034 = vmatpush1.msra.mxu0 0.0
    %2035 = vmatprep.subr.mxu0 0.0
    %2036 = vmatpush1.msra.mxu0 %v2000
    %2037 = vmatprep.subr.mxu0 0.0
    %2038 = vmatpush2.msra.mxu0 0.0
    %2039 = vmatprep.subr.mxu0 0.0
    %2040 = vmatpush2.msra.mxu0 0.0
    %2041 = vmatprep.subr.mxu0 0.0
    %2042 = vmatpush2.msra.mxu0 0.0
    %2043 = vmatprep.subr.mxu0 0.0
    %2044 = vmatpush2.msra.mxu0 0.0
    %2045 = vmatprep.subr.mxu0 0.0
    %2046 = vmatpush2.msra.mxu0 0.0
    %2047 = vmatprep.subr.mxu0 0.0
    %2048 = vmatpush2.msra.mxu0 0.0
    %2049 = vmatprep.subr.mxu0 0.0
    %2050 = vmatpush2.msra.mxu0 0.0
    %2051 = vmatprep.subr.mxu0 0.0
    %2052 = vmatpush2.msra.mxu0 0.0
    %2053 = vmatprep.subr.mxu0 0.0
    %2054 = vmatpush2.msra.mxu0 0.0
    %2055 = vmatprep.subr.mxu0 0.0
    %2056 = vmatpush2.msra.mxu0 0.0
    %2057 = vmatprep.subr.mxu0 0.0
    %2058 = vmatpush2.msra.mxu0 0.0
    %2059 = vmatprep.subr.mxu0 0.0
    %2060 = vmatpush2.msra.mxu0 0.0
    %2061 = vmatprep.subr.mxu0 0.0
    %2062 = vmatpush2.msra.mxu0 0.0
    %2063 = vmatprep.subr.mxu0 0.0
    %2064 = vmatpush2.msra.mxu0 0.0
    %2065 = vmatprep.subr.mxu0 0.0
    %2066 = vmatpush2.msra.mxu0 0.0
    %2067 = vmatprep.subr.mxu0 0.0
    %2068 = vmatpush2.msra.mxu0 0.0
    %2069 = vmatprep.mubr.f32.mxu0 0.0
    %2070 = vmatmul.mubr.f32.gmra.mxu0 %v2003
    %v2071 = vpop.f32.mrf.mxu0
    %v2072 = vadd.f32 0.0, %v2071
    %v2073 = vpop.f32.mrf.mxu0
    %2074 = vdwg.mxu0
    %2076 = vrot.lane.b32.xlu0 %v2072, 16
    %v2077 = vpop.permute.xlu0 %2076
    %v2079 = vsel %vm246, %v1907, %v2077
    %v2081 = vlaneseq
    %v2082 = vshrl.u32 %v2081, 7
    %v2083 = vsub.s32 0, %v2082
    %v2084 = vrot.slane %v1298, %v2083
    %v2087 = vsel %vm80, %v1745, 0
    %v2090 = vsel %vm80, %v2079, 0
    %2092 = vmatprep.subr.mxu0 0.0
    %2093 = vmatpush1.msra.mxu0 0.0
    %2094 = vmatprep.subr.mxu0 0.0
    %2095 = vmatpush1.msra.mxu0 0.0
    %2096 = vmatprep.subr.mxu0 0.0
    %2097 = vmatpush1.msra.mxu0 0.0
    %2098 = vmatprep.subr.mxu0 0.0
    %2099 = vmatpush1.msra.mxu0 0.0
    %2100 = vmatprep.subr.mxu0 0.0
    %2101 = vmatpush1.msra.mxu0 0.0
    %2102 = vmatprep.subr.mxu0 0.0
    %2103 = vmatpush1.msra.mxu0 0.0
    %2104 = vmatprep.subr.mxu0 0.0
    %2105 = vmatpush1.msra.mxu0 0.0
    %2106 = vmatprep.subr.mxu0 0.0
    %2107 = vmatpush1.msra.mxu0 0.0
    %2108 = vmatprep.subr.mxu0 0.0
    %2109 = vmatpush1.msra.mxu0 0.0
    %2110 = vmatprep.subr.mxu0 0.0
    %2111 = vmatpush1.msra.mxu0 0.0
    %2112 = vmatprep.subr.mxu0 0.0
    %2113 = vmatpush1.msra.mxu0 0.0
    %2114 = vmatprep.subr.mxu0 0.0
    %2115 = vmatpush1.msra.mxu0 0.0
    %2116 = vmatprep.subr.mxu0 0.0
    %2117 = vmatpush1.msra.mxu0 %v1296
    %2118 = vmatprep.subr.mxu0 0.0
    %2119 = vmatpush1.msra.mxu0 %v1295
    %2120 = vmatprep.subr.mxu0 0.0
    %2121 = vmatpush1.msra.mxu0 %v1294
    %2122 = vmatprep.subr.mxu0 0.0
    %2123 = vmatpush1.msra.mxu0 %v1293
    %2124 = vmatprep.subr.mxu0 0.0
    %2125 = vmatpush2.msra.mxu0 0.0
    %2126 = vmatprep.subr.mxu0 0.0
    %2127 = vmatpush2.msra.mxu0 0.0
    %2128 = vmatprep.subr.mxu0 0.0
    %2129 = vmatpush2.msra.mxu0 0.0
    %2130 = vmatprep.subr.mxu0 0.0
    %2131 = vmatpush2.msra.mxu0 0.0
    %2132 = vmatprep.subr.mxu0 0.0
    %2133 = vmatpush2.msra.mxu0 0.0
    %2134 = vmatprep.subr.mxu0 0.0
    %2135 = vmatpush2.msra.mxu0 0.0
    %2136 = vmatprep.subr.mxu0 0.0
    %2137 = vmatpush2.msra.mxu0 0.0
    %2138 = vmatprep.subr.mxu0 0.0
    %2139 = vmatpush2.msra.mxu0 0.0
    %2140 = vmatprep.subr.mxu0 0.0
    %2141 = vmatpush2.msra.mxu0 0.0
    %2142 = vmatprep.subr.mxu0 0.0
    %2143 = vmatpush2.msra.mxu0 0.0
    %2144 = vmatprep.subr.mxu0 0.0
    %2145 = vmatpush2.msra.mxu0 0.0
    %2146 = vmatprep.subr.mxu0 0.0
    %2147 = vmatpush2.msra.mxu0 0.0
    %2148 = vmatprep.subr.mxu0 0.0
    %2149 = vmatpush2.msra.mxu0 0.0
    %2150 = vmatprep.subr.mxu0 0.0
    %2151 = vmatpush2.msra.mxu0 0.0
    %2152 = vmatprep.subr.mxu0 0.0
    %2153 = vmatpush2.msra.mxu0 0.0
    %2154 = vmatprep.subr.mxu0 0.0
    %2155 = vmatpush2.msra.mxu0 0.0
    %2156 = vmatprep.mubr.f32.mxu0 0.0
    %2157 = vmatmul.mubr.f32.gmra.mxu0 %v2087
    %v2158 = vpop.f32.mrf.mxu0
    %v2159 = vadd.f32 %v2084, %v2158
    %v2160 = vpop.f32.mrf.mxu0
    %2161 = vmatprep.mubr.f32.mxu0 0.0
    %2162 = vmatmul.mubr.f32.gmra.mxu0 %v2090
    %v2163 = vpop.f32.mrf.mxu0
    %v2164 = vadd.f32 %v2084, %v2163
    %v2165 = vpop.f32.mrf.mxu0
    %2166 = vdwg.mxu0
    %v2167 = vadd.f32 %v2159, %v1283
    %v2168 = vadd.f32 %v2164, %v1284
    %v2169 = vsel %vm80, %v2167, 0.0
    %2170 = vadd.xlane.f32.xlu0 %v2169
    %v2171 = vpop.xlane.xlu0 %2170
    %v2172 = vsel %vm80, %v2168, 0.0
    %2173 = vadd.xlane.f32.xlu0 %v2172
    %v2174 = vpop.xlane.xlu0 %2173
    %v2175 = vmul.f32 %v2171, %v87
    %v2176 = vmul.f32 %v2174, %v87
    %v2177 = vsub.f32 %v2167, %v2175
    %v2178 = vsub.f32 %v2168, %v2176
    %v2179 = vmul.f32 %v2177, %v2177
    %v2180 = vmul.f32 %v2178, %v2178
    %v2181 = vsel %vm80, %v2179, 0.0
    %2182 = vadd.xlane.f32.xlu0 %v2181
    %v2183 = vpop.xlane.xlu0 %2182
    %v2184 = vsel %vm80, %v2180, 0.0
    %2185 = vadd.xlane.f32.xlu0 %v2184
    %v2186 = vpop.xlane.xlu0 %2185
    %v2187 = vmul.f32 %v2183, %v87
    %v2188 = vmul.f32 %v2186, %v87
    %v2189 = vadd.f32 %v2187, 1e-12
    %v2190 = vadd.f32 %v2188, 1e-12
    %v2191 = vrsqrt.pop %v2189
    %v2192 = vrsqrt.pop %v2190
    %v2193 = vmul.f32 %v2177, %v2191
    %v2194 = vmul.f32 %v2178, %v2192
    %v2196 = vlaneseq
    %v2197 = vshrl.u32 %v2196, 7
    %v2198 = vsub.s32 0, %v2197
    %v2199 = vrot.slane %v1300, %v2198
    %v2201 = vmul.f32 %v2193, %v2199
    %v2202 = vmul.f32 %v2194, %v2199
    %v2204 = vlaneseq
    %v2205 = vshrl.u32 %v2204, 7
    %v2206 = vsub.s32 0, %v2205
    %v2207 = vrot.slane %v1302, %v2206
    %v2209 = vadd.f32 %v2201, %v2207
    %v2210 = vadd.f32 %v2202, %v2207
    %v2212 = vlaneseq
    %v2213 = vshrl.u32 %v2212, 7
    %v2214 = vsub.s32 0, %v2213
    %v2215 = vrot.slane %v1309, %v2214
    %v2218 = vsel %vm80, %v2209, 0
    %v2221 = vsel %vm80, %v2210, 0
    %2223 = vmatprep.subr.mxu0 0.0
    %2224 = vmatpush1.msra.mxu0 0.0
    %2225 = vmatprep.subr.mxu0 0.0
    %2226 = vmatpush1.msra.mxu0 0.0
    %2227 = vmatprep.subr.mxu0 0.0
    %2228 = vmatpush1.msra.mxu0 0.0
    %2229 = vmatprep.subr.mxu0 0.0
    %2230 = vmatpush1.msra.mxu0 0.0
    %2231 = vmatprep.subr.mxu0 0.0
    %2232 = vmatpush1.msra.mxu0 0.0
    %2233 = vmatprep.subr.mxu0 0.0
    %2234 = vmatpush1.msra.mxu0 0.0
    %2235 = vmatprep.subr.mxu0 0.0
    %2236 = vmatpush1.msra.mxu0 0.0
    %2237 = vmatprep.subr.mxu0 0.0
    %2238 = vmatpush1.msra.mxu0 0.0
    %2239 = vmatprep.subr.mxu0 0.0
    %2240 = vmatpush1.msra.mxu0 0.0
    %2241 = vmatprep.subr.mxu0 0.0
    %2242 = vmatpush1.msra.mxu0 0.0
    %2243 = vmatprep.subr.mxu0 0.0
    %2244 = vmatpush1.msra.mxu0 0.0
    %2245 = vmatprep.subr.mxu0 0.0
    %2246 = vmatpush1.msra.mxu0 0.0
    %2247 = vmatprep.subr.mxu0 0.0
    %2248 = vmatpush1.msra.mxu0 %v1307
    %2249 = vmatprep.subr.mxu0 0.0
    %2250 = vmatpush1.msra.mxu0 %v1306
    %2251 = vmatprep.subr.mxu0 0.0
    %2252 = vmatpush1.msra.mxu0 %v1305
    %2253 = vmatprep.subr.mxu0 0.0
    %2254 = vmatpush1.msra.mxu0 %v1304
    %2255 = vmatprep.subr.mxu0 0.0
    %2256 = vmatpush2.msra.mxu0 0.0
    %2257 = vmatprep.subr.mxu0 0.0
    %2258 = vmatpush2.msra.mxu0 0.0
    %2259 = vmatprep.subr.mxu0 0.0
    %2260 = vmatpush2.msra.mxu0 0.0
    %2261 = vmatprep.subr.mxu0 0.0
    %2262 = vmatpush2.msra.mxu0 0.0
    %2263 = vmatprep.subr.mxu0 0.0
    %2264 = vmatpush2.msra.mxu0 0.0
    %2265 = vmatprep.subr.mxu0 0.0
    %2266 = vmatpush2.msra.mxu0 0.0
    %2267 = vmatprep.subr.mxu0 0.0
    %2268 = vmatpush2.msra.mxu0 0.0
    %2269 = vmatprep.subr.mxu0 0.0
    %2270 = vmatpush2.msra.mxu0 0.0
    %2271 = vmatprep.subr.mxu0 0.0
    %2272 = vmatpush2.msra.mxu0 0.0
    %2273 = vmatprep.subr.mxu0 0.0
    %2274 = vmatpush2.msra.mxu0 0.0
    %2275 = vmatprep.subr.mxu0 0.0
    %2276 = vmatpush2.msra.mxu0 0.0
    %2277 = vmatprep.subr.mxu0 0.0
    %2278 = vmatpush2.msra.mxu0 0.0
    %2279 = vmatprep.subr.mxu0 0.0
    %2280 = vmatpush2.msra.mxu0 0.0
    %2281 = vmatprep.subr.mxu0 0.0
    %2282 = vmatpush2.msra.mxu0 0.0
    %2283 = vmatprep.subr.mxu0 0.0
    %2284 = vmatpush2.msra.mxu0 0.0
    %2285 = vmatprep.subr.mxu0 0.0
    %2286 = vmatpush2.msra.mxu0 0.0
    %2287 = vmatprep.mubr.f32.mxu0 0.0
    %2288 = vmatmul.mubr.f32.gmra.mxu0 %v2218
    %v2289 = vpop.f32.mrf.mxu0
    %v2290 = vadd.f32 %v2215, %v2289
    %v2291 = vpop.f32.mrf.mxu0
    %2292 = vmatprep.mubr.f32.mxu0 0.0
    %2293 = vmatmul.mubr.f32.gmra.mxu0 %v2221
    %v2294 = vpop.f32.mrf.mxu0
    %v2295 = vadd.f32 %v2215, %v2294
    %v2296 = vpop.f32.mrf.mxu0
    %2297 = vdwg.mxu0
    %v2298 = vmul.f32 %v2290, 0.5
    %v2299 = vmul.f32 %v2295, 0.5
    %v2300 = vmul.f32 %v2290, 0.044715
    %v2301 = vmul.f32 %v2295, 0.044715
    %v2302 = vmul.f32 %v2300, %v2290
    %v2303 = vmul.f32 %v2301, %v2295
    %v2304 = vmul.f32 %v2302, %v2290
    %v2305 = vmul.f32 %v2303, %v2295
    %v2306 = vadd.f32 %v2290, %v2304
    %v2307 = vadd.f32 %v2295, %v2305
    %v2308 = vmul.f32 %v2306, 0.7978846
    %v2309 = vmul.f32 %v2307, 0.7978846
    %v2310 = vtanh.pop %v2308
    %v2311 = vtanh.pop %v2309
    %v2312 = vadd.f32 %v2310, 1.0
    %v2313 = vadd.f32 %v2311, 1.0
    %v2314 = vmul.f32 %v2298, %v2312
    %v2315 = vmul.f32 %v2299, %v2313
    %v2317 = vlaneseq
    %v2318 = vshrl.u32 %v2317, 7
    %v2319 = vsub.s32 0, %v2318
    %v2320 = vrot.slane %v1320, %v2319
    %v2323 = vsel %vm1159, %v2314, 0
    %v2326 = vsel %vm1159, %v2315, 0
    %2328 = vmatprep.subr.mxu0 0.0
    %2329 = vmatpush1.msra.mxu0 0.0
    %2330 = vmatprep.subr.mxu0 0.0
    %2331 = vmatpush1.msra.mxu0 0.0
    %2332 = vmatprep.subr.mxu0 0.0
    %2333 = vmatpush1.msra.mxu0 0.0
    %2334 = vmatprep.subr.mxu0 0.0
    %2335 = vmatpush1.msra.mxu0 0.0
    %2336 = vmatprep.subr.mxu0 0.0
    %2337 = vmatpush1.msra.mxu0 0.0
    %2338 = vmatprep.subr.mxu0 0.0
    %2339 = vmatpush1.msra.mxu0 0.0
    %2340 = vmatprep.subr.mxu0 0.0
    %2341 = vmatpush1.msra.mxu0 0.0
    %2342 = vmatprep.subr.mxu0 0.0
    %2343 = vmatpush1.msra.mxu0 0.0
    %2344 = vmatprep.subr.mxu0 0.0
    %2345 = vmatpush1.msra.mxu0 %v1318
    %2346 = vmatprep.subr.mxu0 0.0
    %2347 = vmatpush1.msra.mxu0 %v1317
    %2348 = vmatprep.subr.mxu0 0.0
    %2349 = vmatpush1.msra.mxu0 %v1316
    %2350 = vmatprep.subr.mxu0 0.0
    %2351 = vmatpush1.msra.mxu0 %v1315
    %2352 = vmatprep.subr.mxu0 0.0
    %2353 = vmatpush1.msra.mxu0 %v1314
    %2354 = vmatprep.subr.mxu0 0.0
    %2355 = vmatpush1.msra.mxu0 %v1313
    %2356 = vmatprep.subr.mxu0 0.0
    %2357 = vmatpush1.msra.mxu0 %v1312
    %2358 = vmatprep.subr.mxu0 0.0
    %2359 = vmatpush1.msra.mxu0 %v1311
    %2360 = vmatprep.subr.mxu0 0.0
    %2361 = vmatpush2.msra.mxu0 0.0
    %2362 = vmatprep.subr.mxu0 0.0
    %2363 = vmatpush2.msra.mxu0 0.0
    %2364 = vmatprep.subr.mxu0 0.0
    %2365 = vmatpush2.msra.mxu0 0.0
    %2366 = vmatprep.subr.mxu0 0.0
    %2367 = vmatpush2.msra.mxu0 0.0
    %2368 = vmatprep.subr.mxu0 0.0
    %2369 = vmatpush2.msra.mxu0 0.0
    %2370 = vmatprep.subr.mxu0 0.0
    %2371 = vmatpush2.msra.mxu0 0.0
    %2372 = vmatprep.subr.mxu0 0.0
    %2373 = vmatpush2.msra.mxu0 0.0
    %2374 = vmatprep.subr.mxu0 0.0
    %2375 = vmatpush2.msra.mxu0 0.0
    %2376 = vmatprep.subr.mxu0 0.0
    %2377 = vmatpush2.msra.mxu0 0.0
    %2378 = vmatprep.subr.mxu0 0.0
    %2379 = vmatpush2.msra.mxu0 0.0
    %2380 = vmatprep.subr.mxu0 0.0
    %2381 = vmatpush2.msra.mxu0 0.0
    %2382 = vmatprep.subr.mxu0 0.0
    %2383 = vmatpush2.msra.mxu0 0.0
    %2384 = vmatprep.subr.mxu0 0.0
    %2385 = vmatpush2.msra.mxu0 0.0
    %2386 = vmatprep.subr.mxu0 0.0
    %2387 = vmatpush2.msra.mxu0 0.0
    %2388 = vmatprep.subr.mxu0 0.0
    %2389 = vmatpush2.msra.mxu0 0.0
    %2390 = vmatprep.subr.mxu0 0.0
    %2391 = vmatpush2.msra.mxu0 0.0
    %2392 = vmatprep.mubr.f32.mxu0 0.0
    %2393 = vmatmul.mubr.f32.gmra.mxu0 %v2323
    %v2394 = vpop.f32.mrf.mxu0
    %v2395 = vadd.f32 %v2320, %v2394
    %v2396 = vpop.f32.mrf.mxu0
    %2397 = vmatprep.mubr.f32.mxu0 0.0
    %2398 = vmatmul.mubr.f32.gmra.mxu0 %v2326
    %v2399 = vpop.f32.mrf.mxu0
    %v2400 = vadd.f32 %v2320, %v2399
    %v2401 = vpop.f32.mrf.mxu0
    %2402 = vdwg.mxu0
    %v2403 = vadd.f32 %v2395, %v2209
    %v2404 = vadd.f32 %v2400, %v2210
    %v2405 = vsel %vm80, %v2403, 0.0
    %2406 = vadd.xlane.f32.xlu0 %v2405
    %v2407 = vpop.xlane.xlu0 %2406
    %v2408 = vsel %vm80, %v2404, 0.0
    %2409 = vadd.xlane.f32.xlu0 %v2408
    %v2410 = vpop.xlane.xlu0 %2409
    %v2411 = vmul.f32 %v2407, %v87
    %v2412 = vmul.f32 %v2410, %v87
    %v2413 = vsub.f32 %v2403, %v2411
    %v2414 = vsub.f32 %v2404, %v2412
    %v2415 = vmul.f32 %v2413, %v2413
    %v2416 = vmul.f32 %v2414, %v2414
    %v2417 = vsel %vm80, %v2415, 0.0
    %2418 = vadd.xlane.f32.xlu0 %v2417
    %v2419 = vpop.xlane.xlu0 %2418
    %v2420 = vsel %vm80, %v2416, 0.0
    %2421 = vadd.xlane.f32.xlu0 %v2420
    %v2422 = vpop.xlane.xlu0 %2421
    %v2423 = vmul.f32 %v2419, %v87
    %v2424 = vmul.f32 %v2422, %v87
    %v2425 = vadd.f32 %v2423, 1e-12
    %v2426 = vadd.f32 %v2424, 1e-12
    %v2427 = vrsqrt.pop %v2425
    %v2428 = vrsqrt.pop %v2426
    %v2429 = vmul.f32 %v2413, %v2427
    %v2430 = vmul.f32 %v2414, %v2428
    %v2432 = vlaneseq
    %v2433 = vshrl.u32 %v2432, 7
    %v2434 = vsub.s32 0, %v2433
    %v2435 = vrot.slane %v1322, %v2434
    %v2437 = vmul.f32 %v2429, %v2435
    %v2438 = vmul.f32 %v2430, %v2435
    %v2440 = vlaneseq
    %v2441 = vshrl.u32 %v2440, 7
    %v2442 = vsub.s32 0, %v2441
    %v2443 = vrot.slane %v1324, %v2442
    %v2445 = vadd.f32 %v2437, %v2443
    %v2446 = vadd.f32 %v2438, %v2443
    %v2448 = vrot.slane %v2446, 7
    %vm2450 = vcmask 1040384
    %v2451 = vsel %vm2450, %v2445, %v2448
    %v2452 = vld [vmem:[%s16] sm:$0xff]
    %v2453 = vld [vmem:[%s16 + $0x8] sm:$0xff]
    %v2454 = vld [vmem:[%s16 + $0x10] sm:$0xff]
    %v2455 = vld [vmem:[%s16 + $0x18] sm:$0xff]
    %v2456 = vld [vmem:[%s17] sm:$0x1]
    %v2458 = vlaneseq
    %v2459 = vshrl.u32 %v2458, 7
    %v2460 = vsub.s32 0, %v2459
    %v2461 = vrot.slane %v2456, %v2460
    %v2464 = vsel %vm80, %v2451, 0
    %2466 = vmatprep.subr.mxu0 0.0
    %2467 = vmatpush1.msra.mxu0 0.0
    %2468 = vmatprep.subr.mxu0 0.0
    %2469 = vmatpush1.msra.mxu0 0.0
    %2470 = vmatprep.subr.mxu0 0.0
    %2471 = vmatpush1.msra.mxu0 0.0
    %2472 = vmatprep.subr.mxu0 0.0
    %2473 = vmatpush1.msra.mxu0 0.0
    %2474 = vmatprep.subr.mxu0 0.0
    %2475 = vmatpush1.msra.mxu0 0.0
    %2476 = vmatprep.subr.mxu0 0.0
    %2477 = vmatpush1.msra.mxu0 0.0
    %2478 = vmatprep.subr.mxu0 0.0
    %2479 = vmatpush1.msra.mxu0 0.0
    %2480 = vmatprep.subr.mxu0 0.0
    %2481 = vmatpush1.msra.mxu0 0.0
    %2482 = vmatprep.subr.mxu0 0.0
    %2483 = vmatpush1.msra.mxu0 0.0
    %2484 = vmatprep.subr.mxu0 0.0
    %2485 = vmatpush1.msra.mxu0 0.0
    %2486 = vmatprep.subr.mxu0 0.0
    %2487 = vmatpush1.msra.mxu0 0.0
    %2488 = vmatprep.subr.mxu0 0.0
    %2489 = vmatpush1.msra.mxu0 0.0
    %2490 = vmatprep.subr.mxu0 0.0
    %2491 = vmatpush1.msra.mxu0 %v2455
    %2492 = vmatprep.subr.mxu0 0.0
    %2493 = vmatpush1.msra.mxu0 %v2454
    %2494 = vmatprep.subr.mxu0 0.0
    %2495 = vmatpush1.msra.mxu0 %v2453
    %2496 = vmatprep.subr.mxu0 0.0
    %2497 = vmatpush1.msra.mxu0 %v2452
    %2498 = vmatprep.subr.mxu0 0.0
    %2499 = vmatpush2.msra.mxu0 0.0
    %2500 = vmatprep.subr.mxu0 0.0
    %2501 = vmatpush2.msra.mxu0 0.0
    %2502 = vmatprep.subr.mxu0 0.0
    %2503 = vmatpush2.msra.mxu0 0.0
    %2504 = vmatprep.subr.mxu0 0.0
    %2505 = vmatpush2.msra.mxu0 0.0
    %2506 = vmatprep.subr.mxu0 0.0
    %2507 = vmatpush2.msra.mxu0 0.0
    %2508 = vmatprep.subr.mxu0 0.0
    %2509 = vmatpush2.msra.mxu0 0.0
    %2510 = vmatprep.subr.mxu0 0.0
    %2511 = vmatpush2.msra.mxu0 0.0
    %2512 = vmatprep.subr.mxu0 0.0
    %2513 = vmatpush2.msra.mxu0 0.0
    %2514 = vmatprep.subr.mxu0 0.0
    %2515 = vmatpush2.msra.mxu0 0.0
    %2516 = vmatprep.subr.mxu0 0.0
    %2517 = vmatpush2.msra.mxu0 0.0
    %2518 = vmatprep.subr.mxu0 0.0
    %2519 = vmatpush2.msra.mxu0 0.0
    %2520 = vmatprep.subr.mxu0 0.0
    %2521 = vmatpush2.msra.mxu0 0.0
    %2522 = vmatprep.subr.mxu0 0.0
    %2523 = vmatpush2.msra.mxu0 0.0
    %2524 = vmatprep.subr.mxu0 0.0
    %2525 = vmatpush2.msra.mxu0 0.0
    %2526 = vmatprep.subr.mxu0 0.0
    %2527 = vmatpush2.msra.mxu0 0.0
    %2528 = vmatprep.subr.mxu0 0.0
    %2529 = vmatpush2.msra.mxu0 0.0
    %2530 = vmatprep.mubr.f32.mxu0 0.0
    %2531 = vmatmul.mubr.f32.gmra.mxu0 %v2464
    %v2532 = vpop.f32.mrf.mxu0
    %v2533 = vadd.f32 %v2461, %v2532
    %v2534 = vpop.f32.mrf.mxu0
    %2535 = vdwg.mxu0
    %v2536 = vtanh.pop %v2533
    %v2537 = vld [vmem:[%s18] sm:$0xff]
    %v2538 = vld [vmem:[%s18 + $0x8] sm:$0xff]
    %v2539 = vld [vmem:[%s18 + $0x10] sm:$0xff]
    %v2540 = vld [vmem:[%s18 + $0x18] sm:$0xff]
    %v2541 = vld [vmem:[%s18 + $0x20] sm:$0xff]
    %v2542 = vld [vmem:[%s18 + $0x28] sm:$0xff]
    %v2543 = vld [vmem:[%s18 + $0x30] sm:$0xff]
    %v2544 = vld [vmem:[%s18 + $0x38] sm:$0xff]
    %v2545 = vld [vmem:[%s19] sm:$0x3]
    %v2547 = vlaneseq
    %v2548 = vshrl.u32 %v2547, 7
    %v2549 = vsub.s32 0, %v2548
    %v2550 = vrot.slane %v2545, %v2549
    %v2551 = vlaneseq
    %v2552 = vshrl.u32 %v2551, 7
    %v2553 = vsub.s32 1, %v2552
    %v2554 = vrot.slane %v2545, %v2553
    %v2558 = vsel %vm80, %v2536, 0
    %2560 = vmatprep.subr.mxu0 0.0
    %2561 = vmatpush1.msra.mxu0 0.0
    %2562 = vmatprep.subr.mxu0 0.0
    %2563 = vmatpush1.msra.mxu0 0.0
    %2564 = vmatprep.subr.mxu0 0.0
    %2565 = vmatpush1.msra.mxu0 0.0
    %2566 = vmatprep.subr.mxu0 0.0
    %2567 = vmatpush1.msra.mxu0 0.0
    %2568 = vmatprep.subr.mxu0 0.0
    %2569 = vmatpush1.msra.mxu0 0.0
    %2570 = vmatprep.subr.mxu0 0.0
    %2571 = vmatpush1.msra.mxu0 0.0
    %2572 = vmatprep.subr.mxu0 0.0
    %2573 = vmatpush1.msra.mxu0 0.0
    %2574 = vmatprep.subr.mxu0 0.0
    %2575 = vmatpush1.msra.mxu0 0.0
    %2576 = vmatprep.subr.mxu0 0.0
    %2577 = vmatpush1.msra.mxu0 0.0
    %2578 = vmatprep.subr.mxu0 0.0
    %2579 = vmatpush1.msra.mxu0 0.0
    %2580 = vmatprep.subr.mxu0 0.0
    %2581 = vmatpush1.msra.mxu0 0.0
    %2582 = vmatprep.subr.mxu0 0.0
    %2583 = vmatpush1.msra.mxu0 0.0
    %2584 = vmatprep.subr.mxu0 %v2544
    %2585 = vmatpush1.msra.mxu0 %v2543
    %2586 = vmatprep.subr.mxu0 %v2542
    %2587 = vmatpush1.msra.mxu0 %v2541
    %2588 = vmatprep.subr.mxu0 %v2540
    %2589 = vmatpush1.msra.mxu0 %v2539
    %2590 = vmatprep.subr.mxu0 %v2538
    %2591 = vmatpush1.msra.mxu0 %v2537
    %2592 = vmatprep.subr.mxu0 0.0
    %2593 = vmatpush2.msra.mxu0 0.0
    %2594 = vmatprep.subr.mxu0 0.0
    %2595 = vmatpush2.msra.mxu0 0.0
    %2596 = vmatprep.subr.mxu0 0.0
    %2597 = vmatpush2.msra.mxu0 0.0
    %2598 = vmatprep.subr.mxu0 0.0
    %2599 = vmatpush2.msra.mxu0 0.0
    %2600 = vmatprep.subr.mxu0 0.0
    %2601 = vmatpush2.msra.mxu0 0.0
    %2602 = vmatprep.subr.mxu0 0.0
    %2603 = vmatpush2.msra.mxu0 0.0
    %2604 = vmatprep.subr.mxu0 0.0
    %2605 = vmatpush2.msra.mxu0 0.0
    %2606 = vmatprep.subr.mxu0 0.0
    %2607 = vmatpush2.msra.mxu0 0.0
    %2608 = vmatprep.subr.mxu0 0.0
    %2609 = vmatpush2.msra.mxu0 0.0
    %2610 = vmatprep.subr.mxu0 0.0
    %2611 = vmatpush2.msra.mxu0 0.0
    %2612 = vmatprep.subr.mxu0 0.0
    %2613 = vmatpush2.msra.mxu0 0.0
    %2614 = vmatprep.subr.mxu0 0.0
    %2615 = vmatpush2.msra.mxu0 0.0
    %2616 = vmatprep.subr.mxu0 0.0
    %2617 = vmatpush2.msra.mxu0 0.0
    %2618 = vmatprep.subr.mxu0 0.0
    %2619 = vmatpush2.msra.mxu0 0.0
    %2620 = vmatprep.subr.mxu0 0.0
    %2621 = vmatpush2.msra.mxu0 0.0
    %2622 = vmatprep.subr.mxu0 0.0
    %2623 = vmatpush2.msra.mxu0 0.0
    %2624 = vmatprep.mubr.f32.mxu0 0.0
    %2625 = vmatmul.mubr.f32.gmra.mxu0 %v2558
    %v2626 = vpop.f32.mrf.mxu0
    %v2627 = vadd.f32 %v2550, %v2626
    %v2628 = vpop.f32.mrf.mxu0
    %v2629 = vadd.f32 %v2554, %v2628
    %2630 = vdwg.mxu0
    %v2631 = vmax.f32 %v2627, 0.0
    %v2632 = vmax.f32 %v2629, 0.0
    %v2633 = vld [vmem:[%s20] sm:$0xff]
    %v2634 = vld [vmem:[%s20 + $0x8] sm:$0xff]
    %v2635 = vld [vmem:[%s20 + $0x10] sm:$0xff]
    %v2636 = vld [vmem:[%s20 + $0x18] sm:$0xff]
    %v2637 = vld [vmem:[%s20 + $0x20] sm:$0xff]
    %v2638 = vld [vmem:[%s20 + $0x28] sm:$0xff]
    %v2639 = vld [vmem:[%s20 + $0x30] sm:$0xff]
    %v2640 = vld [vmem:[%s20 + $0x38] sm:$0xff]
    %v2641 = vld [vmem:[%s20 + $0x40] sm:$0xff]
    %v2642 = vld [vmem:[%s20 + $0x48] sm:$0xff]
    %v2643 = vld [vmem:[%s20 + $0x50] sm:$0xff]
    %v2644 = vld [vmem:[%s20 + $0x58] sm:$0xff]
    %v2645 = vld [vmem:[%s20 + $0x60] sm:$0xff]
    %v2646 = vld [vmem:[%s20 + $0x68] sm:$0xff]
    %v2647 = vld [vmem:[%s20 + $0x70] sm:$0xff]
    %v2648 = vld [vmem:[%s20 + $0x78] sm:$0xff]
    %v2649 = vld [vmem:[%s20 + $0x80] sm:$0xff]
    %v2650 = vld [vmem:[%s20 + $0x88] sm:$0xff]
    %v2651 = vld [vmem:[%s20 + $0x90] sm:$0xff]
    %v2652 = vld [vmem:[%s20 + $0x98] sm:$0xff]
    %v2653 = vld [vmem:[%s20 + $0xa0] sm:$0xff]
    %v2654 = vld [vmem:[%s20 + $0xa8] sm:$0xff]
    %v2655 = vld [vmem:[%s20 + $0xb0] sm:$0xff]
    %v2656 = vld [vmem:[%s20 + $0xb8] sm:$0xff]
    %v2657 = vld [vmem:[%s20 + $0xc0] sm:$0xff]
    %v2658 = vld [vmem:[%s20 + $0xc8] sm:$0xff]
    %v2659 = vld [vmem:[%s20 + $0xd0] sm:$0xff]
    %v2660 = vld [vmem:[%s20 + $0xd8] sm:$0xff]
    %v2661 = vld [vmem:[%s20 + $0xe0] sm:$0xff]
    %v2662 = vld [vmem:[%s20 + $0xe8] sm:$0xff]
    %v2663 = vld [vmem:[%s20 + $0xf0] sm:$0xff]
    %v2664 = vld [vmem:[%s20 + $0xf8] sm:$0xff]
    %v2665 = vld [vmem:[%s21] sm:$0x1]
    %v2667 = vlaneseq
    %v2668 = vshrl.u32 %v2667, 7
    %v2669 = vsub.s32 0, %v2668
    %v2670 = vrot.slane %v2665, %v2669
    %2672 = vmatprep.subr.mxu0 0.0
    %2673 = vmatpush1.msra.mxu0 %v2648
    %2674 = vmatprep.subr.mxu0 0.0
    %2675 = vmatpush1.msra.mxu0 %v2647
    %2676 = vmatprep.subr.mxu0 0.0
    %2677 = vmatpush1.msra.mxu0 %v2646
    %2678 = vmatprep.subr.mxu0 0.0
    %2679 = vmatpush1.msra.mxu0 %v2645
    %2680 = vmatprep.subr.mxu0 0.0
    %2681 = vmatpush1.msra.mxu0 %v2644
    %2682 = vmatprep.subr.mxu0 0.0
    %2683 = vmatpush1.msra.mxu0 %v2643
    %2684 = vmatprep.subr.mxu0 0.0
    %2685 = vmatpush1.msra.mxu0 %v2642
    %2686 = vmatprep.subr.mxu0 0.0
    %2687 = vmatpush1.msra.mxu0 %v2641
    %2688 = vmatprep.subr.mxu0 0.0
    %2689 = vmatpush1.msra.mxu0 %v2640
    %2690 = vmatprep.subr.mxu0 0.0
    %2691 = vmatpush1.msra.mxu0 %v2639
    %2692 = vmatprep.subr.mxu0 0.0
    %2693 = vmatpush1.msra.mxu0 %v2638
    %2694 = vmatprep.subr.mxu0 0.0
    %2695 = vmatpush1.msra.mxu0 %v2637
    %2696 = vmatprep.subr.mxu0 0.0
    %2697 = vmatpush1.msra.mxu0 %v2636
    %2698 = vmatprep.subr.mxu0 0.0
    %2699 = vmatpush1.msra.mxu0 %v2635
    %2700 = vmatprep.subr.mxu0 0.0
    %2701 = vmatpush1.msra.mxu0 %v2634
    %2702 = vmatprep.subr.mxu0 0.0
    %2703 = vmatpush1.msra.mxu0 %v2633
    %2704 = vmatprep.subr.mxu0 0.0
    %2705 = vmatpush2.msra.mxu0 %v2664
    %2706 = vmatprep.subr.mxu0 0.0
    %2707 = vmatpush2.msra.mxu0 %v2663
    %2708 = vmatprep.subr.mxu0 0.0
    %2709 = vmatpush2.msra.mxu0 %v2662
    %2710 = vmatprep.subr.mxu0 0.0
    %2711 = vmatpush2.msra.mxu0 %v2661
    %2712 = vmatprep.subr.mxu0 0.0
    %2713 = vmatpush2.msra.mxu0 %v2660
    %2714 = vmatprep.subr.mxu0 0.0
    %2715 = vmatpush2.msra.mxu0 %v2659
    %2716 = vmatprep.subr.mxu0 0.0
    %2717 = vmatpush2.msra.mxu0 %v2658
    %2718 = vmatprep.subr.mxu0 0.0
    %2719 = vmatpush2.msra.mxu0 %v2657
    %2720 = vmatprep.subr.mxu0 0.0
    %2721 = vmatpush2.msra.mxu0 %v2656
    %2722 = vmatprep.subr.mxu0 0.0
    %2723 = vmatpush2.msra.mxu0 %v2655
    %2724 = vmatprep.subr.mxu0 0.0
    %2725 = vmatpush2.msra.mxu0 %v2654
    %2726 = vmatprep.subr.mxu0 0.0
    %2727 = vmatpush2.msra.mxu0 %v2653
    %2728 = vmatprep.subr.mxu0 0.0
    %2729 = vmatpush2.msra.mxu0 %v2652
    %2730 = vmatprep.subr.mxu0 0.0
    %2731 = vmatpush2.msra.mxu0 %v2651
    %2732 = vmatprep.subr.mxu0 0.0
    %2733 = vmatpush2.msra.mxu0 %v2650
    %2734 = vmatprep.subr.mxu0 0.0
    %2735 = vmatpush2.msra.mxu0 %v2649
    %2736 = vmatprep.mubr.f32.mxu0 %v2632
    %2737 = vmatmul.mubr.f32.gmra.mxu0 %v2631
    %v2738 = vpop.f32.mrf.mxu0
    %v2739 = vadd.f32 %v2670, %v2738
    %v2740 = vpop.f32.mrf.mxu0
    %2741 = vdwg.mxu0
    %vm2742 = vcmask 25600
    %v2743 = vsel %vm2742, %v2739, -inf
    %2744 = vmax.xlane.f32.xlu0 %v2743
    %v2745 = vpop.xlane.xlu0 %2744
    %v2746 = vsub.f32 %v2739, %v2745
    %v2747 = vmul.f32 %v2746, 1.442695
    %v2748 = vpow.pop %v2747
    %v2749 = vsel %vm2742, %v2748, 0.0
    %2750 = vadd.xlane.f32.xlu0 %v2749
    %v2751 = vpop.xlane.xlu0 %2750
    %v2752 = vrcp.pop %v2751
    %v2753 = vmul.f32 %v2748, %v2752
    %v2754 = vlog2.pop %v2751
    %v2755 = vmul.f32 %v2754, 0.6931472
    %v2756 = vsub.f32 %v2746, %v2755
    %v2757 = vld [vmem:[%s22] sm:$0x3]
    %v2758 = vmul.f32 %v2757, %v2756
    %v2759 = vsel %vm2742, %v2758, 0.0
    %2760 = vadd.xlane.f32.xlu0 %v2759
    %v2761 = vpop.xlane.xlu0 %2760
    %v2762 = vsub.f32 0.0, %v2761
    %vm2763 = vcmask 1041408
    %v2764 = vsel %vm2763, %v2762, 0.0
    %v2765 = vrot.slane %v2764, 4
    %v2766 = vadd.f32 %v2764, %v2765
    %v2767 = vrot.slane %v2766, 2
    %v2768 = vadd.f32 %v2766, %v2767
    %v2769 = vrot.slane %v2768, 1
    %v2770 = vadd.f32 %v2768, %v2769
    %v2771 = vmul.f32 %v2770, 0.5
    %2773 = vrot.lane.b32.xlu0 %v2753, 4
    %v2774 = vpop.permute.xlu0 %2773
    %vm2776 = vcmask 31744
    %v2777 = vsel %vm2776, %v2739, %v2774
    %v2778 = vsel %vm321, %v2777, %v2771
    %vm2779 = vcmask 72704
    %v2780 = vsel %vm2779, %v2778, 0.0
    %2781 = vst [vmem:[#allocation2] sm:$0x3] %v2780
    // Predicated region
    $region94: #{tpu_custom_call.1} parent=1 // pred_check
      _
    $region95: #{tpu_custom_call.1} parent=1 // pred_check_branch
      %2783 = sbr.rel (0) target = $region97
    $region96: #{tpu_custom_call.1} parent=1 // pred_region
      %s2785 = ssub.s32 32, 32
      %2786 = vsyncadd [#allocation3], %s2785
      %s2788 = sshll.u32 [#allocation2], 4
      %s2789 = int_to_ptr.vmem [resolvable:$true] %s2788
      %2791 = dma.vmem_to_hbm [thread:$0]  %s2789, 32, %s23, [#allocation3]
    $region97: #{tpu_custom_call.1} parent=1 // pred_fallthru
      _
    // Predicated region
    $region98: #{tpu_custom_call.1} parent=1 // pred_check
      _
    $region99: #{tpu_custom_call.1} parent=1 // pred_check_branch
      %2793 = sbr.rel (0) target = $region101
    $region100: #{tpu_custom_call.1} parent=1 // pred_region
      %2794 = dma.done [#allocation3], 32
    $region101: #{tpu_custom_call.1} parent=1 // pred_fallthru
      _
    %2795 = vsyncpa [#allocation3], 1

</llo_original>
